<compile_context>
chip_gen: v5e
topology: v5e:2x2
jax: 0.10.0
libtpu: 0.0.40
codegen_flags: <defaults>
</compile_context>

<pallas_src>
import numpy as np

import jax
import jax.numpy as jnp
from jax.experimental import pallas as pl
from jax.experimental.pallas import tpu as pltpu


# ----------------------------------------------------------------------------
# Constant (weight-preprocessing) construction -- plain XLA, run once.
# ----------------------------------------------------------------------------
def _sel_matrices(lin, lout):
    """sel[t, o, r] = 1.0 iff r == 2*o + t - 1 (stride-2, k=3, pad=1 tap)."""
    sel = np.zeros((3, lout, lin), np.float32)
    for t in range(3):
        for o in range(lout):
            r = 2 * o + t - 1
            if 0 <= r < lin:
                sel[t, o, r] = 1.0
    return sel


_R0_NP = _sel_matrices(28, 14)   # (3, 14, 28)
_R1_NP = _sel_matrices(14, 7)    # (3, 7, 14)

# packed-bias lane offsets (all multiples of 128), total width 1792
_B0_OFF, _B1_OFF, _B2_OFF, _B3_OFF, _B4_OFF, _B5_OFF = 0, 512, 768, 896, 1152, 1664
_BIAS_W = 1792


def build_constants(params):
    """Fold the column taps / channel layout into per-layer GEMM weights (bf16)."""
    f32, bf16 = jnp.float32, jnp.bfloat16
    w0, b0 = params["enc0"]   # (16, 1, 3, 3), (16,)
    w1, b1 = params["enc1"]   # (32, 16, 3, 3), (32,)
    w2, b2 = params["enc2"]   # (64, 32, 7, 7), (64,)
    w3, b3 = params["dec0"]   # (64, 32, 7, 7)  (in, out, kh, kw), (32,)
    w4, b4 = params["dec1"]   # (32, 16, 3, 3), (16,)
    w5, b5 = params["dec2"]   # (16, 1, 3, 3), (1,)

    r0 = jnp.asarray(_R0_NP)
    r1 = jnp.asarray(_R1_NP)

    # column-tap folded weights (same layouts as the previously verified kernel)
    k0 = jnp.einsum("jox,cij->ixoc", r0, w0[:, 0]).reshape(3, 28, 224)
    m1 = jnp.einsum("jqx,ocij->ixcqo", r1, w1).reshape(3, 224, 224)
    w2r = jnp.transpose(w2, (2, 3, 1, 0)).reshape(7, 224, 64)    # rows qx*32+ci
    w3r = jnp.transpose(w3, (2, 0, 3, 1)).reshape(7, 64, 224)    # cols qx*32+co
    nd1 = jnp.einsum("jqx,acij->iqaxc", r1, w4).reshape(3, 224, 224)
    nd2 = jnp.einsum("jxy,cij->ixcy", r0, w5[:, 0]).reshape(3, 224, 28)

    # enc0: X4 (7B,112) [cols j*28+w = img row 4m+j] -> a0 pair (7B,448)
    z28 = jnp.zeros((28, 224), f32)
    e0_a = jnp.concatenate([
        jnp.concatenate([k0[1], z28], 1),     # row 4m    -> even half tap1
        jnp.concatenate([k0[2], k0[0]], 1),   # row 4m+1  -> even tap2 / odd tap0
        jnp.concatenate([z28, k0[1]], 1),     # row 4m+2  -> odd tap1
        jnp.concatenate([z28, k0[2]], 1)],    # row 4m+3  -> odd tap2
        0)                                    # (112, 448)
    e0_b = jnp.concatenate([k0[0], z28], 1)   # row 4m-1  -> even tap0   (28, 448)

    # enc1: a0 pair (7B,448) -> a1 (7B,224)
    e1_a = jnp.concatenate([m1[1], m1[2]], 0)   # (448, 224)  even->tap1, odd->tap2
    e1_b = m1[0]                                # (224, 224)  shifted odd -> tap0

    # dec1: d0 (7B,224) -> d1 pair (7B,448)
    z224 = jnp.zeros((224, 224), f32)
    d1_a = jnp.concatenate([nd1[1], nd1[2]], 1)   # (224, 448) even|odd
    d1_b = jnp.concatenate([z224, nd1[0]], 1)     # (224, 448) shifted -> odd only

    # dec2: d1 pair (7B,448) -> out quad (7B,112)
    zc = jnp.zeros((224, 28), f32)
    d2_a = jnp.concatenate([
        jnp.concatenate([nd2[1], nd2[2], zc, zc], 1),   # d1 row 2m
        jnp.concatenate([zc, nd2[0], nd2[1], nd2[2]], 1)],  # d1 row 2m+1
        0)                                               # (448, 112)
    d2_b = jnp.concatenate([zc, zc, zc, nd2[0]], 1)      # shifted d1 row 2m+2 (224,112)

    # packed biases (f32), 128-aligned lane offsets
    bias = jnp.zeros((1, _BIAS_W), f32)
    bias = bias.at[0, _B0_OFF:_B0_OFF + 448].set(jnp.tile(b0, 28))
    bias = bias.at[0, _B1_OFF:_B1_OFF + 224].set(jnp.tile(b1, 7))
    bias = bias.at[0, _B2_OFF:_B2_OFF + 64].set(b2)
    bias = bias.at[0, _B3_OFF:_B3_OFF + 224].set(jnp.tile(b3, 7))
    bias = bias.at[0, _B4_OFF:_B4_OFF + 448].set(jnp.tile(b4, 28))
    bias = bias.at[0, _B5_OFF:_B5_OFF + 112].set(jnp.tile(b5, 112))

    return (e0_a.astype(bf16), e0_b.astype(bf16),
            e1_a.astype(bf16), e1_b.astype(bf16),
            w2r.astype(bf16), w3r.astype(bf16),
            d1_a.astype(bf16), d1_b.astype(bf16),
            d2_a.astype(bf16), d2_b.astype(bf16),
            bias)


# ----------------------------------------------------------------------------
# Fused Pallas kernel: whole forward pass for one block of B images.
# Activation row layout: row = m * B + image  (row-group-major).
# ----------------------------------------------------------------------------
def _ae_kernel(x_ref,
               e0a_ref, e0b_ref, e1a_ref, e1b_ref, w2_ref, w3_ref,
               d1a_ref, d1b_ref, d2a_ref, d2b_ref, bias_ref,
               o_ref):
    bf16 = jnp.bfloat16

    def dot(a, b):
        return jnp.dot(a, b, preferred_element_type=jnp.float32)

    rows = x_ref.shape[0]          # 7 * B
    bsz = rows // 7                # images per block

    def shift_down(a):             # row-group m reads group m-1; first group -> 0
        return jnp.concatenate(
            [jnp.zeros((bsz,) + a.shape[1:], a.dtype), a[:-bsz]], axis=0)

    def shift_up(a):               # row-group m reads group m+1; last group -> 0
        return jnp.concatenate(
            [a[bsz:], jnp.zeros((bsz,) + a.shape[1:], a.dtype)], axis=0)

    x4 = x_ref[...]                                          # (7B, 112) bf16

    # -------- encoder --------
    # Conv2d(1,16,3,s=2,p=1) + ReLU  -> a0 pair rows (7B, 448)
    acc = dot(x4, e0a_ref[...]) + dot(shift_down(x4[:, 84:112]), e0b_ref[...])
    a0 = jnp.maximum(acc + bias_ref[:, _B0_OFF:_B0_OFF + 448], 0.0).astype(bf16)

    # Conv2d(16,32,3,s=2,p=1) + ReLU -> a1 (7B, 224)
    acc = dot(a0, e1a_ref[...]) + dot(shift_down(a0[:, 224:448]), e1b_ref[...])
    a1 = jnp.maximum(acc + bias_ref[:, _B1_OFF:_B1_OFF + 224], 0.0).astype(bf16)

    # Conv2d(32,64,7)  (dense over the 7x7 map, no activation) -> z (B, 64)
    zacc = dot(a1[0:bsz], w2_ref[0])
    for q in range(1, 7):
        zacc = zacc + dot(a1[q * bsz:(q + 1) * bsz], w2_ref[q])
    z = (zacc + bias_ref[:, _B2_OFF:_B2_OFF + 64]).astype(bf16)

    # -------- decoder --------
    # ConvTranspose2d(64,32,7) + ReLU -> d0 (7B, 224)
    d0_chunks = [dot(z, w3_ref[q]) for q in range(7)]
    d0 = jnp.maximum(jnp.concatenate(d0_chunks, axis=0)
                     + bias_ref[:, _B3_OFF:_B3_OFF + 224], 0.0).astype(bf16)

    # ConvTranspose2d(32,16,3,s=2,p=1,op=1) + ReLU -> d1 pair rows (7B, 448)
    acc = dot(d0, d1a_ref[...]) + dot(shift_up(d0), d1b_ref[...])
    d1 = jnp.maximum(acc + bias_ref[:, _B4_OFF:_B4_OFF + 448], 0.0).astype(bf16)

    # ConvTranspose2d(16,1,3,s=2,p=1,op=1) + Sigmoid -> out quad rows (7B, 112)
    acc = dot(d1, d2a_ref[...]) + dot(shift_up(d1[:, 0:224]), d2b_ref[...])
    o_ref[...] = jax.nn.sigmoid(acc + bias_ref[:, _B5_OFF:_B5_OFF + 112])


# ----------------------------------------------------------------------------
# Wrapper: pack images into row-group-major slabs, call the fused kernel.
# ----------------------------------------------------------------------------
def _pick_block(n, max_b):
    if n >= max_b:
        return max_b
    return max(16, ((n + 15) // 16) * 16)      # multiple of 16 (bf16 sublane tile)


def autoencoder_apply(consts, x, *, block_b=128):
    """x: (N, 1, 28, 28) float32 -> (N, 1, 28, 28) float32."""
    n = x.shape[0]
    x = x.reshape(n, 28, 28).astype(jnp.float32)

    bb = _pick_block(n, block_b)
    n_pad = ((n + bb - 1) // bb) * bb
    nb = n_pad // bb
    if n_pad != n:
        x = jnp.concatenate([x, jnp.zeros((n_pad - n, 28, 28), x.dtype)], axis=0)

    # (nb, 7*bb, 112): row m*bb + img -> image rows [4m, 4m+4), cols j*28 + w
    x4 = (x.astype(jnp.bfloat16)
          .reshape(nb, bb, 7, 4, 28)
          .transpose(0, 2, 1, 3, 4)
          .reshape(nb, 7 * bb, 112))

    def _const_spec(c):
        return pl.BlockSpec(c.shape, lambda i, nd=c.ndim: (0,) * nd)

    in_specs = [pl.BlockSpec((None, 7 * bb, 112), lambda i: (i, 0, 0))]
    in_specs += [_const_spec(c) for c in consts]

    out = pl.pallas_call(
        _ae_kernel,
        out_shape=jax.ShapeDtypeStruct((nb, 7 * bb, 112), jnp.float32),
        grid=(nb,),
        in_specs=in_specs,
        out_specs=pl.BlockSpec((None, 7 * bb, 112), lambda i: (i, 0, 0)),
        compiler_params=pltpu.CompilerParams(
            dimension_semantics=("parallel",)),
    )(x4, *consts)

    y = (out.reshape(nb, 7, bb, 4, 28)
         .transpose(0, 2, 1, 3, 4)
         .reshape(n_pad, 28, 28)[:n]
         .reshape(n, 1, 28, 28))
    return y


# ----------------------------------------------------------------------------
# Parameter init (deterministic, PyTorch default-style uniform bounds)
# ----------------------------------------------------------------------------
def _init_conv(key, cout, cin, k):
    bound = 1.0 / np.sqrt(cin * k * k)
    kw_, kb_ = jax.random.split(key)
    w = jax.random.uniform(kw_, (cout, cin, k, k), jnp.float32, -bound, bound)
    b = jax.random.uniform(kb_, (cout,), jnp.float32, -bound, bound)
    return w, b


def _init_convT(key, cin, cout, k):
    bound = 1.0 / np.sqrt(cout * k * k)
    kw_, kb_ = jax.random.split(key)
    w = jax.random.uniform(kw_, (cin, cout, k, k), jnp.float32, -bound, bound)
    b = jax.random.uniform(kb_, (cout,), jnp.float32, -bound, bound)
    return w, b


def init_autoencoder_params(seed=0):
    keys = jax.random.split(jax.random.PRNGKey(seed), 6)
    return {
        "enc0": _init_conv(keys[0], 16, 1, 3),    # Conv2d(1, 16, 3, s=2, p=1)
        "enc1": _init_conv(keys[1], 32, 16, 3),   # Conv2d(16, 32, 3, s=2, p=1)
        "enc2": _init_conv(keys[2], 64, 32, 7),   # Conv2d(32, 64, 7)
        "dec0": _init_convT(keys[3], 64, 32, 7),  # ConvT(64, 32, 7)
        "dec1": _init_convT(keys[4], 32, 16, 3),  # ConvT(32, 16, 3, s=2, p=1, op=1)
        "dec2": _init_convT(keys[5], 16, 1, 3),   # ConvT(16, 1, 3, s=2, p=1, op=1)
    }


# ----------------------------------------------------------------------------
# Plain-XLA reference (numerical sanity check only)
# ----------------------------------------------------------------------------
def _ref_conv(x, w, b, stride, padding):
    out = jax.lax.conv_general_dilated(
        x, w, window_strides=(stride, stride),
        padding=[(padding, padding), (padding, padding)],
        dimension_numbers=("NCHW", "OIHW", "NCHW"),
        precision=jax.lax.Precision.HIGHEST)
    return out + b[None, :, None, None]


def _ref_conv_transpose(x, w, b, stride, padding, output_padding):
    k = w.shape[2]
    w_conv = jnp.flip(w, axis=(2, 3)).transpose(1, 0, 2, 3)
    lo = k - 1 - padding
    hi = k - 1 - padding + output_padding
    out = jax.lax.conv_general_dilated(
        x, w_conv, window_strides=(1, 1),
        padding=[(lo, hi), (lo, hi)],
        lhs_dilation=(stride, stride),
        dimension_numbers=("NCHW", "OIHW", "NCHW"),
        precision=jax.lax.Precision.HIGHEST)
    return out + b[None, :, None, None]


def _reference_forward(params, x):
    h = jax.nn.relu(_ref_conv(x, *params["enc0"], 2, 1))
    h = jax.nn.relu(_ref_conv(h, *params["enc1"], 2, 1))
    h = _ref_conv(h, *params["enc2"], 1, 0)
    h = jax.nn.relu(_ref_conv_transpose(h, *params["dec0"], 1, 0, 0))
    h = jax.nn.relu(_ref_conv_transpose(h, *params["dec1"], 2, 1, 1))
    return jax.nn.sigmoid(_ref_conv_transpose(h, *params["dec2"], 2, 1, 1))


if __name__ == "__main__":
    params = init_autoencoder_params(seed=0)
    consts = build_constants(params)           # built once, outside the jit

    # Module implies 28x28 single-channel input (MNIST): 28 -> 14 -> 7 -> 1 -> 28.
    x = jax.random.normal(jax.random.PRNGKey(0), (4, 1, 28, 28), jnp.float32)

    fwd = jax.jit(autoencoder_apply)
    y = fwd(consts, x)
    jax.block_until_ready(y)

    assert y.shape == (4, 1, 28, 28), y.shape
    assert y.dtype == jnp.float32
    assert bool(jnp.all(jnp.isfinite(y)))
    assert bool(jnp.all((y >= 0.0) & (y <= 1.0)))   # sigmoid output range

    # Sanity check against a plain-XLA f32 implementation (kernel uses bf16 GEMMs).
    y_ref = jax.jit(_reference_forward)(params, x)
    max_err = float(jnp.max(jnp.abs(y - y_ref)))
    assert max_err < 3e-2, f"max abs error vs reference: {max_err}"

    print("KERNEL_OK")
</pallas_src>

<mosaic_0001>
module attributes {stable_mosaic.version = 11 : i64} {
  func.func @_ae_kernel(%arg0: i32, %arg1: memref<1x112x112xbf16, #tpu.memory_space<vmem>>, %arg2: memref<112x448xbf16, #tpu.memory_space<vmem>>, %arg3: memref<28x448xbf16, #tpu.memory_space<vmem>>, %arg4: memref<448x224xbf16, #tpu.memory_space<vmem>>, %arg5: memref<224x224xbf16, #tpu.memory_space<vmem>>, %arg6: memref<7x224x64xbf16, #tpu.memory_space<vmem>>, %arg7: memref<7x64x224xbf16, #tpu.memory_space<vmem>>, %arg8: memref<224x448xbf16, #tpu.memory_space<vmem>>, %arg9: memref<224x448xbf16, #tpu.memory_space<vmem>>, %arg10: memref<448x112xbf16, #tpu.memory_space<vmem>>, %arg11: memref<224x112xbf16, #tpu.memory_space<vmem>>, %arg12: memref<1x1792xf32, #tpu.memory_space<vmem>>, %arg13: memref<1x112x112xf32, #tpu.memory_space<vmem>>) attributes {dimension_semantics = [#tpu.dimension_semantics<parallel>], iteration_bounds = array<i64: 1>, scalar_prefetch = 0 : i64, scratch_operands = 0 : i64, tpu.core_type = #tpu.core_type<tc>, window_params = [{transform_indices = @transform_0, window_bounds = array<i64: 1, 112, 112>}, {pipeline_mode = #tpu.pipeline_mode<synchronous>, transform_indices = @transform_1, window_bounds = array<i64: 112, 448>}, {pipeline_mode = #tpu.pipeline_mode<synchronous>, transform_indices = @transform_2, window_bounds = array<i64: 28, 448>}, {pipeline_mode = #tpu.pipeline_mode<synchronous>, transform_indices = @transform_3, window_bounds = array<i64: 448, 224>}, {pipeline_mode = #tpu.pipeline_mode<synchronous>, transform_indices = @transform_4, window_bounds = array<i64: 224, 224>}, {pipeline_mode = #tpu.pipeline_mode<synchronous>, transform_indices = @transform_5, window_bounds = array<i64: 7, 224, 64>}, {pipeline_mode = #tpu.pipeline_mode<synchronous>, transform_indices = @transform_6, window_bounds = array<i64: 7, 64, 224>}, {pipeline_mode = #tpu.pipeline_mode<synchronous>, transform_indices = @transform_7, window_bounds = array<i64: 224, 448>}, {pipeline_mode = #tpu.pipeline_mode<synchronous>, transform_indices = @transform_8, window_bounds = array<i64: 224, 448>}, {pipeline_mode = #tpu.pipeline_mode<synchronous>, transform_indices = @transform_9, window_bounds = array<i64: 448, 112>}, {pipeline_mode = #tpu.pipeline_mode<synchronous>, transform_indices = @transform_10, window_bounds = array<i64: 224, 112>}, {pipeline_mode = #tpu.pipeline_mode<synchronous>, transform_indices = @transform_11, window_bounds = array<i64: 1, 1792>}, {transform_indices = @transform_12, window_bounds = array<i64: 1, 112, 112>}]} {
    %c0 = arith.constant 0 : index
    %c0_0 = arith.constant 0 : index
    %c0_1 = arith.constant 0 : index
    %0 = vector.load %arg1[%c0, %c0_0, %c0_1] : memref<1x112x112xbf16, #tpu.memory_space<vmem>>, vector<1x112x112xbf16>
    %1 = vector.shape_cast %0 : vector<1x112x112xbf16> to vector<112x112xbf16>
    %c0_2 = arith.constant 0 : index
    %c0_3 = arith.constant 0 : index
    %2 = vector.load %arg2[%c0_2, %c0_3] : memref<112x448xbf16, #tpu.memory_space<vmem>>, vector<112x448xbf16>
    %cst = arith.constant dense<0.000000e+00> : vector<112x448xf32>
    %3 = tpu.matmul %1, %2, %cst {dimension_numbers = #tpu.dot_dimension_numbers<[1], [0], [0], [1], [0, 0, 1, 1], [], []>} : vector<112x112xbf16>, vector<112x448xbf16>, vector<112x448xf32> -> vector<112x448xf32>
    %4 = vector.extract_strided_slice %1 {offsets = [0, 84], sizes = [112, 28], strides = [1, 1]} : vector<112x112xbf16> to vector<112x28xbf16>
    %cst_4 = arith.constant 0.000000e+00 : bf16
    %5 = vector.broadcast %cst_4 : bf16 to vector<16x28xbf16>
    %6 = vector.extract_strided_slice %4 {offsets = [0, 0], sizes = [96, 28], strides = [1, 1]} : vector<112x28xbf16> to vector<96x28xbf16>
    %7 = tpu.concatenate %5, %6 in 0 : vector<16x28xbf16>, vector<96x28xbf16> -> vector<112x28xbf16>
    %c0_5 = arith.constant 0 : index
    %c0_6 = arith.constant 0 : index
    %8 = vector.load %arg3[%c0_5, %c0_6] : memref<28x448xbf16, #tpu.memory_space<vmem>>, vector<28x448xbf16>
    %cst_7 = arith.constant dense<0.000000e+00> : vector<112x448xf32>
    %9 = tpu.matmul %7, %8, %cst_7 {dimension_numbers = #tpu.dot_dimension_numbers<[1], [0], [0], [1], [0, 0, 1, 1], [], []>} : vector<112x28xbf16>, vector<28x448xbf16>, vector<112x448xf32> -> vector<112x448xf32>
    %10 = arith.addf %3, %9 : vector<112x448xf32>
    %c0_8 = arith.constant 0 : index
    %c0_9 = arith.constant 0 : index
    %11 = vector.load %arg12[%c0_8, %c0_9] : memref<1x1792xf32, #tpu.memory_space<vmem>>, vector<1x448xf32>
    %12 = vector.broadcast %11 : vector<1x448xf32> to vector<112x448xf32>
    %13 = arith.addf %10, %12 : vector<112x448xf32>
    %cst_10 = arith.constant 0.000000e+00 : f32
    %14 = vector.broadcast %cst_10 : f32 to vector<112x448xf32>
    %15 = arith.maximumf %13, %14 : vector<112x448xf32>
    %16 = arith.truncf %15 : vector<112x448xf32> to vector<112x448xbf16>
    %c0_11 = arith.constant 0 : index
    %c0_12 = arith.constant 0 : index
    %17 = vector.load %arg4[%c0_11, %c0_12] : memref<448x224xbf16, #tpu.memory_space<vmem>>, vector<448x224xbf16>
    %cst_13 = arith.constant dense<0.000000e+00> : vector<112x224xf32>
    %18 = tpu.matmul %16, %17, %cst_13 {dimension_numbers = #tpu.dot_dimension_numbers<[1], [0], [0], [1], [0, 0, 1, 1], [], []>} : vector<112x448xbf16>, vector<448x224xbf16>, vector<112x224xf32> -> vector<112x224xf32>
    %19 = vector.extract_strided_slice %16 {offsets = [0, 224], sizes = [112, 224], strides = [1, 1]} : vector<112x448xbf16> to vector<112x224xbf16>
    %cst_14 = arith.constant 0.000000e+00 : bf16
    %20 = vector.broadcast %cst_14 : bf16 to vector<16x224xbf16>
    %21 = vector.extract_strided_slice %19 {offsets = [0, 0], sizes = [96, 224], strides = [1, 1]} : vector<112x224xbf16> to vector<96x224xbf16>
    %22 = tpu.concatenate %20, %21 in 0 : vector<16x224xbf16>, vector<96x224xbf16> -> vector<112x224xbf16>
    %c0_15 = arith.constant 0 : index
    %c0_16 = arith.constant 0 : index
    %23 = vector.load %arg5[%c0_15, %c0_16] : memref<224x224xbf16, #tpu.memory_space<vmem>>, vector<224x224xbf16>
    %cst_17 = arith.constant dense<0.000000e+00> : vector<112x224xf32>
    %24 = tpu.matmul %22, %23, %cst_17 {dimension_numbers = #tpu.dot_dimension_numbers<[1], [0], [0], [1], [0, 0, 1, 1], [], []>} : vector<112x224xbf16>, vector<224x224xbf16>, vector<112x224xf32> -> vector<112x224xf32>
    %25 = arith.addf %18, %24 : vector<112x224xf32>
    %c0_18 = arith.constant 0 : index
    %c512 = arith.constant 512 : index
    %26 = vector.load %arg12[%c0_18, %c512] : memref<1x1792xf32, #tpu.memory_space<vmem>>, vector<1x224xf32>
    %27 = vector.broadcast %26 : vector<1x224xf32> to vector<112x224xf32>
    %28 = arith.addf %25, %27 : vector<112x224xf32>
    %cst_19 = arith.constant 0.000000e+00 : f32
    %29 = vector.broadcast %cst_19 : f32 to vector<112x224xf32>
    %30 = arith.maximumf %28, %29 : vector<112x224xf32>
    %31 = arith.truncf %30 : vector<112x224xf32> to vector<112x224xbf16>
    %32 = vector.extract_strided_slice %31 {offsets = [0, 0], sizes = [16, 224], strides = [1, 1]} : vector<112x224xbf16> to vector<16x224xbf16>
    %c0_20 = arith.constant 0 : index
    %c0_21 = arith.constant 0 : index
    %c0_22 = arith.constant 0 : index
    %33 = vector.load %arg6[%c0_20, %c0_21, %c0_22] : memref<7x224x64xbf16, #tpu.memory_space<vmem>>, vector<1x224x64xbf16>
    %34 = vector.shape_cast %33 : vector<1x224x64xbf16> to vector<224x64xbf16>
    %cst_23 = arith.constant dense<0.000000e+00> : vector<16x64xf32>
    %35 = tpu.matmul %32, %34, %cst_23 {dimension_numbers = #tpu.dot_dimension_numbers<[1], [0], [0], [1], [0, 0, 1, 1], [], []>} : vector<16x224xbf16>, vector<224x64xbf16>, vector<16x64xf32> -> vector<16x64xf32>
    %36 = vector.extract_strided_slice %31 {offsets = [16, 0], sizes = [16, 224], strides = [1, 1]} : vector<112x224xbf16> to vector<16x224xbf16>
    %c1 = arith.constant 1 : index
    %c0_24 = arith.constant 0 : index
    %c0_25 = arith.constant 0 : index
    %37 = vector.load %arg6[%c1, %c0_24, %c0_25] : memref<7x224x64xbf16, #tpu.memory_space<vmem>>, vector<1x224x64xbf16>
    %38 = vector.shape_cast %37 : vector<1x224x64xbf16> to vector<224x64xbf16>
    %cst_26 = arith.constant dense<0.000000e+00> : vector<16x64xf32>
    %39 = tpu.matmul %36, %38, %cst_26 {dimension_numbers = #tpu.dot_dimension_numbers<[1], [0], [0], [1], [0, 0, 1, 1], [], []>} : vector<16x224xbf16>, vector<224x64xbf16>, vector<16x64xf32> -> vector<16x64xf32>
    %40 = arith.addf %35, %39 : vector<16x64xf32>
    %41 = vector.extract_strided_slice %31 {offsets = [32, 0], sizes = [16, 224], strides = [1, 1]} : vector<112x224xbf16> to vector<16x224xbf16>
    %c2 = arith.constant 2 : index
    %c0_27 = arith.constant 0 : index
    %c0_28 = arith.constant 0 : index
    %42 = vector.load %arg6[%c2, %c0_27, %c0_28] : memref<7x224x64xbf16, #tpu.memory_space<vmem>>, vector<1x224x64xbf16>
    %43 = vector.shape_cast %42 : vector<1x224x64xbf16> to vector<224x64xbf16>
    %cst_29 = arith.constant dense<0.000000e+00> : vector<16x64xf32>
    %44 = tpu.matmul %41, %43, %cst_29 {dimension_numbers = #tpu.dot_dimension_numbers<[1], [0], [0], [1], [0, 0, 1, 1], [], []>} : vector<16x224xbf16>, vector<224x64xbf16>, vector<16x64xf32> -> vector<16x64xf32>
    %45 = arith.addf %40, %44 : vector<16x64xf32>
    %46 = vector.extract_strided_slice %31 {offsets = [48, 0], sizes = [16, 224], strides = [1, 1]} : vector<112x224xbf16> to vector<16x224xbf16>
    %c3 = arith.constant 3 : index
    %c0_30 = arith.constant 0 : index
    %c0_31 = arith.constant 0 : index
    %47 = vector.load %arg6[%c3, %c0_30, %c0_31] : memref<7x224x64xbf16, #tpu.memory_space<vmem>>, vector<1x224x64xbf16>
    %48 = vector.shape_cast %47 : vector<1x224x64xbf16> to vector<224x64xbf16>
    %cst_32 = arith.constant dense<0.000000e+00> : vector<16x64xf32>
    %49 = tpu.matmul %46, %48, %cst_32 {dimension_numbers = #tpu.dot_dimension_numbers<[1], [0], [0], [1], [0, 0, 1, 1], [], []>} : vector<16x224xbf16>, vector<224x64xbf16>, vector<16x64xf32> -> vector<16x64xf32>
    %50 = arith.addf %45, %49 : vector<16x64xf32>
    %51 = vector.extract_strided_slice %31 {offsets = [64, 0], sizes = [16, 224], strides = [1, 1]} : vector<112x224xbf16> to vector<16x224xbf16>
    %c4 = arith.constant 4 : index
    %c0_33 = arith.constant 0 : index
    %c0_34 = arith.constant 0 : index
    %52 = vector.load %arg6[%c4, %c0_33, %c0_34] : memref<7x224x64xbf16, #tpu.memory_space<vmem>>, vector<1x224x64xbf16>
    %53 = vector.shape_cast %52 : vector<1x224x64xbf16> to vector<224x64xbf16>
    %cst_35 = arith.constant dense<0.000000e+00> : vector<16x64xf32>
    %54 = tpu.matmul %51, %53, %cst_35 {dimension_numbers = #tpu.dot_dimension_numbers<[1], [0], [0], [1], [0, 0, 1, 1], [], []>} : vector<16x224xbf16>, vector<224x64xbf16>, vector<16x64xf32> -> vector<16x64xf32>
    %55 = arith.addf %50, %54 : vector<16x64xf32>
    %56 = vector.extract_strided_slice %31 {offsets = [80, 0], sizes = [16, 224], strides = [1, 1]} : vector<112x224xbf16> to vector<16x224xbf16>
    %c5 = arith.constant 5 : index
    %c0_36 = arith.constant 0 : index
    %c0_37 = arith.constant 0 : index
    %57 = vector.load %arg6[%c5, %c0_36, %c0_37] : memref<7x224x64xbf16, #tpu.memory_space<vmem>>, vector<1x224x64xbf16>
    %58 = vector.shape_cast %57 : vector<1x224x64xbf16> to vector<224x64xbf16>
    %cst_38 = arith.constant dense<0.000000e+00> : vector<16x64xf32>
    %59 = tpu.matmul %56, %58, %cst_38 {dimension_numbers = #tpu.dot_dimension_numbers<[1], [0], [0], [1], [0, 0, 1, 1], [], []>} : vector<16x224xbf16>, vector<224x64xbf16>, vector<16x64xf32> -> vector<16x64xf32>
    %60 = arith.addf %55, %59 : vector<16x64xf32>
    %61 = vector.extract_strided_slice %31 {offsets = [96, 0], sizes = [16, 224], strides = [1, 1]} : vector<112x224xbf16> to vector<16x224xbf16>
    %c6 = arith.constant 6 : index
    %c0_39 = arith.constant 0 : index
    %c0_40 = arith.constant 0 : index
    %62 = vector.load %arg6[%c6, %c0_39, %c0_40] : memref<7x224x64xbf16, #tpu.memory_space<vmem>>, vector<1x224x64xbf16>
    %63 = vector.shape_cast %62 : vector<1x224x64xbf16> to vector<224x64xbf16>
    %cst_41 = arith.constant dense<0.000000e+00> : vector<16x64xf32>
    %64 = tpu.matmul %61, %63, %cst_41 {dimension_numbers = #tpu.dot_dimension_numbers<[1], [0], [0], [1], [0, 0, 1, 1], [], []>} : vector<16x224xbf16>, vector<224x64xbf16>, vector<16x64xf32> -> vector<16x64xf32>
    %65 = arith.addf %60, %64 : vector<16x64xf32>
    %c0_42 = arith.constant 0 : index
    %c768 = arith.constant 768 : index
    %66 = vector.load %arg12[%c0_42, %c768] : memref<1x1792xf32, #tpu.memory_space<vmem>>, vector<1x64xf32>
    %67 = vector.broadcast %66 : vector<1x64xf32> to vector<16x64xf32>
    %68 = arith.addf %65, %67 : vector<16x64xf32>
    %69 = arith.truncf %68 : vector<16x64xf32> to vector<16x64xbf16>
    %c0_43 = arith.constant 0 : index
    %c0_44 = arith.constant 0 : index
    %c0_45 = arith.constant 0 : index
    %70 = vector.load %arg7[%c0_43, %c0_44, %c0_45] : memref<7x64x224xbf16, #tpu.memory_space<vmem>>, vector<1x64x224xbf16>
    %71 = vector.shape_cast %70 : vector<1x64x224xbf16> to vector<64x224xbf16>
    %cst_46 = arith.constant dense<0.000000e+00> : vector<16x224xf32>
    %72 = tpu.matmul %69, %71, %cst_46 {dimension_numbers = #tpu.dot_dimension_numbers<[1], [0], [0], [1], [0, 0, 1, 1], [], []>} : vector<16x64xbf16>, vector<64x224xbf16>, vector<16x224xf32> -> vector<16x224xf32>
    %c1_47 = arith.constant 1 : index
    %c0_48 = arith.constant 0 : index
    %c0_49 = arith.constant 0 : index
    %73 = vector.load %arg7[%c1_47, %c0_48, %c0_49] : memref<7x64x224xbf16, #tpu.memory_space<vmem>>, vector<1x64x224xbf16>
    %74 = vector.shape_cast %73 : vector<1x64x224xbf16> to vector<64x224xbf16>
    %cst_50 = arith.constant dense<0.000000e+00> : vector<16x224xf32>
    %75 = tpu.matmul %69, %74, %cst_50 {dimension_numbers = #tpu.dot_dimension_numbers<[1], [0], [0], [1], [0, 0, 1, 1], [], []>} : vector<16x64xbf16>, vector<64x224xbf16>, vector<16x224xf32> -> vector<16x224xf32>
    %c2_51 = arith.constant 2 : index
    %c0_52 = arith.constant 0 : index
    %c0_53 = arith.constant 0 : index
    %76 = vector.load %arg7[%c2_51, %c0_52, %c0_53] : memref<7x64x224xbf16, #tpu.memory_space<vmem>>, vector<1x64x224xbf16>
    %77 = vector.shape_cast %76 : vector<1x64x224xbf16> to vector<64x224xbf16>
    %cst_54 = arith.constant dense<0.000000e+00> : vector<16x224xf32>
    %78 = tpu.matmul %69, %77, %cst_54 {dimension_numbers = #tpu.dot_dimension_numbers<[1], [0], [0], [1], [0, 0, 1, 1], [], []>} : vector<16x64xbf16>, vector<64x224xbf16>, vector<16x224xf32> -> vector<16x224xf32>
    %c3_55 = arith.constant 3 : index
    %c0_56 = arith.constant 0 : index
    %c0_57 = arith.constant 0 : index
    %79 = vector.load %arg7[%c3_55, %c0_56, %c0_57] : memref<7x64x224xbf16, #tpu.memory_space<vmem>>, vector<1x64x224xbf16>
    %80 = vector.shape_cast %79 : vector<1x64x224xbf16> to vector<64x224xbf16>
    %cst_58 = arith.constant dense<0.000000e+00> : vector<16x224xf32>
    %81 = tpu.matmul %69, %80, %cst_58 {dimension_numbers = #tpu.dot_dimension_numbers<[1], [0], [0], [1], [0, 0, 1, 1], [], []>} : vector<16x64xbf16>, vector<64x224xbf16>, vector<16x224xf32> -> vector<16x224xf32>
    %c4_59 = arith.constant 4 : index
    %c0_60 = arith.constant 0 : index
    %c0_61 = arith.constant 0 : index
    %82 = vector.load %arg7[%c4_59, %c0_60, %c0_61] : memref<7x64x224xbf16, #tpu.memory_space<vmem>>, vector<1x64x224xbf16>
    %83 = vector.shape_cast %82 : vector<1x64x224xbf16> to vector<64x224xbf16>
    %cst_62 = arith.constant dense<0.000000e+00> : vector<16x224xf32>
    %84 = tpu.matmul %69, %83, %cst_62 {dimension_numbers = #tpu.dot_dimension_numbers<[1], [0], [0], [1], [0, 0, 1, 1], [], []>} : vector<16x64xbf16>, vector<64x224xbf16>, vector<16x224xf32> -> vector<16x224xf32>
    %c5_63 = arith.constant 5 : index
    %c0_64 = arith.constant 0 : index
    %c0_65 = arith.constant 0 : index
    %85 = vector.load %arg7[%c5_63, %c0_64, %c0_65] : memref<7x64x224xbf16, #tpu.memory_space<vmem>>, vector<1x64x224xbf16>
    %86 = vector.shape_cast %85 : vector<1x64x224xbf16> to vector<64x224xbf16>
    %cst_66 = arith.constant dense<0.000000e+00> : vector<16x224xf32>
    %87 = tpu.matmul %69, %86, %cst_66 {dimension_numbers = #tpu.dot_dimension_numbers<[1], [0], [0], [1], [0, 0, 1, 1], [], []>} : vector<16x64xbf16>, vector<64x224xbf16>, vector<16x224xf32> -> vector<16x224xf32>
    %c6_67 = arith.constant 6 : index
    %c0_68 = arith.constant 0 : index
    %c0_69 = arith.constant 0 : index
    %88 = vector.load %arg7[%c6_67, %c0_68, %c0_69] : memref<7x64x224xbf16, #tpu.memory_space<vmem>>, vector<1x64x224xbf16>
    %89 = vector.shape_cast %88 : vector<1x64x224xbf16> to vector<64x224xbf16>
    %cst_70 = arith.constant dense<0.000000e+00> : vector<16x224xf32>
    %90 = tpu.matmul %69, %89, %cst_70 {dimension_numbers = #tpu.dot_dimension_numbers<[1], [0], [0], [1], [0, 0, 1, 1], [], []>} : vector<16x64xbf16>, vector<64x224xbf16>, vector<16x224xf32> -> vector<16x224xf32>
    %91 = tpu.concatenate %72, %75, %78, %81, %84, %87, %90 in 0 : vector<16x224xf32>, vector<16x224xf32>, vector<16x224xf32>, vector<16x224xf32>, vector<16x224xf32>, vector<16x224xf32>, vector<16x224xf32> -> vector<112x224xf32>
    %c0_71 = arith.constant 0 : index
    %c896 = arith.constant 896 : index
    %92 = vector.load %arg12[%c0_71, %c896] : memref<1x1792xf32, #tpu.memory_space<vmem>>, vector<1x224xf32>
    %93 = vector.broadcast %92 : vector<1x224xf32> to vector<112x224xf32>
    %94 = arith.addf %91, %93 : vector<112x224xf32>
    %cst_72 = arith.constant 0.000000e+00 : f32
    %95 = vector.broadcast %cst_72 : f32 to vector<112x224xf32>
    %96 = arith.maximumf %94, %95 : vector<112x224xf32>
    %97 = arith.truncf %96 : vector<112x224xf32> to vector<112x224xbf16>
    %c0_73 = arith.constant 0 : index
    %c0_74 = arith.constant 0 : index
    %98 = vector.load %arg8[%c0_73, %c0_74] : memref<224x448xbf16, #tpu.memory_space<vmem>>, vector<224x448xbf16>
    %cst_75 = arith.constant dense<0.000000e+00> : vector<112x448xf32>
    %99 = tpu.matmul %97, %98, %cst_75 {dimension_numbers = #tpu.dot_dimension_numbers<[1], [0], [0], [1], [0, 0, 1, 1], [], []>} : vector<112x224xbf16>, vector<224x448xbf16>, vector<112x448xf32> -> vector<112x448xf32>
    %100 = vector.extract_strided_slice %97 {offsets = [16, 0], sizes = [96, 224], strides = [1, 1]} : vector<112x224xbf16> to vector<96x224xbf16>
    %cst_76 = arith.constant 0.000000e+00 : bf16
    %101 = vector.broadcast %cst_76 : bf16 to vector<16x224xbf16>
    %102 = tpu.concatenate %100, %101 in 0 : vector<96x224xbf16>, vector<16x224xbf16> -> vector<112x224xbf16>
    %c0_77 = arith.constant 0 : index
    %c0_78 = arith.constant 0 : index
    %103 = vector.load %arg9[%c0_77, %c0_78] : memref<224x448xbf16, #tpu.memory_space<vmem>>, vector<224x448xbf16>
    %cst_79 = arith.constant dense<0.000000e+00> : vector<112x448xf32>
    %104 = tpu.matmul %102, %103, %cst_79 {dimension_numbers = #tpu.dot_dimension_numbers<[1], [0], [0], [1], [0, 0, 1, 1], [], []>} : vector<112x224xbf16>, vector<224x448xbf16>, vector<112x448xf32> -> vector<112x448xf32>
    %105 = arith.addf %99, %104 : vector<112x448xf32>
    %c0_80 = arith.constant 0 : index
    %c1152 = arith.constant 1152 : index
    %106 = vector.load %arg12[%c0_80, %c1152] : memref<1x1792xf32, #tpu.memory_space<vmem>>, vector<1x448xf32>
    %107 = vector.broadcast %106 : vector<1x448xf32> to vector<112x448xf32>
    %108 = arith.addf %105, %107 : vector<112x448xf32>
    %cst_81 = arith.constant 0.000000e+00 : f32
    %109 = vector.broadcast %cst_81 : f32 to vector<112x448xf32>
    %110 = arith.maximumf %108, %109 : vector<112x448xf32>
    %111 = arith.truncf %110 : vector<112x448xf32> to vector<112x448xbf16>
    %c0_82 = arith.constant 0 : index
    %c0_83 = arith.constant 0 : index
    %112 = vector.load %arg10[%c0_82, %c0_83] : memref<448x112xbf16, #tpu.memory_space<vmem>>, vector<448x112xbf16>
    %cst_84 = arith.constant dense<0.000000e+00> : vector<112x112xf32>
    %113 = tpu.matmul %111, %112, %cst_84 {dimension_numbers = #tpu.dot_dimension_numbers<[1], [0], [0], [1], [0, 0, 1, 1], [], []>} : vector<112x448xbf16>, vector<448x112xbf16>, vector<112x112xf32> -> vector<112x112xf32>
    %114 = vector.extract_strided_slice %111 {offsets = [0, 0], sizes = [112, 224], strides = [1, 1]} : vector<112x448xbf16> to vector<112x224xbf16>
    %115 = vector.extract_strided_slice %114 {offsets = [16, 0], sizes = [96, 224], strides = [1, 1]} : vector<112x224xbf16> to vector<96x224xbf16>
    %cst_85 = arith.constant 0.000000e+00 : bf16
    %116 = vector.broadcast %cst_85 : bf16 to vector<16x224xbf16>
    %117 = tpu.concatenate %115, %116 in 0 : vector<96x224xbf16>, vector<16x224xbf16> -> vector<112x224xbf16>
    %c0_86 = arith.constant 0 : index
    %c0_87 = arith.constant 0 : index
    %118 = vector.load %arg11[%c0_86, %c0_87] : memref<224x112xbf16, #tpu.memory_space<vmem>>, vector<224x112xbf16>
    %cst_88 = arith.constant dense<0.000000e+00> : vector<112x112xf32>
    %119 = tpu.matmul %117, %118, %cst_88 {dimension_numbers = #tpu.dot_dimension_numbers<[1], [0], [0], [1], [0, 0, 1, 1], [], []>} : vector<112x224xbf16>, vector<224x112xbf16>, vector<112x112xf32> -> vector<112x112xf32>
    %120 = arith.addf %113, %119 : vector<112x112xf32>
    %c0_89 = arith.constant 0 : index
    %c1664 = arith.constant 1664 : index
    %121 = vector.load %arg12[%c0_89, %c1664] : memref<1x1792xf32, #tpu.memory_space<vmem>>, vector<1x112xf32>
    %122 = vector.broadcast %121 : vector<1x112xf32> to vector<112x112xf32>
    %123 = arith.addf %120, %122 : vector<112x112xf32>
    %124 = arith.negf %123 : vector<112x112xf32>
    %125 = math.exp %124 : vector<112x112xf32>
    %cst_90 = arith.constant 1.000000e+00 : f32
    %126 = vector.broadcast %cst_90 : f32 to vector<112x112xf32>
    %127 = arith.addf %126, %125 : vector<112x112xf32>
    %128 = arith.divf %126, %127 : vector<112x112xf32>
    %c0_91 = arith.constant 0 : index
    %c0_92 = arith.constant 0 : index
    %c0_93 = arith.constant 0 : index
    %129 = vector.load %arg13[%c0_91, %c0_92, %c0_93] : memref<1x112x112xf32, #tpu.memory_space<vmem>>, vector<1x112x112xf32>
    %130 = vector.shape_cast %129 : vector<1x112x112xf32> to vector<112x112xf32>
    %131 = vector.shape_cast %128 : vector<112x112xf32> to vector<1x112x112xf32>
    tpu.vector_store %arg13[%c0_91, %c0_92, %c0_93], %131 {strides = array<i32>} : memref<1x112x112xf32, #tpu.memory_space<vmem>>, vector<1x112x112xf32>,
    return
  }
  func.func @transform_0(%arg0: i32) -> (i32, i32, i32) {
    %c0_i32 = arith.constant 0 : i32
    %c0_i32_0 = arith.constant 0 : i32
    %c0_i32_1 = arith.constant 0 : i32
    return %arg0, %c0_i32, %c0_i32_0 : i32, i32, i32
  }
  func.func @transform_1(%arg0: i32) -> (i32, i32) {
    %c0_i32 = arith.constant 0 : i32
    %c0_i32_0 = arith.constant 0 : i32
    %c0_i32_1 = arith.constant 0 : i32
    return %c0_i32, %c0_i32_0 : i32, i32
  }
  func.func @transform_2(%arg0: i32) -> (i32, i32) {
    %c0_i32 = arith.constant 0 : i32
    %c0_i32_0 = arith.constant 0 : i32
    %c0_i32_1 = arith.constant 0 : i32
    return %c0_i32, %c0_i32_0 : i32, i32
  }
  func.func @transform_3(%arg0: i32) -> (i32, i32) {
    %c0_i32 = arith.constant 0 : i32
    %c0_i32_0 = arith.constant 0 : i32
    %c0_i32_1 = arith.constant 0 : i32
    return %c0_i32, %c0_i32_0 : i32, i32
  }
  func.func @transform_4(%arg0: i32) -> (i32, i32) {
    %c0_i32 = arith.constant 0 : i32
    %c0_i32_0 = arith.constant 0 : i32
    %c0_i32_1 = arith.constant 0 : i32
    return %c0_i32, %c0_i32_0 : i32, i32
  }
  func.func @transform_5(%arg0: i32) -> (i32, i32, i32) {
    %c0_i32 = arith.constant 0 : i32
    %c0_i32_0 = arith.constant 0 : i32
    %c0_i32_1 = arith.constant 0 : i32
    %c0_i32_2 = arith.constant 0 : i32
    return %c0_i32, %c0_i32_0, %c0_i32_1 : i32, i32, i32
  }
  func.func @transform_6(%arg0: i32) -> (i32, i32, i32) {
    %c0_i32 = arith.constant 0 : i32
    %c0_i32_0 = arith.constant 0 : i32
    %c0_i32_1 = arith.constant 0 : i32
    %c0_i32_2 = arith.constant 0 : i32
    return %c0_i32, %c0_i32_0, %c0_i32_1 : i32, i32, i32
  }
  func.func @transform_7(%arg0: i32) -> (i32, i32) {
    %c0_i32 = arith.constant 0 : i32
    %c0_i32_0 = arith.constant 0 : i32
    %c0_i32_1 = arith.constant 0 : i32
    return %c0_i32, %c0_i32_0 : i32, i32
  }
  func.func @transform_8(%arg0: i32) -> (i32, i32) {
    %c0_i32 = arith.constant 0 : i32
    %c0_i32_0 = arith.constant 0 : i32
    %c0_i32_1 = arith.constant 0 : i32
    return %c0_i32, %c0_i32_0 : i32, i32
  }
  func.func @transform_9(%arg0: i32) -> (i32, i32) {
    %c0_i32 = arith.constant 0 : i32
    %c0_i32_0 = arith.constant 0 : i32
    %c0_i32_1 = arith.constant 0 : i32
    return %c0_i32, %c0_i32_0 : i32, i32
  }
  func.func @transform_10(%arg0: i32) -> (i32, i32) {
    %c0_i32 = arith.constant 0 : i32
    %c0_i32_0 = arith.constant 0 : i32
    %c0_i32_1 = arith.constant 0 : i32
    return %c0_i32, %c0_i32_0 : i32, i32
  }
  func.func @transform_11(%arg0: i32) -> (i32, i32) {
    %c0_i32 = arith.constant 0 : i32
    %c0_i32_0 = arith.constant 0 : i32
    %c0_i32_1 = arith.constant 0 : i32
    return %c0_i32, %c0_i32_0 : i32, i32
  }
  func.func @transform_12(%arg0: i32) -> (i32, i32, i32) {
    %c0_i32 = arith.constant 0 : i32
    %c0_i32_0 = arith.constant 0 : i32
    %c0_i32_1 = arith.constant 0 : i32
    return %arg0, %c0_i32, %c0_i32_0 : i32, i32, i32
  }
}

</mosaic_0001>

<llo_original>
// kernel: autoencoder_apply.1
$region0: #{autoencoder_apply.1}
  #allocation0 [shape = 'u32[]', space=smem, size = 0x4, offset = 0x4, fixed_abs, tag = 'smem constant byte address 0x4 - core index']
  #allocation1 [shape = 'u32[72,128]{1,0:T(1,128)}', space=vmem, size = 0x9000, scoped, tag = 'internal scratch']
  %s0 = inlined_call_operand.vmem [shape: bf16[1,112,112], index: 0, kind: input, shape index: {}]
  %s1 = inlined_call_operand.vmem [shape: bf16[112,448], index: 1, kind: input, shape index: {}]
  %s2 = inlined_call_operand.hbm [shape: bf16[28,448], index: 2, kind: input, shape index: {}]
  %s3 = inlined_call_operand.vmem [shape: bf16[448,224], index: 3, kind: input, shape index: {}]
  %s4 = inlined_call_operand.hbm [shape: bf16[224,224], index: 4, kind: input, shape index: {}]
  %s5 = inlined_call_operand.vmem [shape: bf16[7,224,64], index: 5, kind: input, shape index: {}]
  %s6 = inlined_call_operand.vmem [shape: bf16[7,64,224], index: 6, kind: input, shape index: {}]
  %s7 = inlined_call_operand.vmem [shape: bf16[224,448], index: 7, kind: input, shape index: {}]
  %s8 = inlined_call_operand.vmem [shape: bf16[224,448], index: 8, kind: input, shape index: {}]
  %s9 = inlined_call_operand.hbm [shape: bf16[448,112], index: 9, kind: input, shape index: {}]
  %s10 = inlined_call_operand.vmem [shape: bf16[224,112], index: 10, kind: input, shape index: {}]
  %s11 = inlined_call_operand.vmem [shape: f32[1,1792], index: 11, kind: input, shape index: {}]
  %s12 = inlined_call_operand.vmem [shape: f32[1,112,112], index: 12, kind: output, shape index: {}]
  %s13 = sld [smem:[#allocation0]]
  $region70: #{autoencoder_apply.1} parent=0
    _
  %s15 = ssub.s32 1, %s13
  %s16 = scalar_select 0, %s15, %s13
  $region1: #{autoencoder_apply.1} parent=0
    #allocation2 [shape = 'u8[32768]{0}', space=vmem, size = 0x8000, scoped, tag = 'input window, operand 2, single buffered']
    #allocation3 [shape = 's32[1]{0}', space=sflag, size = 0x4, scoped, tag = 'scoped memory for autoencoder_apply.1']
    #allocation4 [shape = 'u8[114688]{0}', space=vmem, size = 0x1c000, scoped, tag = 'input window, operand 4, single buffered']
    #allocation5 [shape = 's32[1]{0}', space=sflag, size = 0x4, scoped, tag = 'scoped memory for autoencoder_apply.1']
    #allocation6 [shape = 'u8[114688]{0}', space=vmem, size = 0x1c000, scoped, tag = 'input window, operand 9, single buffered']
    %17 = vsyncpa [#allocation3], 0
    %18 = vsyncpa [#allocation5], 0
    // Predicated region
    $region2: #{autoencoder_apply.1} parent=1 // pred_check
      _
    $region3: #{autoencoder_apply.1} parent=1 // pred_check_branch
      %20 = sbr.rel (0) target = $region5
    $region4: #{autoencoder_apply.1} parent=1 // pred_region
      _
    $region5: #{autoencoder_apply.1} parent=1 // pred_fallthru
      _
    // Predicated region
    $region6: #{autoencoder_apply.1} parent=1 // pred_check
      _
    $region7: #{autoencoder_apply.1} parent=1 // pred_check_branch
      %22 = sbr.rel (0) target = $region9
    $region8: #{autoencoder_apply.1} parent=1 // pred_region
      _
    $region9: #{autoencoder_apply.1} parent=1 // pred_fallthru
      _
    // Predicated region
    $region10: #{autoencoder_apply.1} parent=1 // pred_check
      _
    $region11: #{autoencoder_apply.1} parent=1 // pred_check_branch
      %24 = sbr.rel (0) target = $region13
    $region12: #{autoencoder_apply.1} parent=1 // pred_region
      %26 = vsyncadd [#allocation3], 0
      %s27 = sshll.u32 %s2, 4
      %s28 = int_to_ptr.hbm [resolvable:$true] %s27
      %s29 = sshll.u32 [#allocation2], 4
      %s30 = int_to_ptr.vmem [resolvable:$true] %s29
      %35 = dma.hbm_to_vmem [thread:$0]  %s28, 1024, %s30, [#allocation3], 256, 256, 16
    $region13: #{autoencoder_apply.1} parent=1 // pred_fallthru
      _
    // Predicated region
    $region14: #{autoencoder_apply.1} parent=1 // pred_check
      _
    $region15: #{autoencoder_apply.1} parent=1 // pred_check_branch
      %37 = sbr.rel (0) target = $region17
    $region16: #{autoencoder_apply.1} parent=1 // pred_region
      _
    $region17: #{autoencoder_apply.1} parent=1 // pred_fallthru
      _
    // Predicated region
    $region18: #{autoencoder_apply.1} parent=1 // pred_check
      _
    $region19: #{autoencoder_apply.1} parent=1 // pred_check_branch
      %39 = sbr.rel (0) target = $region21
    $region20: #{autoencoder_apply.1} parent=1 // pred_region
      %41 = vsyncadd [#allocation5], 0
      %s42 = sshll.u32 %s4, 4
      %s43 = int_to_ptr.hbm [resolvable:$true] %s42
      %s44 = sshll.u32 [#allocation4], 4
      %s45 = int_to_ptr.vmem [resolvable:$true] %s44
      %50 = dma.hbm_to_vmem [thread:$0]  %s43, 3584, %s45, [#allocation5], 128, 128, 8
    $region21: #{autoencoder_apply.1} parent=1 // pred_fallthru
      _
    // Predicated region
    $region22: #{autoencoder_apply.1} parent=1 // pred_check
      _
    $region23: #{autoencoder_apply.1} parent=1 // pred_check_branch
      %52 = sbr.rel (0) target = $region25
    $region24: #{autoencoder_apply.1} parent=1 // pred_region
      _
    $region25: #{autoencoder_apply.1} parent=1 // pred_fallthru
      _
    // Predicated region
    $region26: #{autoencoder_apply.1} parent=1 // pred_check
      _
    $region27: #{autoencoder_apply.1} parent=1 // pred_check_branch
      %54 = sbr.rel (0) target = $region29
    $region28: #{autoencoder_apply.1} parent=1 // pred_region
      _
    $region29: #{autoencoder_apply.1} parent=1 // pred_fallthru
      _
    // Predicated region
    $region30: #{autoencoder_apply.1} parent=1 // pred_check
      _
    $region31: #{autoencoder_apply.1} parent=1 // pred_check_branch
      %56 = sbr.rel (0) target = $region33
    $region32: #{autoencoder_apply.1} parent=1 // pred_region
      _
    $region33: #{autoencoder_apply.1} parent=1 // pred_fallthru
      _
    // Predicated region
    $region34: #{autoencoder_apply.1} parent=1 // pred_check
      _
    $region35: #{autoencoder_apply.1} parent=1 // pred_check_branch
      %58 = sbr.rel (0) target = $region37
    $region36: #{autoencoder_apply.1} parent=1 // pred_region
      _
    $region37: #{autoencoder_apply.1} parent=1 // pred_fallthru
      _
    // Predicated region
    $region38: #{autoencoder_apply.1} parent=1 // pred_check
      _
    $region39: #{autoencoder_apply.1} parent=1 // pred_check_branch
      %60 = sbr.rel (0) target = $region41
    $region40: #{autoencoder_apply.1} parent=1 // pred_region
      %62 = vsyncadd [#allocation5], 0
      %s63 = sshll.u32 %s9, 4
      %s64 = int_to_ptr.hbm [resolvable:$true] %s63
      %s65 = sshll.u32 [#allocation6], 4
      %s66 = int_to_ptr.vmem [resolvable:$true] %s65
      %71 = dma.hbm_to_vmem [thread:$0]  %s64, 3584, %s66, [#allocation5], 64, 64, 4
    $region41: #{autoencoder_apply.1} parent=1 // pred_fallthru
      _
    // Predicated region
    $region42: #{autoencoder_apply.1} parent=1 // pred_check
      _
    $region43: #{autoencoder_apply.1} parent=1 // pred_check_branch
      %73 = sbr.rel (0) target = $region45
    $region44: #{autoencoder_apply.1} parent=1 // pred_region
      _
    $region45: #{autoencoder_apply.1} parent=1 // pred_fallthru
      _
    // Predicated region
    $region46: #{autoencoder_apply.1} parent=1 // pred_check
      _
    $region47: #{autoencoder_apply.1} parent=1 // pred_check_branch
      %75 = sbr.rel (0) target = $region49
    $region48: #{autoencoder_apply.1} parent=1 // pred_region
      _
    $region49: #{autoencoder_apply.1} parent=1 // pred_fallthru
      _
    // Predicated region
    $region50: #{autoencoder_apply.1} parent=1 // pred_check
      _
    $region51: #{autoencoder_apply.1} parent=1 // pred_check_branch
      %77 = sbr.rel (0) target = $region53
    $region52: #{autoencoder_apply.1} parent=1 // pred_region
      %79 = dma.done [#allocation3], 1024
    $region53: #{autoencoder_apply.1} parent=1 // pred_fallthru
      _
    // Predicated region
    $region54: #{autoencoder_apply.1} parent=1 // pred_check
      _
    $region55: #{autoencoder_apply.1} parent=1 // pred_check_branch
      %81 = sbr.rel (0) target = $region57
    $region56: #{autoencoder_apply.1} parent=1 // pred_region
      %83 = dma.done [#allocation5], 3584
    $region57: #{autoencoder_apply.1} parent=1 // pred_fallthru
      _
    // Predicated region
    $region58: #{autoencoder_apply.1} parent=1 // pred_check
      _
    $region59: #{autoencoder_apply.1} parent=1 // pred_check_branch
      %85 = sbr.rel (0) target = $region61
    $region60: #{autoencoder_apply.1} parent=1 // pred_region
      %87 = dma.done [#allocation5], 3584
    $region61: #{autoencoder_apply.1} parent=1 // pred_fallthru
      _
    %v89 = vld [vmem:[%s0] sm:$0xf]
    %v90 = vld [vmem:[%s0 + $0x4] sm:$0xf]
    %v91 = vld [vmem:[%s0 + $0x8] sm:$0xf]
    %v92 = vld [vmem:[%s0 + $0xc] sm:$0xf]
    %v93 = vld [vmem:[%s0 + $0x10] sm:$0xf]
    %v94 = vld [vmem:[%s0 + $0x14] sm:$0xf]
    %v95 = vld [vmem:[%s0 + $0x18] sm:$0xf]
    %v96 = vld [vmem:[%s0 + $0x1c] sm:$0xf]
    %v97 = vld [vmem:[%s0 + $0x20] sm:$0xf]
    %v98 = vld [vmem:[%s0 + $0x24] sm:$0xf]
    %v99 = vld [vmem:[%s0 + $0x28] sm:$0xf]
    %v100 = vld [vmem:[%s0 + $0x2c] sm:$0xf]
    %v101 = vld [vmem:[%s0 + $0x30] sm:$0xf]
    %v102 = vld [vmem:[%s0 + $0x34] sm:$0xf]
    %v103 = vld [vmem:[%s1] sm:$0xff]
    %v104 = vld [vmem:[%s1 + $0x8] sm:$0xff]
    %v105 = vld [vmem:[%s1 + $0x10] sm:$0xff]
    %v106 = vld [vmem:[%s1 + $0x18] sm:$0xff]
    %v107 = vld [vmem:[%s1 + $0x20] sm:$0xff]
    %v108 = vld [vmem:[%s1 + $0x28] sm:$0xff]
    %v109 = vld [vmem:[%s1 + $0x30] sm:$0xff]
    %v110 = vld [vmem:[%s1 + $0x38] sm:$0xff]
    %v111 = vld [vmem:[%s1 + $0x40] sm:$0xff]
    %v112 = vld [vmem:[%s1 + $0x48] sm:$0xff]
    %v113 = vld [vmem:[%s1 + $0x50] sm:$0xff]
    %v114 = vld [vmem:[%s1 + $0x58] sm:$0xff]
    %v115 = vld [vmem:[%s1 + $0x60] sm:$0xff]
    %v116 = vld [vmem:[%s1 + $0x68] sm:$0xff]
    %v117 = vld [vmem:[%s1 + $0x70] sm:$0xff]
    %v118 = vld [vmem:[%s1 + $0x78] sm:$0xff]
    %v119 = vld [vmem:[%s1 + $0x80] sm:$0xff]
    %v120 = vld [vmem:[%s1 + $0x88] sm:$0xff]
    %v121 = vld [vmem:[%s1 + $0x90] sm:$0xff]
    %v122 = vld [vmem:[%s1 + $0x98] sm:$0xff]
    %v123 = vld [vmem:[%s1 + $0xa0] sm:$0xff]
    %v124 = vld [vmem:[%s1 + $0xa8] sm:$0xff]
    %v125 = vld [vmem:[%s1 + $0xb0] sm:$0xff]
    %v126 = vld [vmem:[%s1 + $0xb8] sm:$0xff]
    %v127 = vld [vmem:[%s1 + $0xc0] sm:$0xff]
    %v128 = vld [vmem:[%s1 + $0xc8] sm:$0xff]
    %v129 = vld [vmem:[%s1 + $0xd0] sm:$0xff]
    %v130 = vld [vmem:[%s1 + $0xd8] sm:$0xff]
    %v143 = vunpack.c.l.b16 %v89
    %v144 = vunpack.c.l.b16 %v90
    %v145 = vunpack.c.l.b16 %v91
    %v146 = vunpack.c.l.b16 %v92
    %v147 = vunpack.c.l.b16 %v93
    %v148 = vunpack.c.l.b16 %v94
    %v149 = vunpack.c.l.b16 %v95
    %v150 = vunpack.c.l.b16 %v96
    %v151 = vunpack.c.l.b16 %v97
    %v152 = vunpack.c.l.b16 %v98
    %v153 = vunpack.c.l.b16 %v99
    %v154 = vunpack.c.l.b16 %v100
    %v155 = vpack.c.b16 %v144, %v143
    %v156 = vpack.c.b16 %v146, %v145
    %v157 = vpack.c.b16 %v148, %v147
    %v158 = vpack.c.b16 %v150, %v149
    %v159 = vpack.c.b16 %v152, %v151
    %v160 = vpack.c.b16 %v154, %v153
    %161 = vrot.lane.b32.xlu0 %v155, 44
    %v162 = vpop.permute.xlu0 %161
    %163 = vrot.lane.b32.xlu0 %v156, 44
    %v164 = vpop.permute.xlu0 %163
    %165 = vrot.lane.b32.xlu0 %v157, 44
    %v166 = vpop.permute.xlu0 %165
    %167 = vrot.lane.b32.xlu0 %v158, 44
    %v168 = vpop.permute.xlu0 %167
    %169 = vrot.lane.b32.xlu0 %v159, 44
    %v170 = vpop.permute.xlu0 %169
    %171 = vrot.lane.b32.xlu0 %v160, 44
    %v172 = vpop.permute.xlu0 %171
    %v173 = vld [vmem:[#allocation2] sm:$0xff]
    %v174 = vld [vmem:[#allocation2 + $0x8] sm:$0xff]
    %v175 = vld [vmem:[#allocation2 + $0x10] sm:$0xff]
    %v176 = vld [vmem:[#allocation2 + $0x18] sm:$0xff]
    %v177 = vld [vmem:[#allocation2 + $0x20] sm:$0xff]
    %v178 = vld [vmem:[#allocation2 + $0x28] sm:$0xff]
    %v179 = vld [vmem:[#allocation2 + $0x30] sm:$0x33]
    %v180 = vld [vmem:[#allocation2 + $0x38] sm:$0x33]
    %v189 = vunpack.c.l.b16 %v173
    %v190 = vunpack.c.h.b16 %v173
    %v191 = vunpack.c.l.b16 %v174
    %v192 = vunpack.c.h.b16 %v174
    %v193 = vunpack.c.l.b16 %v175
    %v194 = vunpack.c.h.b16 %v175
    %v195 = vunpack.c.l.b16 %v176
    %v196 = vunpack.c.h.b16 %v176
    %v197 = vunpack.c.l.b16 %v177
    %v198 = vunpack.c.h.b16 %v177
    %v199 = vunpack.c.l.b16 %v178
    %v200 = vunpack.c.h.b16 %v178
    %v201 = vunpack.c.l.b16 %v179
    %v202 = vunpack.c.h.b16 %v179
    %v203 = vunpack.c.l.b16 %v180
    %v204 = vunpack.c.h.b16 %v180
    %v205 = vpack.c.b16 %v193, %v189
    %v206 = vpack.c.b16 %v194, %v190
    %v207 = vpack.c.b16 %v195, %v191
    %v208 = vpack.c.b16 %v196, %v192
    %v209 = vpack.c.b16 %v201, %v197
    %v210 = vpack.c.b16 %v202, %v198
    %v211 = vpack.c.b16 %v203, %v199
    %v212 = vpack.c.b16 %v204, %v200
    %vm217 = vcmask 228352
    %v219 = vsel %vm217, 0, 0
    %v222 = vsel %vm217, %v162, 0
    %v225 = vsel %vm217, %v164, 0
    %v228 = vsel %vm217, %v166, 0
    %v231 = vsel %vm217, %v168, 0
    %v234 = vsel %vm217, %v170, 0
    %v237 = vsel %vm217, %v172, 0
    %vm239 = vcmask 1045504
    %v241 = vsel %vm239, %v209, 0
    %v244 = vsel %vm239, %v210, 0
    %v247 = vsel %vm239, %v211, 0
    %v250 = vsel %vm239, %v212, 0
    %252 = vmatpush.bf16.msra.mxu0 0
    %253 = vmatpush.bf16.msra.mxu0 0
    %254 = vmatpush.bf16.msra.mxu0 0
    %255 = vmatpush.bf16.msra.mxu0 0
    %256 = vmatpush.bf16.msra.mxu0 0
    %257 = vmatpush.bf16.msra.mxu0 0
    %258 = vmatpush.bf16.msra.mxu0 %v241
    %259 = vmatpush.bf16.msra.mxu0 %v205
    %260 = vmatmul.bf16.gmra.mxu0 %v219
    %v261 = vpop.f32.mrf.mxu0
    %v262 = vadd.f32 0.0, %v261
    %v263 = vpop.f32.mrf.mxu0
    %v264 = vadd.f32 0.0, %v263
    %265 = vmatmul.bf16.gmra.mxu0 %v222
    %v266 = vpop.f32.mrf.mxu0
    %v267 = vadd.f32 0.0, %v266
    %v268 = vpop.f32.mrf.mxu0
    %v269 = vadd.f32 0.0, %v268
    %270 = vmatmul.bf16.gmra.mxu0 %v225
    %v271 = vpop.f32.mrf.mxu0
    %v272 = vadd.f32 0.0, %v271
    %v273 = vpop.f32.mrf.mxu0
    %v274 = vadd.f32 0.0, %v273
    %275 = vmatmul.bf16.gmra.mxu0 %v228
    %v276 = vpop.f32.mrf.mxu0
    %v277 = vadd.f32 0.0, %v276
    %v278 = vpop.f32.mrf.mxu0
    %v279 = vadd.f32 0.0, %v278
    %280 = vmatmul.bf16.gmra.mxu0 %v231
    %v281 = vpop.f32.mrf.mxu0
    %v282 = vadd.f32 0.0, %v281
    %v283 = vpop.f32.mrf.mxu0
    %v284 = vadd.f32 0.0, %v283
    %285 = vmatmul.bf16.gmra.mxu0 %v234
    %v286 = vpop.f32.mrf.mxu0
    %v287 = vadd.f32 0.0, %v286
    %v288 = vpop.f32.mrf.mxu0
    %v289 = vadd.f32 0.0, %v288
    %290 = vmatmul.bf16.gmra.mxu0 %v237
    %v291 = vpop.f32.mrf.mxu0
    %v292 = vadd.f32 0.0, %v291
    %v293 = vpop.f32.mrf.mxu0
    %v294 = vadd.f32 0.0, %v293
    %295 = vdwg.mxu0
    %296 = vmatpush.bf16.msra.mxu0 0
    %297 = vmatpush.bf16.msra.mxu0 0
    %298 = vmatpush.bf16.msra.mxu0 0
    %299 = vmatpush.bf16.msra.mxu0 0
    %300 = vmatpush.bf16.msra.mxu0 0
    %301 = vmatpush.bf16.msra.mxu0 0
    %302 = vmatpush.bf16.msra.mxu0 %v244
    %303 = vmatpush.bf16.msra.mxu0 %v206
    %304 = vmatmul.bf16.gmra.mxu0 %v219
    %v305 = vpop.f32.mrf.mxu0
    %v306 = vadd.f32 0.0, %v305
    %v307 = vpop.f32.mrf.mxu0
    %v308 = vadd.f32 0.0, %v307
    %309 = vmatmul.bf16.gmra.mxu0 %v222
    %v310 = vpop.f32.mrf.mxu0
    %v311 = vadd.f32 0.0, %v310
    %v312 = vpop.f32.mrf.mxu0
    %v313 = vadd.f32 0.0, %v312
    %314 = vmatmul.bf16.gmra.mxu0 %v225
    %v315 = vpop.f32.mrf.mxu0
    %v316 = vadd.f32 0.0, %v315
    %v317 = vpop.f32.mrf.mxu0
    %v318 = vadd.f32 0.0, %v317
    %319 = vmatmul.bf16.gmra.mxu0 %v228
    %v320 = vpop.f32.mrf.mxu0
    %v321 = vadd.f32 0.0, %v320
    %v322 = vpop.f32.mrf.mxu0
    %v323 = vadd.f32 0.0, %v322
    %324 = vmatmul.bf16.gmra.mxu0 %v231
    %v325 = vpop.f32.mrf.mxu0
    %v326 = vadd.f32 0.0, %v325
    %v327 = vpop.f32.mrf.mxu0
    %v328 = vadd.f32 0.0, %v327
    %329 = vmatmul.bf16.gmra.mxu0 %v234
    %v330 = vpop.f32.mrf.mxu0
    %v331 = vadd.f32 0.0, %v330
    %v332 = vpop.f32.mrf.mxu0
    %v333 = vadd.f32 0.0, %v332
    %334 = vmatmul.bf16.gmra.mxu0 %v237
    %v335 = vpop.f32.mrf.mxu0
    %v336 = vadd.f32 0.0, %v335
    %v337 = vpop.f32.mrf.mxu0
    %v338 = vadd.f32 0.0, %v337
    %339 = vdwg.mxu0
    %340 = vmatpush.bf16.msra.mxu0 0
    %341 = vmatpush.bf16.msra.mxu0 0
    %342 = vmatpush.bf16.msra.mxu0 0
    %343 = vmatpush.bf16.msra.mxu0 0
    %344 = vmatpush.bf16.msra.mxu0 0
    %345 = vmatpush.bf16.msra.mxu0 0
    %346 = vmatpush.bf16.msra.mxu0 %v247
    %347 = vmatpush.bf16.msra.mxu0 %v207
    %348 = vmatmul.bf16.gmra.mxu0 %v219
    %v349 = vpop.f32.mrf.mxu0
    %v350 = vadd.f32 0.0, %v349
    %v351 = vpop.f32.mrf.mxu0
    %v352 = vadd.f32 0.0, %v351
    %353 = vmatmul.bf16.gmra.mxu0 %v222
    %v354 = vpop.f32.mrf.mxu0
    %v355 = vadd.f32 0.0, %v354
    %v356 = vpop.f32.mrf.mxu0
    %v357 = vadd.f32 0.0, %v356
    %358 = vmatmul.bf16.gmra.mxu0 %v225
    %v359 = vpop.f32.mrf.mxu0
    %v360 = vadd.f32 0.0, %v359
    %v361 = vpop.f32.mrf.mxu0
    %v362 = vadd.f32 0.0, %v361
    %363 = vmatmul.bf16.gmra.mxu0 %v228
    %v364 = vpop.f32.mrf.mxu0
    %v365 = vadd.f32 0.0, %v364
    %v366 = vpop.f32.mrf.mxu0
    %v367 = vadd.f32 0.0, %v366
    %368 = vmatmul.bf16.gmra.mxu0 %v231
    %v369 = vpop.f32.mrf.mxu0
    %v370 = vadd.f32 0.0, %v369
    %v371 = vpop.f32.mrf.mxu0
    %v372 = vadd.f32 0.0, %v371
    %373 = vmatmul.bf16.gmra.mxu0 %v234
    %v374 = vpop.f32.mrf.mxu0
    %v375 = vadd.f32 0.0, %v374
    %v376 = vpop.f32.mrf.mxu0
    %v377 = vadd.f32 0.0, %v376
    %378 = vmatmul.bf16.gmra.mxu0 %v237
    %v379 = vpop.f32.mrf.mxu0
    %v380 = vadd.f32 0.0, %v379
    %v381 = vpop.f32.mrf.mxu0
    %v382 = vadd.f32 0.0, %v381
    %383 = vdwg.mxu0
    %384 = vmatpush.bf16.msra.mxu0 0
    %385 = vmatpush.bf16.msra.mxu0 0
    %386 = vmatpush.bf16.msra.mxu0 0
    %387 = vmatpush.bf16.msra.mxu0 0
    %388 = vmatpush.bf16.msra.mxu0 0
    %389 = vmatpush.bf16.msra.mxu0 0
    %390 = vmatpush.bf16.msra.mxu0 %v250
    %391 = vmatpush.bf16.msra.mxu0 %v208
    %392 = vmatmul.bf16.gmra.mxu0 %v219
    %v393 = vpop.f32.mrf.mxu0
    %v394 = vadd.f32 0.0, %v393
    %v395 = vpop.f32.mrf.mxu0
    %v396 = vadd.f32 0.0, %v395
    %397 = vmatmul.bf16.gmra.mxu0 %v222
    %v398 = vpop.f32.mrf.mxu0
    %v399 = vadd.f32 0.0, %v398
    %v400 = vpop.f32.mrf.mxu0
    %v401 = vadd.f32 0.0, %v400
    %402 = vmatmul.bf16.gmra.mxu0 %v225
    %v403 = vpop.f32.mrf.mxu0
    %v404 = vadd.f32 0.0, %v403
    %v405 = vpop.f32.mrf.mxu0
    %v406 = vadd.f32 0.0, %v405
    %407 = vmatmul.bf16.gmra.mxu0 %v228
    %v408 = vpop.f32.mrf.mxu0
    %v409 = vadd.f32 0.0, %v408
    %v410 = vpop.f32.mrf.mxu0
    %v411 = vadd.f32 0.0, %v410
    %412 = vmatmul.bf16.gmra.mxu0 %v231
    %v413 = vpop.f32.mrf.mxu0
    %v414 = vadd.f32 0.0, %v413
    %v415 = vpop.f32.mrf.mxu0
    %v416 = vadd.f32 0.0, %v415
    %417 = vmatmul.bf16.gmra.mxu0 %v234
    %v418 = vpop.f32.mrf.mxu0
    %v419 = vadd.f32 0.0, %v418
    %v420 = vpop.f32.mrf.mxu0
    %v421 = vadd.f32 0.0, %v420
    %422 = vmatmul.bf16.gmra.mxu0 %v237
    %v423 = vpop.f32.mrf.mxu0
    %v424 = vadd.f32 0.0, %v423
    %v425 = vpop.f32.mrf.mxu0
    %v426 = vadd.f32 0.0, %v425
    %427 = vdwg.mxu0
    %v430 = vunpack.c.l.b16 %v101
    %v431 = vunpack.c.l.b16 %v102
    %v432 = vpack.c.b16 %v431, %v430
    %v461 = vunpack.c.l.b16 %v103
    %v462 = vunpack.c.h.b16 %v103
    %v463 = vunpack.c.l.b16 %v104
    %v464 = vunpack.c.h.b16 %v104
    %v465 = vunpack.c.l.b16 %v105
    %v466 = vunpack.c.h.b16 %v105
    %v467 = vunpack.c.l.b16 %v106
    %v468 = vunpack.c.h.b16 %v106
    %v469 = vunpack.c.l.b16 %v107
    %v470 = vunpack.c.h.b16 %v107
    %v471 = vunpack.c.l.b16 %v108
    %v472 = vunpack.c.h.b16 %v108
    %v473 = vunpack.c.l.b16 %v109
    %v474 = vunpack.c.h.b16 %v109
    %v475 = vunpack.c.l.b16 %v110
    %v476 = vunpack.c.h.b16 %v110
    %v477 = vunpack.c.l.b16 %v111
    %v478 = vunpack.c.h.b16 %v111
    %v479 = vunpack.c.l.b16 %v112
    %v480 = vunpack.c.h.b16 %v112
    %v481 = vunpack.c.l.b16 %v113
    %v482 = vunpack.c.h.b16 %v113
    %v483 = vunpack.c.l.b16 %v114
    %v484 = vunpack.c.h.b16 %v114
    %v485 = vunpack.c.l.b16 %v115
    %v486 = vunpack.c.h.b16 %v115
    %v487 = vunpack.c.l.b16 %v116
    %v488 = vunpack.c.h.b16 %v116
    %v489 = vunpack.c.l.b16 %v117
    %v490 = vunpack.c.h.b16 %v117
    %v491 = vunpack.c.l.b16 %v118
    %v492 = vunpack.c.h.b16 %v118
    %v493 = vunpack.c.l.b16 %v119
    %v494 = vunpack.c.h.b16 %v119
    %v495 = vunpack.c.l.b16 %v120
    %v496 = vunpack.c.h.b16 %v120
    %v497 = vunpack.c.l.b16 %v121
    %v498 = vunpack.c.h.b16 %v121
    %v499 = vunpack.c.l.b16 %v122
    %v500 = vunpack.c.h.b16 %v122
    %v501 = vunpack.c.l.b16 %v123
    %v502 = vunpack.c.h.b16 %v123
    %v503 = vunpack.c.l.b16 %v124
    %v504 = vunpack.c.h.b16 %v124
    %v505 = vunpack.c.l.b16 %v125
    %v506 = vunpack.c.h.b16 %v125
    %v507 = vunpack.c.l.b16 %v126
    %v508 = vunpack.c.h.b16 %v126
    %v509 = vunpack.c.l.b16 %v127
    %v510 = vunpack.c.h.b16 %v127
    %v511 = vunpack.c.l.b16 %v128
    %v512 = vunpack.c.h.b16 %v128
    %v513 = vunpack.c.l.b16 %v129
    %v514 = vunpack.c.h.b16 %v129
    %v515 = vunpack.c.l.b16 %v130
    %v516 = vunpack.c.h.b16 %v130
    %v517 = vpack.c.b16 %v465, %v461
    %v518 = vpack.c.b16 %v466, %v462
    %v519 = vpack.c.b16 %v467, %v463
    %v520 = vpack.c.b16 %v468, %v464
    %v521 = vpack.c.b16 %v473, %v469
    %v522 = vpack.c.b16 %v474, %v470
    %v523 = vpack.c.b16 %v475, %v471
    %v524 = vpack.c.b16 %v476, %v472
    %v525 = vpack.c.b16 %v481, %v477
    %v526 = vpack.c.b16 %v482, %v478
    %v527 = vpack.c.b16 %v483, %v479
    %v528 = vpack.c.b16 %v484, %v480
    %v529 = vpack.c.b16 %v489, %v485
    %v530 = vpack.c.b16 %v490, %v486
    %v531 = vpack.c.b16 %v491, %v487
    %v532 = vpack.c.b16 %v492, %v488
    %v533 = vpack.c.b16 %v497, %v493
    %v534 = vpack.c.b16 %v498, %v494
    %v535 = vpack.c.b16 %v499, %v495
    %v536 = vpack.c.b16 %v500, %v496
    %v537 = vpack.c.b16 %v505, %v501
    %v538 = vpack.c.b16 %v506, %v502
    %v539 = vpack.c.b16 %v507, %v503
    %v540 = vpack.c.b16 %v508, %v504
    %v541 = vpack.c.b16 %v513, %v509
    %v542 = vpack.c.b16 %v514, %v510
    %v543 = vpack.c.b16 %v515, %v511
    %v544 = vpack.c.b16 %v516, %v512
    %vm573 = vcmask 916480
    %v575 = vsel %vm573, %v155, 0
    %v578 = vsel %vm573, %v156, 0
    %v581 = vsel %vm573, %v157, 0
    %v584 = vsel %vm573, %v158, 0
    %v587 = vsel %vm573, %v159, 0
    %v590 = vsel %vm573, %v160, 0
    %v593 = vsel %vm573, %v432, 0
    %595 = vmatpush.bf16.msra.mxu0 0
    %596 = vmatpush.bf16.msra.mxu0 %v541
    %597 = vmatpush.bf16.msra.mxu0 %v537
    %598 = vmatpush.bf16.msra.mxu0 %v533
    %599 = vmatpush.bf16.msra.mxu0 %v529
    %600 = vmatpush.bf16.msra.mxu0 %v525
    %601 = vmatpush.bf16.msra.mxu0 %v521
    %602 = vmatpush.bf16.msra.mxu0 %v517
    %603 = vmatmul.bf16.gmra.mxu0 %v575
    %v604 = vpop.f32.mrf.mxu0
    %v605 = vadd.f32 %v262, %v604
    %v606 = vpop.f32.mrf.mxu0
    %v607 = vadd.f32 %v264, %v606
    %608 = vmatmul.bf16.gmra.mxu0 %v578
    %v609 = vpop.f32.mrf.mxu0
    %v610 = vadd.f32 %v267, %v609
    %v611 = vpop.f32.mrf.mxu0
    %v612 = vadd.f32 %v269, %v611
    %613 = vmatmul.bf16.gmra.mxu0 %v581
    %v614 = vpop.f32.mrf.mxu0
    %v615 = vadd.f32 %v272, %v614
    %v616 = vpop.f32.mrf.mxu0
    %v617 = vadd.f32 %v274, %v616
    %618 = vmatmul.bf16.gmra.mxu0 %v584
    %v619 = vpop.f32.mrf.mxu0
    %v620 = vadd.f32 %v277, %v619
    %v621 = vpop.f32.mrf.mxu0
    %v622 = vadd.f32 %v279, %v621
    %623 = vmatmul.bf16.gmra.mxu0 %v587
    %v624 = vpop.f32.mrf.mxu0
    %v625 = vadd.f32 %v282, %v624
    %v626 = vpop.f32.mrf.mxu0
    %v627 = vadd.f32 %v284, %v626
    %628 = vmatmul.bf16.gmra.mxu0 %v590
    %v629 = vpop.f32.mrf.mxu0
    %v630 = vadd.f32 %v287, %v629
    %v631 = vpop.f32.mrf.mxu0
    %v632 = vadd.f32 %v289, %v631
    %633 = vmatmul.bf16.gmra.mxu0 %v593
    %v634 = vpop.f32.mrf.mxu0
    %v635 = vadd.f32 %v292, %v634
    %v636 = vpop.f32.mrf.mxu0
    %v637 = vadd.f32 %v294, %v636
    %638 = vdwg.mxu0
    %639 = vmatpush.bf16.msra.mxu0 0
    %640 = vmatpush.bf16.msra.mxu0 %v542
    %641 = vmatpush.bf16.msra.mxu0 %v538
    %642 = vmatpush.bf16.msra.mxu0 %v534
    %643 = vmatpush.bf16.msra.mxu0 %v530
    %644 = vmatpush.bf16.msra.mxu0 %v526
    %645 = vmatpush.bf16.msra.mxu0 %v522
    %646 = vmatpush.bf16.msra.mxu0 %v518
    %647 = vmatmul.bf16.gmra.mxu0 %v575
    %v648 = vpop.f32.mrf.mxu0
    %v649 = vadd.f32 %v306, %v648
    %v650 = vpop.f32.mrf.mxu0
    %v651 = vadd.f32 %v308, %v650
    %652 = vmatmul.bf16.gmra.mxu0 %v578
    %v653 = vpop.f32.mrf.mxu0
    %v654 = vadd.f32 %v311, %v653
    %v655 = vpop.f32.mrf.mxu0
    %v656 = vadd.f32 %v313, %v655
    %657 = vmatmul.bf16.gmra.mxu0 %v581
    %v658 = vpop.f32.mrf.mxu0
    %v659 = vadd.f32 %v316, %v658
    %v660 = vpop.f32.mrf.mxu0
    %v661 = vadd.f32 %v318, %v660
    %662 = vmatmul.bf16.gmra.mxu0 %v584
    %v663 = vpop.f32.mrf.mxu0
    %v664 = vadd.f32 %v321, %v663
    %v665 = vpop.f32.mrf.mxu0
    %v666 = vadd.f32 %v323, %v665
    %667 = vmatmul.bf16.gmra.mxu0 %v587
    %v668 = vpop.f32.mrf.mxu0
    %v669 = vadd.f32 %v326, %v668
    %v670 = vpop.f32.mrf.mxu0
    %v671 = vadd.f32 %v328, %v670
    %672 = vmatmul.bf16.gmra.mxu0 %v590
    %v673 = vpop.f32.mrf.mxu0
    %v674 = vadd.f32 %v331, %v673
    %v675 = vpop.f32.mrf.mxu0
    %v676 = vadd.f32 %v333, %v675
    %677 = vmatmul.bf16.gmra.mxu0 %v593
    %v678 = vpop.f32.mrf.mxu0
    %v679 = vadd.f32 %v336, %v678
    %v680 = vpop.f32.mrf.mxu0
    %v681 = vadd.f32 %v338, %v680
    %682 = vdwg.mxu0
    %683 = vmatpush.bf16.msra.mxu0 0
    %684 = vmatpush.bf16.msra.mxu0 %v543
    %685 = vmatpush.bf16.msra.mxu0 %v539
    %686 = vmatpush.bf16.msra.mxu0 %v535
    %687 = vmatpush.bf16.msra.mxu0 %v531
    %688 = vmatpush.bf16.msra.mxu0 %v527
    %689 = vmatpush.bf16.msra.mxu0 %v523
    %690 = vmatpush.bf16.msra.mxu0 %v519
    %691 = vmatmul.bf16.gmra.mxu0 %v575
    %v692 = vpop.f32.mrf.mxu0
    %v693 = vadd.f32 %v350, %v692
    %v694 = vpop.f32.mrf.mxu0
    %v695 = vadd.f32 %v352, %v694
    %696 = vmatmul.bf16.gmra.mxu0 %v578
    %v697 = vpop.f32.mrf.mxu0
    %v698 = vadd.f32 %v355, %v697
    %v699 = vpop.f32.mrf.mxu0
    %v700 = vadd.f32 %v357, %v699
    %701 = vmatmul.bf16.gmra.mxu0 %v581
    %v702 = vpop.f32.mrf.mxu0
    %v703 = vadd.f32 %v360, %v702
    %v704 = vpop.f32.mrf.mxu0
    %v705 = vadd.f32 %v362, %v704
    %706 = vmatmul.bf16.gmra.mxu0 %v584
    %v707 = vpop.f32.mrf.mxu0
    %v708 = vadd.f32 %v365, %v707
    %v709 = vpop.f32.mrf.mxu0
    %v710 = vadd.f32 %v367, %v709
    %711 = vmatmul.bf16.gmra.mxu0 %v587
    %v712 = vpop.f32.mrf.mxu0
    %v713 = vadd.f32 %v370, %v712
    %v714 = vpop.f32.mrf.mxu0
    %v715 = vadd.f32 %v372, %v714
    %716 = vmatmul.bf16.gmra.mxu0 %v590
    %v717 = vpop.f32.mrf.mxu0
    %v718 = vadd.f32 %v375, %v717
    %v719 = vpop.f32.mrf.mxu0
    %v720 = vadd.f32 %v377, %v719
    %721 = vmatmul.bf16.gmra.mxu0 %v593
    %v722 = vpop.f32.mrf.mxu0
    %v723 = vadd.f32 %v380, %v722
    %v724 = vpop.f32.mrf.mxu0
    %v725 = vadd.f32 %v382, %v724
    %726 = vdwg.mxu0
    %727 = vmatpush.bf16.msra.mxu0 0
    %728 = vmatpush.bf16.msra.mxu0 %v544
    %729 = vmatpush.bf16.msra.mxu0 %v540
    %730 = vmatpush.bf16.msra.mxu0 %v536
    %731 = vmatpush.bf16.msra.mxu0 %v532
    %732 = vmatpush.bf16.msra.mxu0 %v528
    %733 = vmatpush.bf16.msra.mxu0 %v524
    %734 = vmatpush.bf16.msra.mxu0 %v520
    %735 = vmatmul.bf16.gmra.mxu0 %v575
    %v736 = vpop.f32.mrf.mxu0
    %v737 = vadd.f32 %v394, %v736
    %v738 = vpop.f32.mrf.mxu0
    %v739 = vadd.f32 %v396, %v738
    %740 = vmatmul.bf16.gmra.mxu0 %v578
    %v741 = vpop.f32.mrf.mxu0
    %v742 = vadd.f32 %v399, %v741
    %v743 = vpop.f32.mrf.mxu0
    %v744 = vadd.f32 %v401, %v743
    %745 = vmatmul.bf16.gmra.mxu0 %v581
    %v746 = vpop.f32.mrf.mxu0
    %v747 = vadd.f32 %v404, %v746
    %v748 = vpop.f32.mrf.mxu0
    %v749 = vadd.f32 %v406, %v748
    %750 = vmatmul.bf16.gmra.mxu0 %v584
    %v751 = vpop.f32.mrf.mxu0
    %v752 = vadd.f32 %v409, %v751
    %v753 = vpop.f32.mrf.mxu0
    %v754 = vadd.f32 %v411, %v753
    %755 = vmatmul.bf16.gmra.mxu0 %v587
    %v756 = vpop.f32.mrf.mxu0
    %v757 = vadd.f32 %v414, %v756
    %v758 = vpop.f32.mrf.mxu0
    %v759 = vadd.f32 %v416, %v758
    %760 = vmatmul.bf16.gmra.mxu0 %v590
    %v761 = vpop.f32.mrf.mxu0
    %v762 = vadd.f32 %v419, %v761
    %v763 = vpop.f32.mrf.mxu0
    %v764 = vadd.f32 %v421, %v763
    %765 = vmatmul.bf16.gmra.mxu0 %v593
    %v766 = vpop.f32.mrf.mxu0
    %v767 = vadd.f32 %v424, %v766
    %v768 = vpop.f32.mrf.mxu0
    %v769 = vadd.f32 %v426, %v768
    %770 = vdwg.mxu0
    %v771 = vld [vmem:[%s11] sm:$0xf]
    %v773 = vperm.slane %v771, 0
    %v774 = vperm.slane %v771, 1
    %v775 = vperm.slane %v771, 2
    %v776 = vperm.slane %v771, 3
    %v781 = vadd.f32 %v605, %v773
    %v782 = vadd.f32 %v649, %v774
    %v783 = vadd.f32 %v693, %v775
    %v784 = vadd.f32 %v737, %v776
    %v785 = vadd.f32 %v607, %v773
    %v786 = vadd.f32 %v651, %v774
    %v787 = vadd.f32 %v695, %v775
    %v788 = vadd.f32 %v739, %v776
    %v789 = vadd.f32 %v610, %v773
    %v790 = vadd.f32 %v654, %v774
    %v791 = vadd.f32 %v698, %v775
    %v792 = vadd.f32 %v742, %v776
    %v793 = vadd.f32 %v612, %v773
    %v794 = vadd.f32 %v656, %v774
    %v795 = vadd.f32 %v700, %v775
    %v796 = vadd.f32 %v744, %v776
    %v797 = vadd.f32 %v615, %v773
    %v798 = vadd.f32 %v659, %v774
    %v799 = vadd.f32 %v703, %v775
    %v800 = vadd.f32 %v747, %v776
    %v801 = vadd.f32 %v617, %v773
    %v802 = vadd.f32 %v661, %v774
    %v803 = vadd.f32 %v705, %v775
    %v804 = vadd.f32 %v749, %v776
    %v805 = vadd.f32 %v620, %v773
    %v806 = vadd.f32 %v664, %v774
    %v807 = vadd.f32 %v708, %v775
    %v808 = vadd.f32 %v752, %v776
    %v809 = vadd.f32 %v622, %v773
    %v810 = vadd.f32 %v666, %v774
    %v811 = vadd.f32 %v710, %v775
    %v812 = vadd.f32 %v754, %v776
    %v813 = vadd.f32 %v625, %v773
    %v814 = vadd.f32 %v669, %v774
    %v815 = vadd.f32 %v713, %v775
    %v816 = vadd.f32 %v757, %v776
    %v817 = vadd.f32 %v627, %v773
    %v818 = vadd.f32 %v671, %v774
    %v819 = vadd.f32 %v715, %v775
    %v820 = vadd.f32 %v759, %v776
    %v821 = vadd.f32 %v630, %v773
    %v822 = vadd.f32 %v674, %v774
    %v823 = vadd.f32 %v718, %v775
    %v824 = vadd.f32 %v762, %v776
    %v825 = vadd.f32 %v632, %v773
    %v826 = vadd.f32 %v676, %v774
    %v827 = vadd.f32 %v720, %v775
    %v828 = vadd.f32 %v764, %v776
    %v829 = vadd.f32 %v635, %v773
    %v830 = vadd.f32 %v679, %v774
    %v831 = vadd.f32 %v723, %v775
    %v832 = vadd.f32 %v767, %v776
    %v833 = vadd.f32 %v637, %v773
    %v834 = vadd.f32 %v681, %v774
    %v835 = vadd.f32 %v725, %v775
    %v836 = vadd.f32 %v769, %v776
    %v837 = vmax.f32 %v781, 0.0
    %v838 = vmax.f32 %v782, 0.0
    %v839 = vmax.f32 %v783, 0.0
    %v840 = vmax.f32 %v784, 0.0
    %v841 = vmax.f32 %v785, 0.0
    %v842 = vmax.f32 %v786, 0.0
    %v843 = vmax.f32 %v787, 0.0
    %v844 = vmax.f32 %v788, 0.0
    %v845 = vmax.f32 %v789, 0.0
    %v846 = vmax.f32 %v790, 0.0
    %v847 = vmax.f32 %v791, 0.0
    %v848 = vmax.f32 %v792, 0.0
    %v849 = vmax.f32 %v793, 0.0
    %v850 = vmax.f32 %v794, 0.0
    %v851 = vmax.f32 %v795, 0.0
    %v852 = vmax.f32 %v796, 0.0
    %v853 = vmax.f32 %v797, 0.0
    %v854 = vmax.f32 %v798, 0.0
    %v855 = vmax.f32 %v799, 0.0
    %v856 = vmax.f32 %v800, 0.0
    %v857 = vmax.f32 %v801, 0.0
    %v858 = vmax.f32 %v802, 0.0
    %v859 = vmax.f32 %v803, 0.0
    %v860 = vmax.f32 %v804, 0.0
    %v861 = vmax.f32 %v805, 0.0
    %v862 = vmax.f32 %v806, 0.0
    %v863 = vmax.f32 %v807, 0.0
    %v864 = vmax.f32 %v808, 0.0
    %v865 = vmax.f32 %v809, 0.0
    %v866 = vmax.f32 %v810, 0.0
    %v867 = vmax.f32 %v811, 0.0
    %v868 = vmax.f32 %v812, 0.0
    %v869 = vmax.f32 %v813, 0.0
    %v870 = vmax.f32 %v814, 0.0
    %v871 = vmax.f32 %v815, 0.0
    %v872 = vmax.f32 %v816, 0.0
    %v873 = vmax.f32 %v817, 0.0
    %v874 = vmax.f32 %v818, 0.0
    %v875 = vmax.f32 %v819, 0.0
    %v876 = vmax.f32 %v820, 0.0
    %v877 = vmax.f32 %v821, 0.0
    %v878 = vmax.f32 %v822, 0.0
    %v879 = vmax.f32 %v823, 0.0
    %v880 = vmax.f32 %v824, 0.0
    %v881 = vmax.f32 %v825, 0.0
    %v882 = vmax.f32 %v826, 0.0
    %v883 = vmax.f32 %v827, 0.0
    %v884 = vmax.f32 %v828, 0.0
    %v885 = vmax.f32 %v829, 0.0
    %v886 = vmax.f32 %v830, 0.0
    %v887 = vmax.f32 %v831, 0.0
    %v888 = vmax.f32 %v832, 0.0
    %v889 = vmax.f32 %v833, 0.0
    %v890 = vmax.f32 %v834, 0.0
    %v891 = vmax.f32 %v835, 0.0
    %v892 = vmax.f32 %v836, 0.0
    %v893 = vpack.c.bf16 %v838, %v837
    %v894 = vpack.c.bf16 %v840, %v839
    %v895 = vpack.c.bf16 %v842, %v841
    %v896 = vpack.c.bf16 %v844, %v843
    %v897 = vpack.c.bf16 %v846, %v845
    %v898 = vpack.c.bf16 %v848, %v847
    %v899 = vpack.c.bf16 %v850, %v849
    %v900 = vpack.c.bf16 %v852, %v851
    %v901 = vpack.c.bf16 %v854, %v853
    %v902 = vpack.c.bf16 %v856, %v855
    %v903 = vpack.c.bf16 %v858, %v857
    %v904 = vpack.c.bf16 %v860, %v859
    %v905 = vpack.c.bf16 %v862, %v861
    %v906 = vpack.c.bf16 %v864, %v863
    %v907 = vpack.c.bf16 %v866, %v865
    %v908 = vpack.c.bf16 %v868, %v867
    %v909 = vpack.c.bf16 %v870, %v869
    %v910 = vpack.c.bf16 %v872, %v871
    %v911 = vpack.c.bf16 %v874, %v873
    %v912 = vpack.c.bf16 %v876, %v875
    %v913 = vpack.c.bf16 %v878, %v877
    %v914 = vpack.c.bf16 %v880, %v879
    %v915 = vpack.c.bf16 %v882, %v881
    %v916 = vpack.c.bf16 %v884, %v883
    %v917 = vpack.c.bf16 %v886, %v885
    %v918 = vpack.c.bf16 %v888, %v887
    %v919 = vpack.c.bf16 %v890, %v889
    %v920 = vpack.c.bf16 %v892, %v891
    %v921 = vld [vmem:[%s3] sm:$0xff]
    %v922 = vld [vmem:[%s3 + $0x8] sm:$0xff]
    %v923 = vld [vmem:[%s3 + $0x10] sm:$0xff]
    %v924 = vld [vmem:[%s3 + $0x18] sm:$0xff]
    %v925 = vld [vmem:[%s3 + $0x20] sm:$0xff]
    %v926 = vld [vmem:[%s3 + $0x28] sm:$0xff]
    %v927 = vld [vmem:[%s3 + $0x30] sm:$0xff]
    %v928 = vld [vmem:[%s3 + $0x38] sm:$0xff]
    %v929 = vld [vmem:[%s3 + $0x40] sm:$0xff]
    %v930 = vld [vmem:[%s3 + $0x48] sm:$0xff]
    %v931 = vld [vmem:[%s3 + $0x50] sm:$0xff]
    %v932 = vld [vmem:[%s3 + $0x58] sm:$0xff]
    %v933 = vld [vmem:[%s3 + $0x60] sm:$0xff]
    %v934 = vld [vmem:[%s3 + $0x68] sm:$0xff]
    %v935 = vld [vmem:[%s3 + $0x70] sm:$0xff]
    %v936 = vld [vmem:[%s3 + $0x78] sm:$0xff]
    %v937 = vld [vmem:[%s3 + $0x80] sm:$0xff]
    %v938 = vld [vmem:[%s3 + $0x88] sm:$0xff]
    %v939 = vld [vmem:[%s3 + $0x90] sm:$0xff]
    %v940 = vld [vmem:[%s3 + $0x98] sm:$0xff]
    %v941 = vld [vmem:[%s3 + $0xa0] sm:$0xff]
    %v942 = vld [vmem:[%s3 + $0xa8] sm:$0xff]
    %v943 = vld [vmem:[%s3 + $0xb0] sm:$0xff]
    %v944 = vld [vmem:[%s3 + $0xb8] sm:$0xff]
    %v945 = vld [vmem:[%s3 + $0xc0] sm:$0xff]
    %v946 = vld [vmem:[%s3 + $0xc8] sm:$0xff]
    %v947 = vld [vmem:[%s3 + $0xd0] sm:$0xff]
    %v948 = vld [vmem:[%s3 + $0xd8] sm:$0xff]
    %v949 = vld [vmem:[%s3 + $0xe0] sm:$0xff]
    %v950 = vld [vmem:[%s3 + $0xe8] sm:$0xff]
    %v951 = vld [vmem:[%s3 + $0xf0] sm:$0xff]
    %v952 = vld [vmem:[%s3 + $0xf8] sm:$0xff]
    %v953 = vld [vmem:[%s3 + $0x100] sm:$0xff]
    %v954 = vld [vmem:[%s3 + $0x108] sm:$0xff]
    %v955 = vld [vmem:[%s3 + $0x110] sm:$0xff]
    %v956 = vld [vmem:[%s3 + $0x118] sm:$0xff]
    %v957 = vld [vmem:[%s3 + $0x120] sm:$0xff]
    %v958 = vld [vmem:[%s3 + $0x128] sm:$0xff]
    %v959 = vld [vmem:[%s3 + $0x130] sm:$0xff]
    %v960 = vld [vmem:[%s3 + $0x138] sm:$0xff]
    %v961 = vld [vmem:[%s3 + $0x140] sm:$0xff]
    %v962 = vld [vmem:[%s3 + $0x148] sm:$0xff]
    %v963 = vld [vmem:[%s3 + $0x150] sm:$0xff]
    %v964 = vld [vmem:[%s3 + $0x158] sm:$0xff]
    %v965 = vld [vmem:[%s3 + $0x160] sm:$0xff]
    %v966 = vld [vmem:[%s3 + $0x168] sm:$0xff]
    %v967 = vld [vmem:[%s3 + $0x170] sm:$0xff]
    %v968 = vld [vmem:[%s3 + $0x178] sm:$0xff]
    %v969 = vld [vmem:[%s3 + $0x180] sm:$0xff]
    %v970 = vld [vmem:[%s3 + $0x188] sm:$0xff]
    %v971 = vld [vmem:[%s3 + $0x190] sm:$0xff]
    %v972 = vld [vmem:[%s3 + $0x198] sm:$0xff]
    %v973 = vld [vmem:[%s3 + $0x1a0] sm:$0xff]
    %v974 = vld [vmem:[%s3 + $0x1a8] sm:$0xff]
    %v975 = vld [vmem:[%s3 + $0x1b0] sm:$0xff]
    %v976 = vld [vmem:[%s3 + $0x1b8] sm:$0xff]
    %v1001 = vunpack.c.h.b16 %v893
    %v1002 = vunpack.c.l.b16 %v894
    %v1003 = vunpack.c.h.b16 %v894
    %v1004 = vunpack.c.h.b16 %v895
    %v1005 = vunpack.c.l.b16 %v896
    %v1006 = vunpack.c.h.b16 %v896
    %v1007 = vunpack.c.h.b16 %v897
    %v1008 = vunpack.c.l.b16 %v898
    %v1009 = vunpack.c.h.b16 %v898
    %v1010 = vunpack.c.h.b16 %v899
    %v1011 = vunpack.c.l.b16 %v900
    %v1012 = vunpack.c.h.b16 %v900
    %v1013 = vunpack.c.h.b16 %v901
    %v1014 = vunpack.c.l.b16 %v902
    %v1015 = vunpack.c.h.b16 %v902
    %v1016 = vunpack.c.h.b16 %v903
    %v1017 = vunpack.c.l.b16 %v904
    %v1018 = vunpack.c.h.b16 %v904
    %v1019 = vunpack.c.h.b16 %v905
    %v1020 = vunpack.c.l.b16 %v906
    %v1021 = vunpack.c.h.b16 %v906
    %v1022 = vunpack.c.h.b16 %v907
    %v1023 = vunpack.c.l.b16 %v908
    %v1024 = vunpack.c.h.b16 %v908
    %v1025 = vunpack.c.h.b16 %v909
    %v1026 = vunpack.c.l.b16 %v910
    %v1027 = vunpack.c.h.b16 %v910
    %v1028 = vunpack.c.h.b16 %v911
    %v1029 = vunpack.c.l.b16 %v912
    %v1030 = vunpack.c.h.b16 %v912
    %v1031 = vunpack.c.h.b16 %v913
    %v1032 = vunpack.c.l.b16 %v914
    %v1033 = vunpack.c.h.b16 %v914
    %v1034 = vunpack.c.h.b16 %v915
    %v1035 = vunpack.c.l.b16 %v916
    %v1036 = vunpack.c.h.b16 %v916
    %v1037 = vpack.c.b16 %v1004, %v1001
    %v1038 = vpack.c.b16 %v1005, %v1002
    %v1039 = vpack.c.b16 %v1006, %v1003
    %v1040 = vpack.c.b16 %v1010, %v1007
    %v1041 = vpack.c.b16 %v1011, %v1008
    %v1042 = vpack.c.b16 %v1012, %v1009
    %v1043 = vpack.c.b16 %v1016, %v1013
    %v1044 = vpack.c.b16 %v1017, %v1014
    %v1045 = vpack.c.b16 %v1018, %v1015
    %v1046 = vpack.c.b16 %v1022, %v1019
    %v1047 = vpack.c.b16 %v1023, %v1020
    %v1048 = vpack.c.b16 %v1024, %v1021
    %v1049 = vpack.c.b16 %v1028, %v1025
    %v1050 = vpack.c.b16 %v1029, %v1026
    %v1051 = vpack.c.b16 %v1030, %v1027
    %v1052 = vpack.c.b16 %v1034, %v1031
    %v1053 = vpack.c.b16 %v1035, %v1032
    %v1054 = vpack.c.b16 %v1036, %v1033
    %1055 = vrot.lane.b32.xlu0 %v1037, 32
    %v1056 = vpop.permute.xlu0 %1055
    %1057 = vrot.lane.b32.xlu0 %v1038, 32
    %v1058 = vpop.permute.xlu0 %1057
    %1059 = vrot.lane.b32.xlu0 %v1039, 32
    %v1060 = vpop.permute.xlu0 %1059
    %1061 = vrot.lane.b32.xlu0 %v1040, 32
    %v1062 = vpop.permute.xlu0 %1061
    %1063 = vrot.lane.b32.xlu0 %v1041, 32
    %v1064 = vpop.permute.xlu0 %1063
    %1065 = vrot.lane.b32.xlu0 %v1042, 32
    %v1066 = vpop.permute.xlu0 %1065
    %1067 = vrot.lane.b32.xlu0 %v1043, 32
    %v1068 = vpop.permute.xlu0 %1067
    %1069 = vrot.lane.b32.xlu0 %v1044, 32
    %v1070 = vpop.permute.xlu0 %1069
    %1071 = vrot.lane.b32.xlu0 %v1045, 32
    %v1072 = vpop.permute.xlu0 %1071
    %1073 = vrot.lane.b32.xlu0 %v1046, 32
    %v1074 = vpop.permute.xlu0 %1073
    %1075 = vrot.lane.b32.xlu0 %v1047, 32
    %v1076 = vpop.permute.xlu0 %1075
    %1077 = vrot.lane.b32.xlu0 %v1048, 32
    %v1078 = vpop.permute.xlu0 %1077
    %1079 = vrot.lane.b32.xlu0 %v1049, 32
    %v1080 = vpop.permute.xlu0 %1079
    %1081 = vrot.lane.b32.xlu0 %v1050, 32
    %v1082 = vpop.permute.xlu0 %1081
    %1083 = vrot.lane.b32.xlu0 %v1051, 32
    %v1084 = vpop.permute.xlu0 %1083
    %1085 = vrot.lane.b32.xlu0 %v1052, 32
    %v1086 = vpop.permute.xlu0 %1085
    %1087 = vrot.lane.b32.xlu0 %v1053, 32
    %v1088 = vpop.permute.xlu0 %1087
    %1089 = vrot.lane.b32.xlu0 %v1054, 32
    %v1090 = vpop.permute.xlu0 %1089
    %vm1091 = vcmask 261120
    %v1092 = vsel %vm1091, %v1056, %v1058
    %v1093 = vsel %vm1091, %v1058, %v1060
    %v1094 = vsel %vm1091, %v1062, %v1064
    %v1095 = vsel %vm1091, %v1064, %v1066
    %v1096 = vsel %vm1091, %v1068, %v1070
    %v1097 = vsel %vm1091, %v1070, %v1072
    %v1098 = vsel %vm1091, %v1074, %v1076
    %v1099 = vsel %vm1091, %v1076, %v1078
    %v1100 = vsel %vm1091, %v1080, %v1082
    %v1101 = vsel %vm1091, %v1082, %v1084
    %v1102 = vsel %vm1091, %v1086, %v1088
    %v1103 = vsel %vm1091, %v1088, %v1090
    %v1110 = vld [vmem:[#allocation4] sm:$0xff]
    %v1111 = vld [vmem:[#allocation4 + $0x8] sm:$0xff]
    %v1112 = vld [vmem:[#allocation4 + $0x10] sm:$0xff]
    %v1113 = vld [vmem:[#allocation4 + $0x18] sm:$0xff]
    %v1114 = vld [vmem:[#allocation4 + $0x20] sm:$0xff]
    %v1115 = vld [vmem:[#allocation4 + $0x28] sm:$0xff]
    %v1116 = vld [vmem:[#allocation4 + $0x30] sm:$0xff]
    %v1117 = vld [vmem:[#allocation4 + $0x38] sm:$0xff]
    %v1118 = vld [vmem:[#allocation4 + $0x40] sm:$0xff]
    %v1119 = vld [vmem:[#allocation4 + $0x48] sm:$0xff]
    %v1120 = vld [vmem:[#allocation4 + $0x50] sm:$0xff]
    %v1121 = vld [vmem:[#allocation4 + $0x58] sm:$0xff]
    %v1122 = vld [vmem:[#allocation4 + $0x60] sm:$0xff]
    %v1123 = vld [vmem:[#allocation4 + $0x68] sm:$0xff]
    %v1124 = vld [vmem:[#allocation4 + $0x70] sm:$0xff]
    %v1125 = vld [vmem:[#allocation4 + $0x78] sm:$0xff]
    %v1126 = vld [vmem:[#allocation4 + $0x80] sm:$0xff]
    %v1127 = vld [vmem:[#allocation4 + $0x88] sm:$0xff]
    %v1128 = vld [vmem:[#allocation4 + $0x90] sm:$0xff]
    %v1129 = vld [vmem:[#allocation4 + $0x98] sm:$0xff]
    %v1130 = vld [vmem:[#allocation4 + $0xa0] sm:$0xff]
    %v1131 = vld [vmem:[#allocation4 + $0xa8] sm:$0xff]
    %v1132 = vld [vmem:[#allocation4 + $0xb0] sm:$0xff]
    %v1133 = vld [vmem:[#allocation4 + $0xb8] sm:$0xff]
    %v1134 = vld [vmem:[#allocation4 + $0xc0] sm:$0xff]
    %v1135 = vld [vmem:[#allocation4 + $0xc8] sm:$0xff]
    %v1136 = vld [vmem:[#allocation4 + $0xd0] sm:$0xff]
    %v1137 = vld [vmem:[#allocation4 + $0xd8] sm:$0xff]
    %v1166 = vunpack.c.l.b16 %v1110
    %v1167 = vunpack.c.h.b16 %v1110
    %v1168 = vunpack.c.l.b16 %v1111
    %v1169 = vunpack.c.h.b16 %v1111
    %v1170 = vunpack.c.l.b16 %v1112
    %v1171 = vunpack.c.h.b16 %v1112
    %v1172 = vunpack.c.l.b16 %v1113
    %v1173 = vunpack.c.h.b16 %v1113
    %v1174 = vunpack.c.l.b16 %v1114
    %v1175 = vunpack.c.h.b16 %v1114
    %v1176 = vunpack.c.l.b16 %v1115
    %v1177 = vunpack.c.h.b16 %v1115
    %v1178 = vunpack.c.l.b16 %v1116
    %v1179 = vunpack.c.h.b16 %v1116
    %v1180 = vunpack.c.l.b16 %v1117
    %v1181 = vunpack.c.h.b16 %v1117
    %v1182 = vunpack.c.l.b16 %v1118
    %v1183 = vunpack.c.h.b16 %v1118
    %v1184 = vunpack.c.l.b16 %v1119
    %v1185 = vunpack.c.h.b16 %v1119
    %v1186 = vunpack.c.l.b16 %v1120
    %v1187 = vunpack.c.h.b16 %v1120
    %v1188 = vunpack.c.l.b16 %v1121
    %v1189 = vunpack.c.h.b16 %v1121
    %v1190 = vunpack.c.l.b16 %v1122
    %v1191 = vunpack.c.h.b16 %v1122
    %v1192 = vunpack.c.l.b16 %v1123
    %v1193 = vunpack.c.h.b16 %v1123
    %v1194 = vunpack.c.l.b16 %v1124
    %v1195 = vunpack.c.h.b16 %v1124
    %v1196 = vunpack.c.l.b16 %v1125
    %v1197 = vunpack.c.h.b16 %v1125
    %v1198 = vunpack.c.l.b16 %v1126
    %v1199 = vunpack.c.h.b16 %v1126
    %v1200 = vunpack.c.l.b16 %v1127
    %v1201 = vunpack.c.h.b16 %v1127
    %v1202 = vunpack.c.l.b16 %v1128
    %v1203 = vunpack.c.h.b16 %v1128
    %v1204 = vunpack.c.l.b16 %v1129
    %v1205 = vunpack.c.h.b16 %v1129
    %v1206 = vunpack.c.l.b16 %v1130
    %v1207 = vunpack.c.h.b16 %v1130
    %v1208 = vunpack.c.l.b16 %v1131
    %v1209 = vunpack.c.h.b16 %v1131
    %v1210 = vunpack.c.l.b16 %v1132
    %v1211 = vunpack.c.h.b16 %v1132
    %v1212 = vunpack.c.l.b16 %v1133
    %v1213 = vunpack.c.h.b16 %v1133
    %v1214 = vunpack.c.l.b16 %v1134
    %v1215 = vunpack.c.h.b16 %v1134
    %v1216 = vunpack.c.l.b16 %v1135
    %v1217 = vunpack.c.h.b16 %v1135
    %v1218 = vunpack.c.l.b16 %v1136
    %v1219 = vunpack.c.h.b16 %v1136
    %v1220 = vunpack.c.l.b16 %v1137
    %v1221 = vunpack.c.h.b16 %v1137
    %v1222 = vpack.c.b16 %v1168, %v1166
    %v1223 = vpack.c.b16 %v1169, %v1167
    %v1224 = vpack.c.b16 %v1172, %v1170
    %v1225 = vpack.c.b16 %v1173, %v1171
    %v1226 = vpack.c.b16 %v1176, %v1174
    %v1227 = vpack.c.b16 %v1177, %v1175
    %v1228 = vpack.c.b16 %v1180, %v1178
    %v1229 = vpack.c.b16 %v1181, %v1179
    %v1230 = vpack.c.b16 %v1184, %v1182
    %v1231 = vpack.c.b16 %v1185, %v1183
    %v1232 = vpack.c.b16 %v1188, %v1186
    %v1233 = vpack.c.b16 %v1189, %v1187
    %v1234 = vpack.c.b16 %v1192, %v1190
    %v1235 = vpack.c.b16 %v1193, %v1191
    %v1236 = vpack.c.b16 %v1196, %v1194
    %v1237 = vpack.c.b16 %v1197, %v1195
    %v1238 = vpack.c.b16 %v1200, %v1198
    %v1239 = vpack.c.b16 %v1201, %v1199
    %v1240 = vpack.c.b16 %v1204, %v1202
    %v1241 = vpack.c.b16 %v1205, %v1203
    %v1242 = vpack.c.b16 %v1208, %v1206
    %v1243 = vpack.c.b16 %v1209, %v1207
    %v1244 = vpack.c.b16 %v1212, %v1210
    %v1245 = vpack.c.b16 %v1213, %v1211
    %v1246 = vpack.c.b16 %v1216, %v1214
    %v1247 = vpack.c.b16 %v1217, %v1215
    %v1248 = vpack.c.b16 %v1220, %v1218
    %v1249 = vpack.c.b16 %v1221, %v1219
    %vm1278 = vcmask 785408
    %v1279 = vsel %vm1278, 0, 0
    %v1282 = vsel %vm1278, %v1093, 0
    %v1285 = vsel %vm1278, %v1095, 0
    %v1288 = vsel %vm1278, %v1097, 0
    %v1291 = vsel %vm1278, %v1099, 0
    %v1294 = vsel %vm1278, %v1101, 0
    %v1297 = vsel %vm1278, %v1103, 0
    %1299 = vmatpush.bf16.msra.mxu0 %v1236
    %1300 = vmatpush.bf16.msra.mxu0 %v1234
    %1301 = vmatpush.bf16.msra.mxu0 %v1232
    %1302 = vmatpush.bf16.msra.mxu0 %v1230
    %1303 = vmatpush.bf16.msra.mxu0 %v1228
    %1304 = vmatpush.bf16.msra.mxu0 %v1226
    %1305 = vmatpush.bf16.msra.mxu0 %v1224
    %1306 = vmatpush.bf16.msra.mxu0 %v1222
    %1307 = vmatmul.bf16.gmra.mxu0 0
    %v1308 = vpop.f32.mrf.mxu0
    %v1309 = vadd.f32 0.0, %v1308
    %v1310 = vpop.f32.mrf.mxu0
    %v1311 = vadd.f32 0.0, %v1310
    %1312 = vmatmul.bf16.gmra.mxu0 %v1092
    %v1313 = vpop.f32.mrf.mxu0
    %v1314 = vadd.f32 0.0, %v1313
    %v1315 = vpop.f32.mrf.mxu0
    %v1316 = vadd.f32 0.0, %v1315
    %1317 = vmatmul.bf16.gmra.mxu0 %v1094
    %v1318 = vpop.f32.mrf.mxu0
    %v1319 = vadd.f32 0.0, %v1318
    %v1320 = vpop.f32.mrf.mxu0
    %v1321 = vadd.f32 0.0, %v1320
    %1322 = vmatmul.bf16.gmra.mxu0 %v1096
    %v1323 = vpop.f32.mrf.mxu0
    %v1324 = vadd.f32 0.0, %v1323
    %v1325 = vpop.f32.mrf.mxu0
    %v1326 = vadd.f32 0.0, %v1325
    %1327 = vmatmul.bf16.gmra.mxu0 %v1098
    %v1328 = vpop.f32.mrf.mxu0
    %v1329 = vadd.f32 0.0, %v1328
    %v1330 = vpop.f32.mrf.mxu0
    %v1331 = vadd.f32 0.0, %v1330
    %1332 = vmatmul.bf16.gmra.mxu0 %v1100
    %v1333 = vpop.f32.mrf.mxu0
    %v1334 = vadd.f32 0.0, %v1333
    %v1335 = vpop.f32.mrf.mxu0
    %v1336 = vadd.f32 0.0, %v1335
    %1337 = vmatmul.bf16.gmra.mxu0 %v1102
    %v1338 = vpop.f32.mrf.mxu0
    %v1339 = vadd.f32 0.0, %v1338
    %v1340 = vpop.f32.mrf.mxu0
    %v1341 = vadd.f32 0.0, %v1340
    %1342 = vdwg.mxu0
    %1343 = vmatpush.bf16.msra.mxu0 0
    %1344 = vmatpush.bf16.msra.mxu0 0
    %1345 = vmatpush.bf16.msra.mxu0 %v1248
    %1346 = vmatpush.bf16.msra.mxu0 %v1246
    %1347 = vmatpush.bf16.msra.mxu0 %v1244
    %1348 = vmatpush.bf16.msra.mxu0 %v1242
    %1349 = vmatpush.bf16.msra.mxu0 %v1240
    %1350 = vmatpush.bf16.msra.mxu0 %v1238
    %1351 = vmatmul.bf16.gmra.mxu0 %v1279
    %v1352 = vpop.f32.mrf.mxu0
    %v1353 = vadd.f32 %v1309, %v1352
    %v1354 = vpop.f32.mrf.mxu0
    %v1355 = vadd.f32 %v1311, %v1354
    %1356 = vmatmul.bf16.gmra.mxu0 %v1282
    %v1357 = vpop.f32.mrf.mxu0
    %v1358 = vadd.f32 %v1314, %v1357
    %v1359 = vpop.f32.mrf.mxu0
    %v1360 = vadd.f32 %v1316, %v1359
    %1361 = vmatmul.bf16.gmra.mxu0 %v1285
    %v1362 = vpop.f32.mrf.mxu0
    %v1363 = vadd.f32 %v1319, %v1362
    %v1364 = vpop.f32.mrf.mxu0
    %v1365 = vadd.f32 %v1321, %v1364
    %1366 = vmatmul.bf16.gmra.mxu0 %v1288
    %v1367 = vpop.f32.mrf.mxu0
    %v1368 = vadd.f32 %v1324, %v1367
    %v1369 = vpop.f32.mrf.mxu0
    %v1370 = vadd.f32 %v1326, %v1369
    %1371 = vmatmul.bf16.gmra.mxu0 %v1291
    %v1372 = vpop.f32.mrf.mxu0
    %v1373 = vadd.f32 %v1329, %v1372
    %v1374 = vpop.f32.mrf.mxu0
    %v1375 = vadd.f32 %v1331, %v1374
    %1376 = vmatmul.bf16.gmra.mxu0 %v1294
    %v1377 = vpop.f32.mrf.mxu0
    %v1378 = vadd.f32 %v1334, %v1377
    %v1379 = vpop.f32.mrf.mxu0
    %v1380 = vadd.f32 %v1336, %v1379
    %1381 = vmatmul.bf16.gmra.mxu0 %v1297
    %v1382 = vpop.f32.mrf.mxu0
    %v1383 = vadd.f32 %v1339, %v1382
    %v1384 = vpop.f32.mrf.mxu0
    %v1385 = vadd.f32 %v1341, %v1384
    %1386 = vdwg.mxu0
    %1387 = vmatpush.bf16.msra.mxu0 %v1237
    %1388 = vmatpush.bf16.msra.mxu0 %v1235
    %1389 = vmatpush.bf16.msra.mxu0 %v1233
    %1390 = vmatpush.bf16.msra.mxu0 %v1231
    %1391 = vmatpush.bf16.msra.mxu0 %v1229
    %1392 = vmatpush.bf16.msra.mxu0 %v1227
    %1393 = vmatpush.bf16.msra.mxu0 %v1225
    %1394 = vmatpush.bf16.msra.mxu0 %v1223
    %1395 = vmatmul.bf16.gmra.mxu0 0
    %v1396 = vpop.f32.mrf.mxu0
    %v1397 = vadd.f32 0.0, %v1396
    %v1398 = vpop.f32.mrf.mxu0
    %v1399 = vadd.f32 0.0, %v1398
    %1400 = vmatmul.bf16.gmra.mxu0 %v1092
    %v1401 = vpop.f32.mrf.mxu0
    %v1402 = vadd.f32 0.0, %v1401
    %v1403 = vpop.f32.mrf.mxu0
    %v1404 = vadd.f32 0.0, %v1403
    %1405 = vmatmul.bf16.gmra.mxu0 %v1094
    %v1406 = vpop.f32.mrf.mxu0
    %v1407 = vadd.f32 0.0, %v1406
    %v1408 = vpop.f32.mrf.mxu0
    %v1409 = vadd.f32 0.0, %v1408
    %1410 = vmatmul.bf16.gmra.mxu0 %v1096
    %v1411 = vpop.f32.mrf.mxu0
    %v1412 = vadd.f32 0.0, %v1411
    %v1413 = vpop.f32.mrf.mxu0
    %v1414 = vadd.f32 0.0, %v1413
    %1415 = vmatmul.bf16.gmra.mxu0 %v1098
    %v1416 = vpop.f32.mrf.mxu0
    %v1417 = vadd.f32 0.0, %v1416
    %v1418 = vpop.f32.mrf.mxu0
    %v1419 = vadd.f32 0.0, %v1418
    %1420 = vmatmul.bf16.gmra.mxu0 %v1100
    %v1421 = vpop.f32.mrf.mxu0
    %v1422 = vadd.f32 0.0, %v1421
    %v1423 = vpop.f32.mrf.mxu0
    %v1424 = vadd.f32 0.0, %v1423
    %1425 = vmatmul.bf16.gmra.mxu0 %v1102
    %v1426 = vpop.f32.mrf.mxu0
    %v1427 = vadd.f32 0.0, %v1426
    %v1428 = vpop.f32.mrf.mxu0
    %v1429 = vadd.f32 0.0, %v1428
    %1430 = vdwg.mxu0
    %1431 = vmatpush.bf16.msra.mxu0 0
    %1432 = vmatpush.bf16.msra.mxu0 0
    %1433 = vmatpush.bf16.msra.mxu0 %v1249
    %1434 = vmatpush.bf16.msra.mxu0 %v1247
    %1435 = vmatpush.bf16.msra.mxu0 %v1245
    %1436 = vmatpush.bf16.msra.mxu0 %v1243
    %1437 = vmatpush.bf16.msra.mxu0 %v1241
    %1438 = vmatpush.bf16.msra.mxu0 %v1239
    %1439 = vmatmul.bf16.gmra.mxu0 %v1279
    %v1440 = vpop.f32.mrf.mxu0
    %v1441 = vadd.f32 %v1397, %v1440
    %v1442 = vpop.f32.mrf.mxu0
    %v1443 = vadd.f32 %v1399, %v1442
    %1444 = vmatmul.bf16.gmra.mxu0 %v1282
    %v1445 = vpop.f32.mrf.mxu0
    %v1446 = vadd.f32 %v1402, %v1445
    %v1447 = vpop.f32.mrf.mxu0
    %v1448 = vadd.f32 %v1404, %v1447
    %1449 = vmatmul.bf16.gmra.mxu0 %v1285
    %v1450 = vpop.f32.mrf.mxu0
    %v1451 = vadd.f32 %v1407, %v1450
    %v1452 = vpop.f32.mrf.mxu0
    %v1453 = vadd.f32 %v1409, %v1452
    %1454 = vmatmul.bf16.gmra.mxu0 %v1288
    %v1455 = vpop.f32.mrf.mxu0
    %v1456 = vadd.f32 %v1412, %v1455
    %v1457 = vpop.f32.mrf.mxu0
    %v1458 = vadd.f32 %v1414, %v1457
    %1459 = vmatmul.bf16.gmra.mxu0 %v1291
    %v1460 = vpop.f32.mrf.mxu0
    %v1461 = vadd.f32 %v1417, %v1460
    %v1462 = vpop.f32.mrf.mxu0
    %v1463 = vadd.f32 %v1419, %v1462
    %1464 = vmatmul.bf16.gmra.mxu0 %v1294
    %v1465 = vpop.f32.mrf.mxu0
    %v1466 = vadd.f32 %v1422, %v1465
    %v1467 = vpop.f32.mrf.mxu0
    %v1468 = vadd.f32 %v1424, %v1467
    %1469 = vmatmul.bf16.gmra.mxu0 %v1297
    %v1470 = vpop.f32.mrf.mxu0
    %v1471 = vadd.f32 %v1427, %v1470
    %v1472 = vpop.f32.mrf.mxu0
    %v1473 = vadd.f32 %v1429, %v1472
    %1474 = vdwg.mxu0
    %v1479 = vunpack.c.l.b16 %v893
    %v1480 = vunpack.c.l.b16 %v895
    %v1481 = vunpack.c.l.b16 %v897
    %v1482 = vunpack.c.l.b16 %v899
    %v1483 = vunpack.c.l.b16 %v901
    %v1484 = vunpack.c.l.b16 %v903
    %v1485 = vunpack.c.l.b16 %v905
    %v1486 = vunpack.c.l.b16 %v907
    %v1487 = vunpack.c.l.b16 %v909
    %v1488 = vunpack.c.l.b16 %v911
    %v1489 = vunpack.c.l.b16 %v913
    %v1490 = vunpack.c.l.b16 %v915
    %v1491 = vunpack.c.l.b16 %v917
    %v1492 = vunpack.c.h.b16 %v917
    %v1493 = vunpack.c.l.b16 %v918
    %v1494 = vunpack.c.h.b16 %v918
    %v1495 = vunpack.c.l.b16 %v919
    %v1496 = vunpack.c.h.b16 %v919
    %v1497 = vunpack.c.l.b16 %v920
    %v1498 = vunpack.c.h.b16 %v920
    %v1499 = vpack.c.b16 %v1480, %v1479
    %v1500 = vpack.c.b16 %v1482, %v1481
    %v1501 = vpack.c.b16 %v1484, %v1483
    %v1502 = vpack.c.b16 %v1486, %v1485
    %v1503 = vpack.c.b16 %v1488, %v1487
    %v1504 = vpack.c.b16 %v1490, %v1489
    %v1505 = vpack.c.b16 %v1495, %v1491
    %v1506 = vpack.c.b16 %v1496, %v1492
    %v1507 = vpack.c.b16 %v1497, %v1493
    %v1508 = vpack.c.b16 %v1498, %v1494
    %v1586 = vunpack.c.l.b16 %v921
    %v1587 = vunpack.c.h.b16 %v921
    %v1588 = vunpack.c.l.b16 %v922
    %v1589 = vunpack.c.h.b16 %v922
    %v1590 = vunpack.c.l.b16 %v923
    %v1591 = vunpack.c.h.b16 %v923
    %v1592 = vunpack.c.l.b16 %v924
    %v1593 = vunpack.c.h.b16 %v924
    %v1594 = vunpack.c.l.b16 %v925
    %v1595 = vunpack.c.h.b16 %v925
    %v1596 = vunpack.c.l.b16 %v926
    %v1597 = vunpack.c.h.b16 %v926
    %v1598 = vunpack.c.l.b16 %v927
    %v1599 = vunpack.c.h.b16 %v927
    %v1600 = vunpack.c.l.b16 %v928
    %v1601 = vunpack.c.h.b16 %v928
    %v1602 = vunpack.c.l.b16 %v929
    %v1603 = vunpack.c.h.b16 %v929
    %v1604 = vunpack.c.l.b16 %v930
    %v1605 = vunpack.c.h.b16 %v930
    %v1606 = vunpack.c.l.b16 %v931
    %v1607 = vunpack.c.h.b16 %v931
    %v1608 = vunpack.c.l.b16 %v932
    %v1609 = vunpack.c.h.b16 %v932
    %v1610 = vunpack.c.l.b16 %v933
    %v1611 = vunpack.c.h.b16 %v933
    %v1612 = vunpack.c.l.b16 %v934
    %v1613 = vunpack.c.h.b16 %v934
    %v1614 = vunpack.c.l.b16 %v935
    %v1615 = vunpack.c.h.b16 %v935
    %v1616 = vunpack.c.l.b16 %v936
    %v1617 = vunpack.c.h.b16 %v936
    %v1618 = vunpack.c.l.b16 %v937
    %v1619 = vunpack.c.h.b16 %v937
    %v1620 = vunpack.c.l.b16 %v938
    %v1621 = vunpack.c.h.b16 %v938
    %v1622 = vunpack.c.l.b16 %v939
    %v1623 = vunpack.c.h.b16 %v939
    %v1624 = vunpack.c.l.b16 %v940
    %v1625 = vunpack.c.h.b16 %v940
    %v1626 = vunpack.c.l.b16 %v941
    %v1627 = vunpack.c.h.b16 %v941
    %v1628 = vunpack.c.l.b16 %v942
    %v1629 = vunpack.c.h.b16 %v942
    %v1630 = vunpack.c.l.b16 %v943
    %v1631 = vunpack.c.h.b16 %v943
    %v1632 = vunpack.c.l.b16 %v944
    %v1633 = vunpack.c.h.b16 %v944
    %v1634 = vunpack.c.l.b16 %v945
    %v1635 = vunpack.c.h.b16 %v945
    %v1636 = vunpack.c.l.b16 %v946
    %v1637 = vunpack.c.h.b16 %v946
    %v1638 = vunpack.c.l.b16 %v947
    %v1639 = vunpack.c.h.b16 %v947
    %v1640 = vunpack.c.l.b16 %v948
    %v1641 = vunpack.c.h.b16 %v948
    %v1642 = vunpack.c.l.b16 %v949
    %v1643 = vunpack.c.h.b16 %v949
    %v1644 = vunpack.c.l.b16 %v950
    %v1645 = vunpack.c.h.b16 %v950
    %v1646 = vunpack.c.l.b16 %v951
    %v1647 = vunpack.c.h.b16 %v951
    %v1648 = vunpack.c.l.b16 %v952
    %v1649 = vunpack.c.h.b16 %v952
    %v1650 = vunpack.c.l.b16 %v953
    %v1651 = vunpack.c.h.b16 %v953
    %v1652 = vunpack.c.l.b16 %v954
    %v1653 = vunpack.c.h.b16 %v954
    %v1654 = vunpack.c.l.b16 %v955
    %v1655 = vunpack.c.h.b16 %v955
    %v1656 = vunpack.c.l.b16 %v956
    %v1657 = vunpack.c.h.b16 %v956
    %v1658 = vunpack.c.l.b16 %v957
    %v1659 = vunpack.c.h.b16 %v957
    %v1660 = vunpack.c.l.b16 %v958
    %v1661 = vunpack.c.h.b16 %v958
    %v1662 = vunpack.c.l.b16 %v959
    %v1663 = vunpack.c.h.b16 %v959
    %v1664 = vunpack.c.l.b16 %v960
    %v1665 = vunpack.c.h.b16 %v960
    %v1666 = vunpack.c.l.b16 %v961
    %v1667 = vunpack.c.h.b16 %v961
    %v1668 = vunpack.c.l.b16 %v962
    %v1669 = vunpack.c.h.b16 %v962
    %v1670 = vunpack.c.l.b16 %v963
    %v1671 = vunpack.c.h.b16 %v963
    %v1672 = vunpack.c.l.b16 %v964
    %v1673 = vunpack.c.h.b16 %v964
    %v1674 = vunpack.c.l.b16 %v965
    %v1675 = vunpack.c.h.b16 %v965
    %v1676 = vunpack.c.l.b16 %v966
    %v1677 = vunpack.c.h.b16 %v966
    %v1678 = vunpack.c.l.b16 %v967
    %v1679 = vunpack.c.h.b16 %v967
    %v1680 = vunpack.c.l.b16 %v968
    %v1681 = vunpack.c.h.b16 %v968
    %v1682 = vunpack.c.l.b16 %v969
    %v1683 = vunpack.c.h.b16 %v969
    %v1684 = vunpack.c.l.b16 %v970
    %v1685 = vunpack.c.h.b16 %v970
    %v1686 = vunpack.c.l.b16 %v971
    %v1687 = vunpack.c.h.b16 %v971
    %v1688 = vunpack.c.l.b16 %v972
    %v1689 = vunpack.c.h.b16 %v972
    %v1690 = vunpack.c.l.b16 %v973
    %v1691 = vunpack.c.h.b16 %v973
    %v1692 = vunpack.c.l.b16 %v974
    %v1693 = vunpack.c.h.b16 %v974
    %v1694 = vunpack.c.l.b16 %v975
    %v1695 = vunpack.c.h.b16 %v975
    %v1696 = vunpack.c.l.b16 %v976
    %v1697 = vunpack.c.h.b16 %v976
    %v1698 = vpack.c.b16 %v1588, %v1586
    %v1699 = vpack.c.b16 %v1589, %v1587
    %v1700 = vpack.c.b16 %v1592, %v1590
    %v1701 = vpack.c.b16 %v1593, %v1591
    %v1702 = vpack.c.b16 %v1596, %v1594
    %v1703 = vpack.c.b16 %v1597, %v1595
    %v1704 = vpack.c.b16 %v1600, %v1598
    %v1705 = vpack.c.b16 %v1601, %v1599
    %v1706 = vpack.c.b16 %v1604, %v1602
    %v1707 = vpack.c.b16 %v1605, %v1603
    %v1708 = vpack.c.b16 %v1608, %v1606
    %v1709 = vpack.c.b16 %v1609, %v1607
    %v1710 = vpack.c.b16 %v1612, %v1610
    %v1711 = vpack.c.b16 %v1613, %v1611
    %v1712 = vpack.c.b16 %v1616, %v1614
    %v1713 = vpack.c.b16 %v1617, %v1615
    %v1714 = vpack.c.b16 %v1620, %v1618
    %v1715 = vpack.c.b16 %v1621, %v1619
    %v1716 = vpack.c.b16 %v1624, %v1622
    %v1717 = vpack.c.b16 %v1625, %v1623
    %v1718 = vpack.c.b16 %v1628, %v1626
    %v1719 = vpack.c.b16 %v1629, %v1627
    %v1720 = vpack.c.b16 %v1632, %v1630
    %v1721 = vpack.c.b16 %v1633, %v1631
    %v1722 = vpack.c.b16 %v1636, %v1634
    %v1723 = vpack.c.b16 %v1637, %v1635
    %v1724 = vpack.c.b16 %v1640, %v1638
    %v1725 = vpack.c.b16 %v1641, %v1639
    %v1726 = vpack.c.b16 %v1644, %v1642
    %v1727 = vpack.c.b16 %v1645, %v1643
    %v1728 = vpack.c.b16 %v1648, %v1646
    %v1729 = vpack.c.b16 %v1649, %v1647
    %v1730 = vpack.c.b16 %v1652, %v1650
    %v1731 = vpack.c.b16 %v1653, %v1651
    %v1732 = vpack.c.b16 %v1656, %v1654
    %v1733 = vpack.c.b16 %v1657, %v1655
    %v1734 = vpack.c.b16 %v1660, %v1658
    %v1735 = vpack.c.b16 %v1661, %v1659
    %v1736 = vpack.c.b16 %v1664, %v1662
    %v1737 = vpack.c.b16 %v1665, %v1663
    %v1738 = vpack.c.b16 %v1668, %v1666
    %v1739 = vpack.c.b16 %v1669, %v1667
    %v1740 = vpack.c.b16 %v1672, %v1670
    %v1741 = vpack.c.b16 %v1673, %v1671
    %v1742 = vpack.c.b16 %v1676, %v1674
    %v1743 = vpack.c.b16 %v1677, %v1675
    %v1744 = vpack.c.b16 %v1680, %v1678
    %v1745 = vpack.c.b16 %v1681, %v1679
    %v1746 = vpack.c.b16 %v1684, %v1682
    %v1747 = vpack.c.b16 %v1685, %v1683
    %v1748 = vpack.c.b16 %v1688, %v1686
    %v1749 = vpack.c.b16 %v1689, %v1687
    %v1750 = vpack.c.b16 %v1692, %v1690
    %v1751 = vpack.c.b16 %v1693, %v1691
    %v1752 = vpack.c.b16 %v1696, %v1694
    %v1753 = vpack.c.b16 %v1697, %v1695
    %vm1810 = vcmask 523264
    %v1812 = vsel %vm1810, %v1039, 0
    %v1815 = vsel %vm1810, %v1042, 0
    %v1818 = vsel %vm1810, %v1045, 0
    %v1821 = vsel %vm1810, %v1048, 0
    %v1824 = vsel %vm1810, %v1051, 0
    %v1827 = vsel %vm1810, %v1054, 0
    %v1830 = vsel %vm1810, %v1508, 0
    %1832 = vmatpush.bf16.msra.mxu0 %v1712
    %1833 = vmatpush.bf16.msra.mxu0 %v1710
    %1834 = vmatpush.bf16.msra.mxu0 %v1708
    %1835 = vmatpush.bf16.msra.mxu0 %v1706
    %1836 = vmatpush.bf16.msra.mxu0 %v1704
    %1837 = vmatpush.bf16.msra.mxu0 %v1702
    %1838 = vmatpush.bf16.msra.mxu0 %v1700
    %1839 = vmatpush.bf16.msra.mxu0 %v1698
    %1840 = vmatmul.bf16.gmra.mxu0 %v1499
    %v1841 = vpop.f32.mrf.mxu0
    %v1842 = vadd.f32 %v1353, %v1841
    %v1843 = vpop.f32.mrf.mxu0
    %v1844 = vadd.f32 %v1355, %v1843
    %1845 = vmatmul.bf16.gmra.mxu0 %v1500
    %v1846 = vpop.f32.mrf.mxu0
    %v1847 = vadd.f32 %v1358, %v1846
    %v1848 = vpop.f32.mrf.mxu0
    %v1849 = vadd.f32 %v1360, %v1848
    %1850 = vmatmul.bf16.gmra.mxu0 %v1501
    %v1851 = vpop.f32.mrf.mxu0
    %v1852 = vadd.f32 %v1363, %v1851
    %v1853 = vpop.f32.mrf.mxu0
    %v1854 = vadd.f32 %v1365, %v1853
    %1855 = vmatmul.bf16.gmra.mxu0 %v1502
    %v1856 = vpop.f32.mrf.mxu0
    %v1857 = vadd.f32 %v1368, %v1856
    %v1858 = vpop.f32.mrf.mxu0
    %v1859 = vadd.f32 %v1370, %v1858
    %1860 = vmatmul.bf16.gmra.mxu0 %v1503
    %v1861 = vpop.f32.mrf.mxu0
    %v1862 = vadd.f32 %v1373, %v1861
    %v1863 = vpop.f32.mrf.mxu0
    %v1864 = vadd.f32 %v1375, %v1863
    %1865 = vmatmul.bf16.gmra.mxu0 %v1504
    %v1866 = vpop.f32.mrf.mxu0
    %v1867 = vadd.f32 %v1378, %v1866
    %v1868 = vpop.f32.mrf.mxu0
    %v1869 = vadd.f32 %v1380, %v1868
    %1870 = vmatmul.bf16.gmra.mxu0 %v1505
    %v1871 = vpop.f32.mrf.mxu0
    %v1872 = vadd.f32 %v1383, %v1871
    %v1873 = vpop.f32.mrf.mxu0
    %v1874 = vadd.f32 %v1385, %v1873
    %1875 = vdwg.mxu0
    %1876 = vmatpush.bf16.msra.mxu0 %v1728
    %1877 = vmatpush.bf16.msra.mxu0 %v1726
    %1878 = vmatpush.bf16.msra.mxu0 %v1724
    %1879 = vmatpush.bf16.msra.mxu0 %v1722
    %1880 = vmatpush.bf16.msra.mxu0 %v1720
    %1881 = vmatpush.bf16.msra.mxu0 %v1718
    %1882 = vmatpush.bf16.msra.mxu0 %v1716
    %1883 = vmatpush.bf16.msra.mxu0 %v1714
    %1884 = vmatmul.bf16.gmra.mxu0 %v1037
    %v1885 = vpop.f32.mrf.mxu0
    %v1886 = vadd.f32 %v1842, %v1885
    %v1887 = vpop.f32.mrf.mxu0
    %v1888 = vadd.f32 %v1844, %v1887
    %1889 = vmatmul.bf16.gmra.mxu0 %v1040
    %v1890 = vpop.f32.mrf.mxu0
    %v1891 = vadd.f32 %v1847, %v1890
    %v1892 = vpop.f32.mrf.mxu0
    %v1893 = vadd.f32 %v1849, %v1892
    %1894 = vmatmul.bf16.gmra.mxu0 %v1043
    %v1895 = vpop.f32.mrf.mxu0
    %v1896 = vadd.f32 %v1852, %v1895
    %v1897 = vpop.f32.mrf.mxu0
    %v1898 = vadd.f32 %v1854, %v1897
    %1899 = vmatmul.bf16.gmra.mxu0 %v1046
    %v1900 = vpop.f32.mrf.mxu0
    %v1901 = vadd.f32 %v1857, %v1900
    %v1902 = vpop.f32.mrf.mxu0
    %v1903 = vadd.f32 %v1859, %v1902
    %1904 = vmatmul.bf16.gmra.mxu0 %v1049
    %v1905 = vpop.f32.mrf.mxu0
    %v1906 = vadd.f32 %v1862, %v1905
    %v1907 = vpop.f32.mrf.mxu0
    %v1908 = vadd.f32 %v1864, %v1907
    %1909 = vmatmul.bf16.gmra.mxu0 %v1052
    %v1910 = vpop.f32.mrf.mxu0
    %v1911 = vadd.f32 %v1867, %v1910
    %v1912 = vpop.f32.mrf.mxu0
    %v1913 = vadd.f32 %v1869, %v1912
    %1914 = vmatmul.bf16.gmra.mxu0 %v1506
    %v1915 = vpop.f32.mrf.mxu0
    %v1916 = vadd.f32 %v1872, %v1915
    %v1917 = vpop.f32.mrf.mxu0
    %v1918 = vadd.f32 %v1874, %v1917
    %1919 = vdwg.mxu0
    %1920 = vmatpush.bf16.msra.mxu0 %v1744
    %1921 = vmatpush.bf16.msra.mxu0 %v1742
    %1922 = vmatpush.bf16.msra.mxu0 %v1740
    %1923 = vmatpush.bf16.msra.mxu0 %v1738
    %1924 = vmatpush.bf16.msra.mxu0 %v1736
    %1925 = vmatpush.bf16.msra.mxu0 %v1734
    %1926 = vmatpush.bf16.msra.mxu0 %v1732
    %1927 = vmatpush.bf16.msra.mxu0 %v1730
    %1928 = vmatmul.bf16.gmra.mxu0 %v1038
    %v1929 = vpop.f32.mrf.mxu0
    %v1930 = vadd.f32 %v1886, %v1929
    %v1931 = vpop.f32.mrf.mxu0
    %v1932 = vadd.f32 %v1888, %v1931
    %1933 = vmatmul.bf16.gmra.mxu0 %v1041
    %v1934 = vpop.f32.mrf.mxu0
    %v1935 = vadd.f32 %v1891, %v1934
    %v1936 = vpop.f32.mrf.mxu0
    %v1937 = vadd.f32 %v1893, %v1936
    %1938 = vmatmul.bf16.gmra.mxu0 %v1044
    %v1939 = vpop.f32.mrf.mxu0
    %v1940 = vadd.f32 %v1896, %v1939
    %v1941 = vpop.f32.mrf.mxu0
    %v1942 = vadd.f32 %v1898, %v1941
    %1943 = vmatmul.bf16.gmra.mxu0 %v1047
    %v1944 = vpop.f32.mrf.mxu0
    %v1945 = vadd.f32 %v1901, %v1944
    %v1946 = vpop.f32.mrf.mxu0
    %v1947 = vadd.f32 %v1903, %v1946
    %1948 = vmatmul.bf16.gmra.mxu0 %v1050
    %v1949 = vpop.f32.mrf.mxu0
    %v1950 = vadd.f32 %v1906, %v1949
    %v1951 = vpop.f32.mrf.mxu0
    %v1952 = vadd.f32 %v1908, %v1951
    %1953 = vmatmul.bf16.gmra.mxu0 %v1053
    %v1954 = vpop.f32.mrf.mxu0
    %v1955 = vadd.f32 %v1911, %v1954
    %v1956 = vpop.f32.mrf.mxu0
    %v1957 = vadd.f32 %v1913, %v1956
    %1958 = vmatmul.bf16.gmra.mxu0 %v1507
    %v1959 = vpop.f32.mrf.mxu0
    %v1960 = vadd.f32 %v1916, %v1959
    %v1961 = vpop.f32.mrf.mxu0
    %v1962 = vadd.f32 %v1918, %v1961
    %1963 = vdwg.mxu0
    %1964 = vmatpush.bf16.msra.mxu0 0
    %1965 = vmatpush.bf16.msra.mxu0 0
    %1966 = vmatpush.bf16.msra.mxu0 0
    %1967 = vmatpush.bf16.msra.mxu0 0
    %1968 = vmatpush.bf16.msra.mxu0 %v1752
    %1969 = vmatpush.bf16.msra.mxu0 %v1750
    %1970 = vmatpush.bf16.msra.mxu0 %v1748
    %1971 = vmatpush.bf16.msra.mxu0 %v1746
    %1972 = vmatmul.bf16.gmra.mxu0 %v1812
    %v1973 = vpop.f32.mrf.mxu0
    %v1974 = vadd.f32 %v1930, %v1973
    %v1975 = vpop.f32.mrf.mxu0
    %v1976 = vadd.f32 %v1932, %v1975
    %1977 = vmatmul.bf16.gmra.mxu0 %v1815
    %v1978 = vpop.f32.mrf.mxu0
    %v1979 = vadd.f32 %v1935, %v1978
    %v1980 = vpop.f32.mrf.mxu0
    %v1981 = vadd.f32 %v1937, %v1980
    %1982 = vmatmul.bf16.gmra.mxu0 %v1818
    %v1983 = vpop.f32.mrf.mxu0
    %v1984 = vadd.f32 %v1940, %v1983
    %v1985 = vpop.f32.mrf.mxu0
    %v1986 = vadd.f32 %v1942, %v1985
    %1987 = vmatmul.bf16.gmra.mxu0 %v1821
    %v1988 = vpop.f32.mrf.mxu0
    %v1989 = vadd.f32 %v1945, %v1988
    %v1990 = vpop.f32.mrf.mxu0
    %v1991 = vadd.f32 %v1947, %v1990
    %1992 = vmatmul.bf16.gmra.mxu0 %v1824
    %v1993 = vpop.f32.mrf.mxu0
    %v1994 = vadd.f32 %v1950, %v1993
    %v1995 = vpop.f32.mrf.mxu0
    %v1996 = vadd.f32 %v1952, %v1995
    %1997 = vmatmul.bf16.gmra.mxu0 %v1827
    %v1998 = vpop.f32.mrf.mxu0
    %v1999 = vadd.f32 %v1955, %v1998
    %v2000 = vpop.f32.mrf.mxu0
    %v2001 = vadd.f32 %v1957, %v2000
    %2002 = vmatmul.bf16.gmra.mxu0 %v1830
    %v2003 = vpop.f32.mrf.mxu0
    %v2004 = vadd.f32 %v1960, %v2003
    %v2005 = vpop.f32.mrf.mxu0
    %v2006 = vadd.f32 %v1962, %v2005
    %2007 = vdwg.mxu0
    %2008 = vmatpush.bf16.msra.mxu0 %v1713
    %2009 = vmatpush.bf16.msra.mxu0 %v1711
    %2010 = vmatpush.bf16.msra.mxu0 %v1709
    %2011 = vmatpush.bf16.msra.mxu0 %v1707
    %2012 = vmatpush.bf16.msra.mxu0 %v1705
    %2013 = vmatpush.bf16.msra.mxu0 %v1703
    %2014 = vmatpush.bf16.msra.mxu0 %v1701
    %2015 = vmatpush.bf16.msra.mxu0 %v1699
    %2016 = vmatmul.bf16.gmra.mxu0 %v1499
    %v2017 = vpop.f32.mrf.mxu0
    %v2018 = vadd.f32 %v1441, %v2017
    %v2019 = vpop.f32.mrf.mxu0
    %v2020 = vadd.f32 %v1443, %v2019
    %2021 = vmatmul.bf16.gmra.mxu0 %v1500
    %v2022 = vpop.f32.mrf.mxu0
    %v2023 = vadd.f32 %v1446, %v2022
    %v2024 = vpop.f32.mrf.mxu0
    %v2025 = vadd.f32 %v1448, %v2024
    %2026 = vmatmul.bf16.gmra.mxu0 %v1501
    %v2027 = vpop.f32.mrf.mxu0
    %v2028 = vadd.f32 %v1451, %v2027
    %v2029 = vpop.f32.mrf.mxu0
    %v2030 = vadd.f32 %v1453, %v2029
    %2031 = vmatmul.bf16.gmra.mxu0 %v1502
    %v2032 = vpop.f32.mrf.mxu0
    %v2033 = vadd.f32 %v1456, %v2032
    %v2034 = vpop.f32.mrf.mxu0
    %v2035 = vadd.f32 %v1458, %v2034
    %2036 = vmatmul.bf16.gmra.mxu0 %v1503
    %v2037 = vpop.f32.mrf.mxu0
    %v2038 = vadd.f32 %v1461, %v2037
    %v2039 = vpop.f32.mrf.mxu0
    %v2040 = vadd.f32 %v1463, %v2039
    %2041 = vmatmul.bf16.gmra.mxu0 %v1504
    %v2042 = vpop.f32.mrf.mxu0
    %v2043 = vadd.f32 %v1466, %v2042
    %v2044 = vpop.f32.mrf.mxu0
    %v2045 = vadd.f32 %v1468, %v2044
    %2046 = vmatmul.bf16.gmra.mxu0 %v1505
    %v2047 = vpop.f32.mrf.mxu0
    %v2048 = vadd.f32 %v1471, %v2047
    %v2049 = vpop.f32.mrf.mxu0
    %v2050 = vadd.f32 %v1473, %v2049
    %2051 = vdwg.mxu0
    %2052 = vmatpush.bf16.msra.mxu0 %v1729
    %2053 = vmatpush.bf16.msra.mxu0 %v1727
    %2054 = vmatpush.bf16.msra.mxu0 %v1725
    %2055 = vmatpush.bf16.msra.mxu0 %v1723
    %2056 = vmatpush.bf16.msra.mxu0 %v1721
    %2057 = vmatpush.bf16.msra.mxu0 %v1719
    %2058 = vmatpush.bf16.msra.mxu0 %v1717
    %2059 = vmatpush.bf16.msra.mxu0 %v1715
    %2060 = vmatmul.bf16.gmra.mxu0 %v1037
    %v2061 = vpop.f32.mrf.mxu0
    %v2062 = vadd.f32 %v2018, %v2061
    %v2063 = vpop.f32.mrf.mxu0
    %v2064 = vadd.f32 %v2020, %v2063
    %2065 = vmatmul.bf16.gmra.mxu0 %v1040
    %v2066 = vpop.f32.mrf.mxu0
    %v2067 = vadd.f32 %v2023, %v2066
    %v2068 = vpop.f32.mrf.mxu0
    %v2069 = vadd.f32 %v2025, %v2068
    %2070 = vmatmul.bf16.gmra.mxu0 %v1043
    %v2071 = vpop.f32.mrf.mxu0
    %v2072 = vadd.f32 %v2028, %v2071
    %v2073 = vpop.f32.mrf.mxu0
    %v2074 = vadd.f32 %v2030, %v2073
    %2075 = vmatmul.bf16.gmra.mxu0 %v1046
    %v2076 = vpop.f32.mrf.mxu0
    %v2077 = vadd.f32 %v2033, %v2076
    %v2078 = vpop.f32.mrf.mxu0
    %v2079 = vadd.f32 %v2035, %v2078
    %2080 = vmatmul.bf16.gmra.mxu0 %v1049
    %v2081 = vpop.f32.mrf.mxu0
    %v2082 = vadd.f32 %v2038, %v2081
    %v2083 = vpop.f32.mrf.mxu0
    %v2084 = vadd.f32 %v2040, %v2083
    %2085 = vmatmul.bf16.gmra.mxu0 %v1052
    %v2086 = vpop.f32.mrf.mxu0
    %v2087 = vadd.f32 %v2043, %v2086
    %v2088 = vpop.f32.mrf.mxu0
    %v2089 = vadd.f32 %v2045, %v2088
    %2090 = vmatmul.bf16.gmra.mxu0 %v1506
    %v2091 = vpop.f32.mrf.mxu0
    %v2092 = vadd.f32 %v2048, %v2091
    %v2093 = vpop.f32.mrf.mxu0
    %v2094 = vadd.f32 %v2050, %v2093
    %2095 = vdwg.mxu0
    %2096 = vmatpush.bf16.msra.mxu0 %v1745
    %2097 = vmatpush.bf16.msra.mxu0 %v1743
    %2098 = vmatpush.bf16.msra.mxu0 %v1741
    %2099 = vmatpush.bf16.msra.mxu0 %v1739
    %2100 = vmatpush.bf16.msra.mxu0 %v1737
    %2101 = vmatpush.bf16.msra.mxu0 %v1735
    %2102 = vmatpush.bf16.msra.mxu0 %v1733
    %2103 = vmatpush.bf16.msra.mxu0 %v1731
    %2104 = vmatmul.bf16.gmra.mxu0 %v1038
    %v2105 = vpop.f32.mrf.mxu0
    %v2106 = vadd.f32 %v2062, %v2105
    %v2107 = vpop.f32.mrf.mxu0
    %v2108 = vadd.f32 %v2064, %v2107
    %2109 = vmatmul.bf16.gmra.mxu0 %v1041
    %v2110 = vpop.f32.mrf.mxu0
    %v2111 = vadd.f32 %v2067, %v2110
    %v2112 = vpop.f32.mrf.mxu0
    %v2113 = vadd.f32 %v2069, %v2112
    %2114 = vmatmul.bf16.gmra.mxu0 %v1044
    %v2115 = vpop.f32.mrf.mxu0
    %v2116 = vadd.f32 %v2072, %v2115
    %v2117 = vpop.f32.mrf.mxu0
    %v2118 = vadd.f32 %v2074, %v2117
    %2119 = vmatmul.bf16.gmra.mxu0 %v1047
    %v2120 = vpop.f32.mrf.mxu0
    %v2121 = vadd.f32 %v2077, %v2120
    %v2122 = vpop.f32.mrf.mxu0
    %v2123 = vadd.f32 %v2079, %v2122
    %2124 = vmatmul.bf16.gmra.mxu0 %v1050
    %v2125 = vpop.f32.mrf.mxu0
    %v2126 = vadd.f32 %v2082, %v2125
    %v2127 = vpop.f32.mrf.mxu0
    %v2128 = vadd.f32 %v2084, %v2127
    %2129 = vmatmul.bf16.gmra.mxu0 %v1053
    %v2130 = vpop.f32.mrf.mxu0
    %v2131 = vadd.f32 %v2087, %v2130
    %v2132 = vpop.f32.mrf.mxu0
    %v2133 = vadd.f32 %v2089, %v2132
    %2134 = vmatmul.bf16.gmra.mxu0 %v1507
    %v2135 = vpop.f32.mrf.mxu0
    %v2136 = vadd.f32 %v2092, %v2135
    %v2137 = vpop.f32.mrf.mxu0
    %v2138 = vadd.f32 %v2094, %v2137
    %2139 = vdwg.mxu0
    %2140 = vmatpush.bf16.msra.mxu0 0
    %2141 = vmatpush.bf16.msra.mxu0 0
    %2142 = vmatpush.bf16.msra.mxu0 0
    %2143 = vmatpush.bf16.msra.mxu0 0
    %2144 = vmatpush.bf16.msra.mxu0 %v1753
    %2145 = vmatpush.bf16.msra.mxu0 %v1751
    %2146 = vmatpush.bf16.msra.mxu0 %v1749
    %2147 = vmatpush.bf16.msra.mxu0 %v1747
    %2148 = vmatmul.bf16.gmra.mxu0 %v1812
    %v2149 = vpop.f32.mrf.mxu0
    %v2150 = vadd.f32 %v2106, %v2149
    %v2151 = vpop.f32.mrf.mxu0
    %v2152 = vadd.f32 %v2108, %v2151
    %2153 = vmatmul.bf16.gmra.mxu0 %v1815
    %v2154 = vpop.f32.mrf.mxu0
    %v2155 = vadd.f32 %v2111, %v2154
    %v2156 = vpop.f32.mrf.mxu0
    %v2157 = vadd.f32 %v2113, %v2156
    %2158 = vmatmul.bf16.gmra.mxu0 %v1818
    %v2159 = vpop.f32.mrf.mxu0
    %v2160 = vadd.f32 %v2116, %v2159
    %v2161 = vpop.f32.mrf.mxu0
    %v2162 = vadd.f32 %v2118, %v2161
    %2163 = vmatmul.bf16.gmra.mxu0 %v1821
    %v2164 = vpop.f32.mrf.mxu0
    %v2165 = vadd.f32 %v2121, %v2164
    %v2166 = vpop.f32.mrf.mxu0
    %v2167 = vadd.f32 %v2123, %v2166
    %2168 = vmatmul.bf16.gmra.mxu0 %v1824
    %v2169 = vpop.f32.mrf.mxu0
    %v2170 = vadd.f32 %v2126, %v2169
    %v2171 = vpop.f32.mrf.mxu0
    %v2172 = vadd.f32 %v2128, %v2171
    %2173 = vmatmul.bf16.gmra.mxu0 %v1827
    %v2174 = vpop.f32.mrf.mxu0
    %v2175 = vadd.f32 %v2131, %v2174
    %v2176 = vpop.f32.mrf.mxu0
    %v2177 = vadd.f32 %v2133, %v2176
    %2178 = vmatmul.bf16.gmra.mxu0 %v1830
    %v2179 = vpop.f32.mrf.mxu0
    %v2180 = vadd.f32 %v2136, %v2179
    %v2181 = vpop.f32.mrf.mxu0
    %v2182 = vadd.f32 %v2138, %v2181
    %2183 = vdwg.mxu0
    %v2184 = vld [vmem:[%s11 + $0x4] sm:$0x3]
    %v2186 = vperm.slane %v2184, 0
    %v2187 = vperm.slane %v2184, 1
    %v2190 = vadd.f32 %v1974, %v2186
    %v2191 = vadd.f32 %v2150, %v2187
    %v2192 = vadd.f32 %v1976, %v2186
    %v2193 = vadd.f32 %v2152, %v2187
    %v2194 = vadd.f32 %v1979, %v2186
    %v2195 = vadd.f32 %v2155, %v2187
    %v2196 = vadd.f32 %v1981, %v2186
    %v2197 = vadd.f32 %v2157, %v2187
    %v2198 = vadd.f32 %v1984, %v2186
    %v2199 = vadd.f32 %v2160, %v2187
    %v2200 = vadd.f32 %v1986, %v2186
    %v2201 = vadd.f32 %v2162, %v2187
    %v2202 = vadd.f32 %v1989, %v2186
    %v2203 = vadd.f32 %v2165, %v2187
    %v2204 = vadd.f32 %v1991, %v2186
    %v2205 = vadd.f32 %v2167, %v2187
    %v2206 = vadd.f32 %v1994, %v2186
    %v2207 = vadd.f32 %v2170, %v2187
    %v2208 = vadd.f32 %v1996, %v2186
    %v2209 = vadd.f32 %v2172, %v2187
    %v2210 = vadd.f32 %v1999, %v2186
    %v2211 = vadd.f32 %v2175, %v2187
    %v2212 = vadd.f32 %v2001, %v2186
    %v2213 = vadd.f32 %v2177, %v2187
    %v2214 = vadd.f32 %v2004, %v2186
    %v2215 = vadd.f32 %v2180, %v2187
    %v2216 = vadd.f32 %v2006, %v2186
    %v2217 = vadd.f32 %v2182, %v2187
    %v2218 = vmax.f32 %v2190, 0.0
    %v2219 = vmax.f32 %v2191, 0.0
    %v2220 = vmax.f32 %v2192, 0.0
    %v2221 = vmax.f32 %v2193, 0.0
    %v2222 = vmax.f32 %v2194, 0.0
    %v2223 = vmax.f32 %v2195, 0.0
    %v2224 = vmax.f32 %v2196, 0.0
    %v2225 = vmax.f32 %v2197, 0.0
    %v2226 = vmax.f32 %v2198, 0.0
    %v2227 = vmax.f32 %v2199, 0.0
    %v2228 = vmax.f32 %v2200, 0.0
    %v2229 = vmax.f32 %v2201, 0.0
    %v2230 = vmax.f32 %v2202, 0.0
    %v2231 = vmax.f32 %v2203, 0.0
    %v2232 = vmax.f32 %v2204, 0.0
    %v2233 = vmax.f32 %v2205, 0.0
    %v2234 = vmax.f32 %v2206, 0.0
    %v2235 = vmax.f32 %v2207, 0.0
    %v2236 = vmax.f32 %v2208, 0.0
    %v2237 = vmax.f32 %v2209, 0.0
    %v2238 = vmax.f32 %v2210, 0.0
    %v2239 = vmax.f32 %v2211, 0.0
    %v2240 = vmax.f32 %v2212, 0.0
    %v2241 = vmax.f32 %v2213, 0.0
    %v2242 = vmax.f32 %v2214, 0.0
    %v2243 = vmax.f32 %v2215, 0.0
    %v2244 = vmax.f32 %v2216, 0.0
    %v2245 = vmax.f32 %v2217, 0.0
    %v2246 = vpack.c.bf16 %v2219, %v2218
    %v2247 = vpack.c.bf16 %v2221, %v2220
    %v2248 = vpack.c.bf16 %v2223, %v2222
    %v2249 = vpack.c.bf16 %v2225, %v2224
    %v2250 = vpack.c.bf16 %v2227, %v2226
    %v2251 = vpack.c.bf16 %v2229, %v2228
    %v2252 = vpack.c.bf16 %v2231, %v2230
    %v2253 = vpack.c.bf16 %v2233, %v2232
    %v2254 = vpack.c.bf16 %v2235, %v2234
    %v2255 = vpack.c.bf16 %v2237, %v2236
    %v2256 = vpack.c.bf16 %v2239, %v2238
    %v2257 = vpack.c.bf16 %v2241, %v2240
    %v2258 = vpack.c.bf16 %v2243, %v2242
    %v2259 = vpack.c.bf16 %v2245, %v2244
    %v2260 = vld [vmem:[%s5] sm:$0xf]
    %v2261 = vld [vmem:[%s5 + $0x4] sm:$0xf]
    %v2262 = vld [vmem:[%s5 + $0x8] sm:$0xf]
    %v2263 = vld [vmem:[%s5 + $0xc] sm:$0xf]
    %v2264 = vld [vmem:[%s5 + $0x10] sm:$0xf]
    %v2265 = vld [vmem:[%s5 + $0x14] sm:$0xf]
    %v2266 = vld [vmem:[%s5 + $0x18] sm:$0xf]
    %v2267 = vld [vmem:[%s5 + $0x1c] sm:$0xf]
    %v2268 = vld [vmem:[%s5 + $0x20] sm:$0xf]
    %v2269 = vld [vmem:[%s5 + $0x24] sm:$0xf]
    %v2270 = vld [vmem:[%s5 + $0x28] sm:$0xf]
    %v2271 = vld [vmem:[%s5 + $0x2c] sm:$0xf]
    %v2272 = vld [vmem:[%s5 + $0x30] sm:$0xf]
    %v2273 = vld [vmem:[%s5 + $0x34] sm:$0xf]
    %v2274 = vld [vmem:[%s5 + $0x38] sm:$0xf]
    %v2275 = vld [vmem:[%s5 + $0x3c] sm:$0xf]
    %v2276 = vld [vmem:[%s5 + $0x40] sm:$0xf]
    %v2277 = vld [vmem:[%s5 + $0x44] sm:$0xf]
    %v2278 = vld [vmem:[%s5 + $0x48] sm:$0xf]
    %v2279 = vld [vmem:[%s5 + $0x4c] sm:$0xf]
    %v2280 = vld [vmem:[%s5 + $0x50] sm:$0xf]
    %v2281 = vld [vmem:[%s5 + $0x54] sm:$0xf]
    %v2282 = vld [vmem:[%s5 + $0x58] sm:$0xf]
    %v2283 = vld [vmem:[%s5 + $0x5c] sm:$0xf]
    %v2284 = vld [vmem:[%s5 + $0x60] sm:$0xf]
    %v2285 = vld [vmem:[%s5 + $0x64] sm:$0xf]
    %v2286 = vld [vmem:[%s5 + $0x68] sm:$0xf]
    %v2287 = vld [vmem:[%s5 + $0x6c] sm:$0xf]
    %s2288 = scalar_lea.vmem %s5, 112
    %v2289 = vld [vmem:[%s2288] sm:$0xf]
    %v2290 = vld [vmem:[%s2288 + $0x4] sm:$0xf]
    %v2291 = vld [vmem:[%s2288 + $0x8] sm:$0xf]
    %v2292 = vld [vmem:[%s2288 + $0xc] sm:$0xf]
    %v2293 = vld [vmem:[%s2288 + $0x10] sm:$0xf]
    %v2294 = vld [vmem:[%s2288 + $0x14] sm:$0xf]
    %v2295 = vld [vmem:[%s2288 + $0x18] sm:$0xf]
    %v2296 = vld [vmem:[%s2288 + $0x1c] sm:$0xf]
    %v2297 = vld [vmem:[%s2288 + $0x20] sm:$0xf]
    %v2298 = vld [vmem:[%s2288 + $0x24] sm:$0xf]
    %v2299 = vld [vmem:[%s2288 + $0x28] sm:$0xf]
    %v2300 = vld [vmem:[%s2288 + $0x2c] sm:$0xf]
    %v2301 = vld [vmem:[%s2288 + $0x30] sm:$0xf]
    %v2302 = vld [vmem:[%s2288 + $0x34] sm:$0xf]
    %v2303 = vld [vmem:[%s2288 + $0x38] sm:$0xf]
    %v2304 = vld [vmem:[%s2288 + $0x3c] sm:$0xf]
    %v2305 = vld [vmem:[%s2288 + $0x40] sm:$0xf]
    %v2306 = vld [vmem:[%s2288 + $0x44] sm:$0xf]
    %v2307 = vld [vmem:[%s2288 + $0x48] sm:$0xf]
    %v2308 = vld [vmem:[%s2288 + $0x4c] sm:$0xf]
    %v2309 = vld [vmem:[%s2288 + $0x50] sm:$0xf]
    %v2310 = vld [vmem:[%s2288 + $0x54] sm:$0xf]
    %v2311 = vld [vmem:[%s2288 + $0x58] sm:$0xf]
    %v2312 = vld [vmem:[%s2288 + $0x5c] sm:$0xf]
    %v2313 = vld [vmem:[%s2288 + $0x60] sm:$0xf]
    %v2314 = vld [vmem:[%s2288 + $0x64] sm:$0xf]
    %v2315 = vld [vmem:[%s2288 + $0x68] sm:$0xf]
    %v2316 = vld [vmem:[%s2288 + $0x6c] sm:$0xf]
    %v2319 = vunpack.c.l.b16 %v2248
    %v2320 = vunpack.c.h.b16 %v2248
    %v2321 = vunpack.c.l.b16 %v2249
    %v2322 = vunpack.c.h.b16 %v2249
    %v2323 = vpack.c.b16 %v2321, %v2319
    %v2324 = vpack.c.b16 %v2322, %v2320
    %v2354 = vunpack.c.l.b16 %v2289
    %v2355 = vunpack.c.l.b16 %v2290
    %v2356 = vunpack.c.l.b16 %v2291
    %v2357 = vunpack.c.l.b16 %v2292
    %v2358 = vunpack.c.l.b16 %v2293
    %v2359 = vunpack.c.l.b16 %v2294
    %v2360 = vunpack.c.l.b16 %v2295
    %v2361 = vunpack.c.l.b16 %v2296
    %v2362 = vunpack.c.l.b16 %v2297
    %v2363 = vunpack.c.l.b16 %v2298
    %v2364 = vunpack.c.l.b16 %v2299
    %v2365 = vunpack.c.l.b16 %v2300
    %v2366 = vunpack.c.l.b16 %v2301
    %v2367 = vunpack.c.l.b16 %v2302
    %v2368 = vunpack.c.l.b16 %v2303
    %v2369 = vunpack.c.l.b16 %v2304
    %v2370 = vunpack.c.l.b16 %v2305
    %v2371 = vunpack.c.l.b16 %v2306
    %v2372 = vunpack.c.l.b16 %v2307
    %v2373 = vunpack.c.l.b16 %v2308
    %v2374 = vunpack.c.l.b16 %v2309
    %v2375 = vunpack.c.l.b16 %v2310
    %v2376 = vunpack.c.l.b16 %v2311
    %v2377 = vunpack.c.l.b16 %v2312
    %v2378 = vunpack.c.l.b16 %v2313
    %v2379 = vunpack.c.l.b16 %v2314
    %v2380 = vunpack.c.l.b16 %v2315
    %v2381 = vunpack.c.l.b16 %v2316
    %v2382 = vpack.c.b16 %v2355, %v2354
    %v2383 = vpack.c.b16 %v2357, %v2356
    %v2384 = vpack.c.b16 %v2359, %v2358
    %v2385 = vpack.c.b16 %v2361, %v2360
    %v2386 = vpack.c.b16 %v2363, %v2362
    %v2387 = vpack.c.b16 %v2365, %v2364
    %v2388 = vpack.c.b16 %v2367, %v2366
    %v2389 = vpack.c.b16 %v2369, %v2368
    %v2390 = vpack.c.b16 %v2371, %v2370
    %v2391 = vpack.c.b16 %v2373, %v2372
    %v2392 = vpack.c.b16 %v2375, %v2374
    %v2393 = vpack.c.b16 %v2377, %v2376
    %v2394 = vpack.c.b16 %v2379, %v2378
    %v2395 = vpack.c.b16 %v2381, %v2380
    %v2411 = vsel %vm1278, %v2324, 0
    %2413 = vmatpush.bf16.msra.mxu0 %v2389
    %2414 = vmatpush.bf16.msra.mxu0 %v2388
    %2415 = vmatpush.bf16.msra.mxu0 %v2387
    %2416 = vmatpush.bf16.msra.mxu0 %v2386
    %2417 = vmatpush.bf16.msra.mxu0 %v2385
    %2418 = vmatpush.bf16.msra.mxu0 %v2384
    %2419 = vmatpush.bf16.msra.mxu0 %v2383
    %2420 = vmatpush.bf16.msra.mxu0 %v2382
    %2421 = vmatmul.bf16.gmra.mxu0 %v2323
    %v2422 = vpop.f32.mrf.mxu0
    %v2423 = vadd.f32 0.0, %v2422
    %v2424 = vpop.f32.mrf.mxu0
    %v2425 = vadd.f32 0.0, %v2424
    %2426 = vdwg.mxu0
    %2427 = vmatpush.bf16.msra.mxu0 0
    %2428 = vmatpush.bf16.msra.mxu0 0
    %2429 = vmatpush.bf16.msra.mxu0 %v2395
    %2430 = vmatpush.bf16.msra.mxu0 %v2394
    %2431 = vmatpush.bf16.msra.mxu0 %v2393
    %2432 = vmatpush.bf16.msra.mxu0 %v2392
    %2433 = vmatpush.bf16.msra.mxu0 %v2391
    %2434 = vmatpush.bf16.msra.mxu0 %v2390
    %2435 = vmatmul.bf16.gmra.mxu0 %v2411
    %v2436 = vpop.f32.mrf.mxu0
    %v2437 = vadd.f32 %v2423, %v2436
    %v2438 = vpop.f32.mrf.mxu0
    %v2439 = vadd.f32 %v2425, %v2438
    %2440 = vdwg.mxu0
    %v2443 = vunpack.c.l.b16 %v2246
    %v2444 = vunpack.c.h.b16 %v2246
    %v2445 = vunpack.c.l.b16 %v2247
    %v2446 = vunpack.c.h.b16 %v2247
    %v2447 = vpack.c.b16 %v2445, %v2443
    %v2448 = vpack.c.b16 %v2446, %v2444
    %v2478 = vunpack.c.l.b16 %v2260
    %v2479 = vunpack.c.l.b16 %v2261
    %v2480 = vunpack.c.l.b16 %v2262
    %v2481 = vunpack.c.l.b16 %v2263
    %v2482 = vunpack.c.l.b16 %v2264
    %v2483 = vunpack.c.l.b16 %v2265
    %v2484 = vunpack.c.l.b16 %v2266
    %v2485 = vunpack.c.l.b16 %v2267
    %v2486 = vunpack.c.l.b16 %v2268
    %v2487 = vunpack.c.l.b16 %v2269
    %v2488 = vunpack.c.l.b16 %v2270
    %v2489 = vunpack.c.l.b16 %v2271
    %v2490 = vunpack.c.l.b16 %v2272
    %v2491 = vunpack.c.l.b16 %v2273
    %v2492 = vunpack.c.l.b16 %v2274
    %v2493 = vunpack.c.l.b16 %v2275
    %v2494 = vunpack.c.l.b16 %v2276
    %v2495 = vunpack.c.l.b16 %v2277
    %v2496 = vunpack.c.l.b16 %v2278
    %v2497 = vunpack.c.l.b16 %v2279
    %v2498 = vunpack.c.l.b16 %v2280
    %v2499 = vunpack.c.l.b16 %v2281
    %v2500 = vunpack.c.l.b16 %v2282
    %v2501 = vunpack.c.l.b16 %v2283
    %v2502 = vunpack.c.l.b16 %v2284
    %v2503 = vunpack.c.l.b16 %v2285
    %v2504 = vunpack.c.l.b16 %v2286
    %v2505 = vunpack.c.l.b16 %v2287
    %v2506 = vpack.c.b16 %v2479, %v2478
    %v2507 = vpack.c.b16 %v2481, %v2480
    %v2508 = vpack.c.b16 %v2483, %v2482
    %v2509 = vpack.c.b16 %v2485, %v2484
    %v2510 = vpack.c.b16 %v2487, %v2486
    %v2511 = vpack.c.b16 %v2489, %v2488
    %v2512 = vpack.c.b16 %v2491, %v2490
    %v2513 = vpack.c.b16 %v2493, %v2492
    %v2514 = vpack.c.b16 %v2495, %v2494
    %v2515 = vpack.c.b16 %v2497, %v2496
    %v2516 = vpack.c.b16 %v2499, %v2498
    %v2517 = vpack.c.b16 %v2501, %v2500
    %v2518 = vpack.c.b16 %v2503, %v2502
    %v2519 = vpack.c.b16 %v2505, %v2504
    %v2535 = vsel %vm1278, %v2448, 0
    %2537 = vmatpush.bf16.msra.mxu0 %v2513
    %2538 = vmatpush.bf16.msra.mxu0 %v2512
    %2539 = vmatpush.bf16.msra.mxu0 %v2511
    %2540 = vmatpush.bf16.msra.mxu0 %v2510
    %2541 = vmatpush.bf16.msra.mxu0 %v2509
    %2542 = vmatpush.bf16.msra.mxu0 %v2508
    %2543 = vmatpush.bf16.msra.mxu0 %v2507
    %2544 = vmatpush.bf16.msra.mxu0 %v2506
    %2545 = vmatmul.bf16.gmra.mxu0 %v2447
    %v2546 = vpop.f32.mrf.mxu0
    %v2547 = vadd.f32 %v2437, %v2546
    %v2548 = vpop.f32.mrf.mxu0
    %v2549 = vadd.f32 %v2439, %v2548
    %2550 = vdwg.mxu0
    %2551 = vmatpush.bf16.msra.mxu0 0
    %2552 = vmatpush.bf16.msra.mxu0 0
    %2553 = vmatpush.bf16.msra.mxu0 %v2519
    %2554 = vmatpush.bf16.msra.mxu0 %v2518
    %2555 = vmatpush.bf16.msra.mxu0 %v2517
    %2556 = vmatpush.bf16.msra.mxu0 %v2516
    %2557 = vmatpush.bf16.msra.mxu0 %v2515
    %2558 = vmatpush.bf16.msra.mxu0 %v2514
    %2559 = vmatmul.bf16.gmra.mxu0 %v2535
    %v2560 = vpop.f32.mrf.mxu0
    %v2561 = vadd.f32 %v2547, %v2560
    %v2562 = vpop.f32.mrf.mxu0
    %v2563 = vadd.f32 %v2549, %v2562
    %2564 = vdwg.mxu0
    %s2565 = scalar_lea.vmem %s5, 224
    %v2566 = vld [vmem:[%s2565] sm:$0xf]
    %v2567 = vld [vmem:[%s2565 + $0x4] sm:$0xf]
    %v2568 = vld [vmem:[%s2565 + $0x8] sm:$0xf]
    %v2569 = vld [vmem:[%s2565 + $0xc] sm:$0xf]
    %v2570 = vld [vmem:[%s2565 + $0x10] sm:$0xf]
    %v2571 = vld [vmem:[%s2565 + $0x14] sm:$0xf]
    %v2572 = vld [vmem:[%s2565 + $0x18] sm:$0xf]
    %v2573 = vld [vmem:[%s2565 + $0x1c] sm:$0xf]
    %v2574 = vld [vmem:[%s2565 + $0x20] sm:$0xf]
    %v2575 = vld [vmem:[%s2565 + $0x24] sm:$0xf]
    %v2576 = vld [vmem:[%s2565 + $0x28] sm:$0xf]
    %v2577 = vld [vmem:[%s2565 + $0x2c] sm:$0xf]
    %v2578 = vld [vmem:[%s2565 + $0x30] sm:$0xf]
    %v2579 = vld [vmem:[%s2565 + $0x34] sm:$0xf]
    %v2580 = vld [vmem:[%s2565 + $0x38] sm:$0xf]
    %v2581 = vld [vmem:[%s2565 + $0x3c] sm:$0xf]
    %v2582 = vld [vmem:[%s2565 + $0x40] sm:$0xf]
    %v2583 = vld [vmem:[%s2565 + $0x44] sm:$0xf]
    %v2584 = vld [vmem:[%s2565 + $0x48] sm:$0xf]
    %v2585 = vld [vmem:[%s2565 + $0x4c] sm:$0xf]
    %v2586 = vld [vmem:[%s2565 + $0x50] sm:$0xf]
    %v2587 = vld [vmem:[%s2565 + $0x54] sm:$0xf]
    %v2588 = vld [vmem:[%s2565 + $0x58] sm:$0xf]
    %v2589 = vld [vmem:[%s2565 + $0x5c] sm:$0xf]
    %v2590 = vld [vmem:[%s2565 + $0x60] sm:$0xf]
    %v2591 = vld [vmem:[%s2565 + $0x64] sm:$0xf]
    %v2592 = vld [vmem:[%s2565 + $0x68] sm:$0xf]
    %v2593 = vld [vmem:[%s2565 + $0x6c] sm:$0xf]
    %v2596 = vunpack.c.l.b16 %v2250
    %v2597 = vunpack.c.h.b16 %v2250
    %v2598 = vunpack.c.l.b16 %v2251
    %v2599 = vunpack.c.h.b16 %v2251
    %v2600 = vpack.c.b16 %v2598, %v2596
    %v2601 = vpack.c.b16 %v2599, %v2597
    %v2631 = vunpack.c.l.b16 %v2566
    %v2632 = vunpack.c.l.b16 %v2567
    %v2633 = vunpack.c.l.b16 %v2568
    %v2634 = vunpack.c.l.b16 %v2569
    %v2635 = vunpack.c.l.b16 %v2570
    %v2636 = vunpack.c.l.b16 %v2571
    %v2637 = vunpack.c.l.b16 %v2572
    %v2638 = vunpack.c.l.b16 %v2573
    %v2639 = vunpack.c.l.b16 %v2574
    %v2640 = vunpack.c.l.b16 %v2575
    %v2641 = vunpack.c.l.b16 %v2576
    %v2642 = vunpack.c.l.b16 %v2577
    %v2643 = vunpack.c.l.b16 %v2578
    %v2644 = vunpack.c.l.b16 %v2579
    %v2645 = vunpack.c.l.b16 %v2580
    %v2646 = vunpack.c.l.b16 %v2581
    %v2647 = vunpack.c.l.b16 %v2582
    %v2648 = vunpack.c.l.b16 %v2583
    %v2649 = vunpack.c.l.b16 %v2584
    %v2650 = vunpack.c.l.b16 %v2585
    %v2651 = vunpack.c.l.b16 %v2586
    %v2652 = vunpack.c.l.b16 %v2587
    %v2653 = vunpack.c.l.b16 %v2588
    %v2654 = vunpack.c.l.b16 %v2589
    %v2655 = vunpack.c.l.b16 %v2590
    %v2656 = vunpack.c.l.b16 %v2591
    %v2657 = vunpack.c.l.b16 %v2592
    %v2658 = vunpack.c.l.b16 %v2593
    %v2659 = vpack.c.b16 %v2632, %v2631
    %v2660 = vpack.c.b16 %v2634, %v2633
    %v2661 = vpack.c.b16 %v2636, %v2635
    %v2662 = vpack.c.b16 %v2638, %v2637
    %v2663 = vpack.c.b16 %v2640, %v2639
    %v2664 = vpack.c.b16 %v2642, %v2641
    %v2665 = vpack.c.b16 %v2644, %v2643
    %v2666 = vpack.c.b16 %v2646, %v2645
    %v2667 = vpack.c.b16 %v2648, %v2647
    %v2668 = vpack.c.b16 %v2650, %v2649
    %v2669 = vpack.c.b16 %v2652, %v2651
    %v2670 = vpack.c.b16 %v2654, %v2653
    %v2671 = vpack.c.b16 %v2656, %v2655
    %v2672 = vpack.c.b16 %v2658, %v2657
    %v2688 = vsel %vm1278, %v2601, 0
    %2690 = vmatpush.bf16.msra.mxu0 %v2666
    %2691 = vmatpush.bf16.msra.mxu0 %v2665
    %2692 = vmatpush.bf16.msra.mxu0 %v2664
    %2693 = vmatpush.bf16.msra.mxu0 %v2663
    %2694 = vmatpush.bf16.msra.mxu0 %v2662
    %2695 = vmatpush.bf16.msra.mxu0 %v2661
    %2696 = vmatpush.bf16.msra.mxu0 %v2660
    %2697 = vmatpush.bf16.msra.mxu0 %v2659
    %2698 = vmatmul.bf16.gmra.mxu0 %v2600
    %v2699 = vpop.f32.mrf.mxu0
    %v2700 = vadd.f32 0.0, %v2699
    %v2701 = vpop.f32.mrf.mxu0
    %v2702 = vadd.f32 0.0, %v2701
    %2703 = vdwg.mxu0
    %2704 = vmatpush.bf16.msra.mxu0 0
    %2705 = vmatpush.bf16.msra.mxu0 0
    %2706 = vmatpush.bf16.msra.mxu0 %v2672
    %2707 = vmatpush.bf16.msra.mxu0 %v2671
    %2708 = vmatpush.bf16.msra.mxu0 %v2670
    %2709 = vmatpush.bf16.msra.mxu0 %v2669
    %2710 = vmatpush.bf16.msra.mxu0 %v2668
    %2711 = vmatpush.bf16.msra.mxu0 %v2667
    %2712 = vmatmul.bf16.gmra.mxu0 %v2688
    %v2713 = vpop.f32.mrf.mxu0
    %v2714 = vadd.f32 %v2700, %v2713
    %v2715 = vpop.f32.mrf.mxu0
    %v2716 = vadd.f32 %v2702, %v2715
    %2717 = vdwg.mxu0
    %v2718 = vadd.f32 %v2561, %v2714
    %v2719 = vadd.f32 %v2563, %v2716
    %s2720 = scalar_lea.vmem %s5, 336
    %v2721 = vld [vmem:[%s2720] sm:$0xf]
    %v2722 = vld [vmem:[%s2720 + $0x4] sm:$0xf]
    %v2723 = vld [vmem:[%s2720 + $0x8] sm:$0xf]
    %v2724 = vld [vmem:[%s2720 + $0xc] sm:$0xf]
    %v2725 = vld [vmem:[%s2720 + $0x10] sm:$0xf]
    %v2726 = vld [vmem:[%s2720 + $0x14] sm:$0xf]
    %v2727 = vld [vmem:[%s2720 + $0x18] sm:$0xf]
    %v2728 = vld [vmem:[%s2720 + $0x1c] sm:$0xf]
    %v2729 = vld [vmem:[%s2720 + $0x20] sm:$0xf]
    %v2730 = vld [vmem:[%s2720 + $0x24] sm:$0xf]
    %v2731 = vld [vmem:[%s2720 + $0x28] sm:$0xf]
    %v2732 = vld [vmem:[%s2720 + $0x2c] sm:$0xf]
    %v2733 = vld [vmem:[%s2720 + $0x30] sm:$0xf]
    %v2734 = vld [vmem:[%s2720 + $0x34] sm:$0xf]
    %v2735 = vld [vmem:[%s2720 + $0x38] sm:$0xf]
    %v2736 = vld [vmem:[%s2720 + $0x3c] sm:$0xf]
    %v2737 = vld [vmem:[%s2720 + $0x40] sm:$0xf]
    %v2738 = vld [vmem:[%s2720 + $0x44] sm:$0xf]
    %v2739 = vld [vmem:[%s2720 + $0x48] sm:$0xf]
    %v2740 = vld [vmem:[%s2720 + $0x4c] sm:$0xf]
    %v2741 = vld [vmem:[%s2720 + $0x50] sm:$0xf]
    %v2742 = vld [vmem:[%s2720 + $0x54] sm:$0xf]
    %v2743 = vld [vmem:[%s2720 + $0x58] sm:$0xf]
    %v2744 = vld [vmem:[%s2720 + $0x5c] sm:$0xf]
    %v2745 = vld [vmem:[%s2720 + $0x60] sm:$0xf]
    %v2746 = vld [vmem:[%s2720 + $0x64] sm:$0xf]
    %v2747 = vld [vmem:[%s2720 + $0x68] sm:$0xf]
    %v2748 = vld [vmem:[%s2720 + $0x6c] sm:$0xf]
    %v2751 = vunpack.c.l.b16 %v2252
    %v2752 = vunpack.c.h.b16 %v2252
    %v2753 = vunpack.c.l.b16 %v2253
    %v2754 = vunpack.c.h.b16 %v2253
    %v2755 = vpack.c.b16 %v2753, %v2751
    %v2756 = vpack.c.b16 %v2754, %v2752
    %v2786 = vunpack.c.l.b16 %v2721
    %v2787 = vunpack.c.l.b16 %v2722
    %v2788 = vunpack.c.l.b16 %v2723
    %v2789 = vunpack.c.l.b16 %v2724
    %v2790 = vunpack.c.l.b16 %v2725
    %v2791 = vunpack.c.l.b16 %v2726
    %v2792 = vunpack.c.l.b16 %v2727
    %v2793 = vunpack.c.l.b16 %v2728
    %v2794 = vunpack.c.l.b16 %v2729
    %v2795 = vunpack.c.l.b16 %v2730
    %v2796 = vunpack.c.l.b16 %v2731
    %v2797 = vunpack.c.l.b16 %v2732
    %v2798 = vunpack.c.l.b16 %v2733
    %v2799 = vunpack.c.l.b16 %v2734
    %v2800 = vunpack.c.l.b16 %v2735
    %v2801 = vunpack.c.l.b16 %v2736
    %v2802 = vunpack.c.l.b16 %v2737
    %v2803 = vunpack.c.l.b16 %v2738
    %v2804 = vunpack.c.l.b16 %v2739
    %v2805 = vunpack.c.l.b16 %v2740
    %v2806 = vunpack.c.l.b16 %v2741
    %v2807 = vunpack.c.l.b16 %v2742
    %v2808 = vunpack.c.l.b16 %v2743
    %v2809 = vunpack.c.l.b16 %v2744
    %v2810 = vunpack.c.l.b16 %v2745
    %v2811 = vunpack.c.l.b16 %v2746
    %v2812 = vunpack.c.l.b16 %v2747
    %v2813 = vunpack.c.l.b16 %v2748
    %v2814 = vpack.c.b16 %v2787, %v2786
    %v2815 = vpack.c.b16 %v2789, %v2788
    %v2816 = vpack.c.b16 %v2791, %v2790
    %v2817 = vpack.c.b16 %v2793, %v2792
    %v2818 = vpack.c.b16 %v2795, %v2794
    %v2819 = vpack.c.b16 %v2797, %v2796
    %v2820 = vpack.c.b16 %v2799, %v2798
    %v2821 = vpack.c.b16 %v2801, %v2800
    %v2822 = vpack.c.b16 %v2803, %v2802
    %v2823 = vpack.c.b16 %v2805, %v2804
    %v2824 = vpack.c.b16 %v2807, %v2806
    %v2825 = vpack.c.b16 %v2809, %v2808
    %v2826 = vpack.c.b16 %v2811, %v2810
    %v2827 = vpack.c.b16 %v2813, %v2812
    %v2843 = vsel %vm1278, %v2756, 0
    %2845 = vmatpush.bf16.msra.mxu0 %v2821
    %2846 = vmatpush.bf16.msra.mxu0 %v2820
    %2847 = vmatpush.bf16.msra.mxu0 %v2819
    %2848 = vmatpush.bf16.msra.mxu0 %v2818
    %2849 = vmatpush.bf16.msra.mxu0 %v2817
    %2850 = vmatpush.bf16.msra.mxu0 %v2816
    %2851 = vmatpush.bf16.msra.mxu0 %v2815
    %2852 = vmatpush.bf16.msra.mxu0 %v2814
    %2853 = vmatmul.bf16.gmra.mxu0 %v2755
    %v2854 = vpop.f32.mrf.mxu0
    %v2855 = vadd.f32 0.0, %v2854
    %v2856 = vpop.f32.mrf.mxu0
    %v2857 = vadd.f32 0.0, %v2856
    %2858 = vdwg.mxu0
    %2859 = vmatpush.bf16.msra.mxu0 0
    %2860 = vmatpush.bf16.msra.mxu0 0
    %2861 = vmatpush.bf16.msra.mxu0 %v2827
    %2862 = vmatpush.bf16.msra.mxu0 %v2826
    %2863 = vmatpush.bf16.msra.mxu0 %v2825
    %2864 = vmatpush.bf16.msra.mxu0 %v2824
    %2865 = vmatpush.bf16.msra.mxu0 %v2823
    %2866 = vmatpush.bf16.msra.mxu0 %v2822
    %2867 = vmatmul.bf16.gmra.mxu0 %v2843
    %v2868 = vpop.f32.mrf.mxu0
    %v2869 = vadd.f32 %v2855, %v2868
    %v2870 = vpop.f32.mrf.mxu0
    %v2871 = vadd.f32 %v2857, %v2870
    %2872 = vdwg.mxu0
    %v2873 = vadd.f32 %v2718, %v2869
    %v2874 = vadd.f32 %v2719, %v2871
    %s2875 = scalar_lea.vmem %s5, 448
    %v2876 = vld [vmem:[%s2875] sm:$0xf]
    %v2877 = vld [vmem:[%s2875 + $0x4] sm:$0xf]
    %v2878 = vld [vmem:[%s2875 + $0x8] sm:$0xf]
    %v2879 = vld [vmem:[%s2875 + $0xc] sm:$0xf]
    %v2880 = vld [vmem:[%s2875 + $0x10] sm:$0xf]
    %v2881 = vld [vmem:[%s2875 + $0x14] sm:$0xf]
    %v2882 = vld [vmem:[%s2875 + $0x18] sm:$0xf]
    %v2883 = vld [vmem:[%s2875 + $0x1c] sm:$0xf]
    %v2884 = vld [vmem:[%s2875 + $0x20] sm:$0xf]
    %v2885 = vld [vmem:[%s2875 + $0x24] sm:$0xf]
    %v2886 = vld [vmem:[%s2875 + $0x28] sm:$0xf]
    %v2887 = vld [vmem:[%s2875 + $0x2c] sm:$0xf]
    %v2888 = vld [vmem:[%s2875 + $0x30] sm:$0xf]
    %v2889 = vld [vmem:[%s2875 + $0x34] sm:$0xf]
    %v2890 = vld [vmem:[%s2875 + $0x38] sm:$0xf]
    %v2891 = vld [vmem:[%s2875 + $0x3c] sm:$0xf]
    %v2892 = vld [vmem:[%s2875 + $0x40] sm:$0xf]
    %v2893 = vld [vmem:[%s2875 + $0x44] sm:$0xf]
    %v2894 = vld [vmem:[%s2875 + $0x48] sm:$0xf]
    %v2895 = vld [vmem:[%s2875 + $0x4c] sm:$0xf]
    %v2896 = vld [vmem:[%s2875 + $0x50] sm:$0xf]
    %v2897 = vld [vmem:[%s2875 + $0x54] sm:$0xf]
    %v2898 = vld [vmem:[%s2875 + $0x58] sm:$0xf]
    %v2899 = vld [vmem:[%s2875 + $0x5c] sm:$0xf]
    %v2900 = vld [vmem:[%s2875 + $0x60] sm:$0xf]
    %v2901 = vld [vmem:[%s2875 + $0x64] sm:$0xf]
    %v2902 = vld [vmem:[%s2875 + $0x68] sm:$0xf]
    %v2903 = vld [vmem:[%s2875 + $0x6c] sm:$0xf]
    %v2906 = vunpack.c.l.b16 %v2254
    %v2907 = vunpack.c.h.b16 %v2254
    %v2908 = vunpack.c.l.b16 %v2255
    %v2909 = vunpack.c.h.b16 %v2255
    %v2910 = vpack.c.b16 %v2908, %v2906
    %v2911 = vpack.c.b16 %v2909, %v2907
    %v2941 = vunpack.c.l.b16 %v2876
    %v2942 = vunpack.c.l.b16 %v2877
    %v2943 = vunpack.c.l.b16 %v2878
    %v2944 = vunpack.c.l.b16 %v2879
    %v2945 = vunpack.c.l.b16 %v2880
    %v2946 = vunpack.c.l.b16 %v2881
    %v2947 = vunpack.c.l.b16 %v2882
    %v2948 = vunpack.c.l.b16 %v2883
    %v2949 = vunpack.c.l.b16 %v2884
    %v2950 = vunpack.c.l.b16 %v2885
    %v2951 = vunpack.c.l.b16 %v2886
    %v2952 = vunpack.c.l.b16 %v2887
    %v2953 = vunpack.c.l.b16 %v2888
    %v2954 = vunpack.c.l.b16 %v2889
    %v2955 = vunpack.c.l.b16 %v2890
    %v2956 = vunpack.c.l.b16 %v2891
    %v2957 = vunpack.c.l.b16 %v2892
    %v2958 = vunpack.c.l.b16 %v2893
    %v2959 = vunpack.c.l.b16 %v2894
    %v2960 = vunpack.c.l.b16 %v2895
    %v2961 = vunpack.c.l.b16 %v2896
    %v2962 = vunpack.c.l.b16 %v2897
    %v2963 = vunpack.c.l.b16 %v2898
    %v2964 = vunpack.c.l.b16 %v2899
    %v2965 = vunpack.c.l.b16 %v2900
    %v2966 = vunpack.c.l.b16 %v2901
    %v2967 = vunpack.c.l.b16 %v2902
    %v2968 = vunpack.c.l.b16 %v2903
    %v2969 = vpack.c.b16 %v2942, %v2941
    %v2970 = vpack.c.b16 %v2944, %v2943
    %v2971 = vpack.c.b16 %v2946, %v2945
    %v2972 = vpack.c.b16 %v2948, %v2947
    %v2973 = vpack.c.b16 %v2950, %v2949
    %v2974 = vpack.c.b16 %v2952, %v2951
    %v2975 = vpack.c.b16 %v2954, %v2953
    %v2976 = vpack.c.b16 %v2956, %v2955
    %v2977 = vpack.c.b16 %v2958, %v2957
    %v2978 = vpack.c.b16 %v2960, %v2959
    %v2979 = vpack.c.b16 %v2962, %v2961
    %v2980 = vpack.c.b16 %v2964, %v2963
    %v2981 = vpack.c.b16 %v2966, %v2965
    %v2982 = vpack.c.b16 %v2968, %v2967
    %v2998 = vsel %vm1278, %v2911, 0
    %3000 = vmatpush.bf16.msra.mxu0 %v2976
    %3001 = vmatpush.bf16.msra.mxu0 %v2975
    %3002 = vmatpush.bf16.msra.mxu0 %v2974
    %3003 = vmatpush.bf16.msra.mxu0 %v2973
    %3004 = vmatpush.bf16.msra.mxu0 %v2972
    %3005 = vmatpush.bf16.msra.mxu0 %v2971
    %3006 = vmatpush.bf16.msra.mxu0 %v2970
    %3007 = vmatpush.bf16.msra.mxu0 %v2969
    %3008 = vmatmul.bf16.gmra.mxu0 %v2910
    %v3009 = vpop.f32.mrf.mxu0
    %v3010 = vadd.f32 0.0, %v3009
    %v3011 = vpop.f32.mrf.mxu0
    %v3012 = vadd.f32 0.0, %v3011
    %3013 = vdwg.mxu0
    %3014 = vmatpush.bf16.msra.mxu0 0
    %3015 = vmatpush.bf16.msra.mxu0 0
    %3016 = vmatpush.bf16.msra.mxu0 %v2982
    %3017 = vmatpush.bf16.msra.mxu0 %v2981
    %3018 = vmatpush.bf16.msra.mxu0 %v2980
    %3019 = vmatpush.bf16.msra.mxu0 %v2979
    %3020 = vmatpush.bf16.msra.mxu0 %v2978
    %3021 = vmatpush.bf16.msra.mxu0 %v2977
    %3022 = vmatmul.bf16.gmra.mxu0 %v2998
    %v3023 = vpop.f32.mrf.mxu0
    %v3024 = vadd.f32 %v3010, %v3023
    %v3025 = vpop.f32.mrf.mxu0
    %v3026 = vadd.f32 %v3012, %v3025
    %3027 = vdwg.mxu0
    %v3028 = vadd.f32 %v2873, %v3024
    %v3029 = vadd.f32 %v2874, %v3026
    %s3030 = scalar_lea.vmem %s5, 560
    %v3031 = vld [vmem:[%s3030] sm:$0xf]
    %v3032 = vld [vmem:[%s3030 + $0x4] sm:$0xf]
    %v3033 = vld [vmem:[%s3030 + $0x8] sm:$0xf]
    %v3034 = vld [vmem:[%s3030 + $0xc] sm:$0xf]
    %v3035 = vld [vmem:[%s3030 + $0x10] sm:$0xf]
    %v3036 = vld [vmem:[%s3030 + $0x14] sm:$0xf]
    %v3037 = vld [vmem:[%s3030 + $0x18] sm:$0xf]
    %v3038 = vld [vmem:[%s3030 + $0x1c] sm:$0xf]
    %v3039 = vld [vmem:[%s3030 + $0x20] sm:$0xf]
    %v3040 = vld [vmem:[%s3030 + $0x24] sm:$0xf]
    %v3041 = vld [vmem:[%s3030 + $0x28] sm:$0xf]
    %v3042 = vld [vmem:[%s3030 + $0x2c] sm:$0xf]
    %v3043 = vld [vmem:[%s3030 + $0x30] sm:$0xf]
    %v3044 = vld [vmem:[%s3030 + $0x34] sm:$0xf]
    %v3045 = vld [vmem:[%s3030 + $0x38] sm:$0xf]
    %v3046 = vld [vmem:[%s3030 + $0x3c] sm:$0xf]
    %v3047 = vld [vmem:[%s3030 + $0x40] sm:$0xf]
    %v3048 = vld [vmem:[%s3030 + $0x44] sm:$0xf]
    %v3049 = vld [vmem:[%s3030 + $0x48] sm:$0xf]
    %v3050 = vld [vmem:[%s3030 + $0x4c] sm:$0xf]
    %v3051 = vld [vmem:[%s3030 + $0x50] sm:$0xf]
    %v3052 = vld [vmem:[%s3030 + $0x54] sm:$0xf]
    %v3053 = vld [vmem:[%s3030 + $0x58] sm:$0xf]
    %v3054 = vld [vmem:[%s3030 + $0x5c] sm:$0xf]
    %v3055 = vld [vmem:[%s3030 + $0x60] sm:$0xf]
    %v3056 = vld [vmem:[%s3030 + $0x64] sm:$0xf]
    %v3057 = vld [vmem:[%s3030 + $0x68] sm:$0xf]
    %v3058 = vld [vmem:[%s3030 + $0x6c] sm:$0xf]
    %v3061 = vunpack.c.l.b16 %v2256
    %v3062 = vunpack.c.h.b16 %v2256
    %v3063 = vunpack.c.l.b16 %v2257
    %v3064 = vunpack.c.h.b16 %v2257
    %v3065 = vpack.c.b16 %v3063, %v3061
    %v3066 = vpack.c.b16 %v3064, %v3062
    %v3096 = vunpack.c.l.b16 %v3031
    %v3097 = vunpack.c.l.b16 %v3032
    %v3098 = vunpack.c.l.b16 %v3033
    %v3099 = vunpack.c.l.b16 %v3034
    %v3100 = vunpack.c.l.b16 %v3035
    %v3101 = vunpack.c.l.b16 %v3036
    %v3102 = vunpack.c.l.b16 %v3037
    %v3103 = vunpack.c.l.b16 %v3038
    %v3104 = vunpack.c.l.b16 %v3039
    %v3105 = vunpack.c.l.b16 %v3040
    %v3106 = vunpack.c.l.b16 %v3041
    %v3107 = vunpack.c.l.b16 %v3042
    %v3108 = vunpack.c.l.b16 %v3043
    %v3109 = vunpack.c.l.b16 %v3044
    %v3110 = vunpack.c.l.b16 %v3045
    %v3111 = vunpack.c.l.b16 %v3046
    %v3112 = vunpack.c.l.b16 %v3047
    %v3113 = vunpack.c.l.b16 %v3048
    %v3114 = vunpack.c.l.b16 %v3049
    %v3115 = vunpack.c.l.b16 %v3050
    %v3116 = vunpack.c.l.b16 %v3051
    %v3117 = vunpack.c.l.b16 %v3052
    %v3118 = vunpack.c.l.b16 %v3053
    %v3119 = vunpack.c.l.b16 %v3054
    %v3120 = vunpack.c.l.b16 %v3055
    %v3121 = vunpack.c.l.b16 %v3056
    %v3122 = vunpack.c.l.b16 %v3057
    %v3123 = vunpack.c.l.b16 %v3058
    %v3124 = vpack.c.b16 %v3097, %v3096
    %v3125 = vpack.c.b16 %v3099, %v3098
    %v3126 = vpack.c.b16 %v3101, %v3100
    %v3127 = vpack.c.b16 %v3103, %v3102
    %v3128 = vpack.c.b16 %v3105, %v3104
    %v3129 = vpack.c.b16 %v3107, %v3106
    %v3130 = vpack.c.b16 %v3109, %v3108
    %v3131 = vpack.c.b16 %v3111, %v3110
    %v3132 = vpack.c.b16 %v3113, %v3112
    %v3133 = vpack.c.b16 %v3115, %v3114
    %v3134 = vpack.c.b16 %v3117, %v3116
    %v3135 = vpack.c.b16 %v3119, %v3118
    %v3136 = vpack.c.b16 %v3121, %v3120
    %v3137 = vpack.c.b16 %v3123, %v3122
    %v3153 = vsel %vm1278, %v3066, 0
    %3155 = vmatpush.bf16.msra.mxu0 %v3131
    %3156 = vmatpush.bf16.msra.mxu0 %v3130
    %3157 = vmatpush.bf16.msra.mxu0 %v3129
    %3158 = vmatpush.bf16.msra.mxu0 %v3128
    %3159 = vmatpush.bf16.msra.mxu0 %v3127
    %3160 = vmatpush.bf16.msra.mxu0 %v3126
    %3161 = vmatpush.bf16.msra.mxu0 %v3125
    %3162 = vmatpush.bf16.msra.mxu0 %v3124
    %3163 = vmatmul.bf16.gmra.mxu0 %v3065
    %v3164 = vpop.f32.mrf.mxu0
    %v3165 = vadd.f32 0.0, %v3164
    %v3166 = vpop.f32.mrf.mxu0
    %v3167 = vadd.f32 0.0, %v3166
    %3168 = vdwg.mxu0
    %3169 = vmatpush.bf16.msra.mxu0 0
    %3170 = vmatpush.bf16.msra.mxu0 0
    %3171 = vmatpush.bf16.msra.mxu0 %v3137
    %3172 = vmatpush.bf16.msra.mxu0 %v3136
    %3173 = vmatpush.bf16.msra.mxu0 %v3135
    %3174 = vmatpush.bf16.msra.mxu0 %v3134
    %3175 = vmatpush.bf16.msra.mxu0 %v3133
    %3176 = vmatpush.bf16.msra.mxu0 %v3132
    %3177 = vmatmul.bf16.gmra.mxu0 %v3153
    %v3178 = vpop.f32.mrf.mxu0
    %v3179 = vadd.f32 %v3165, %v3178
    %v3180 = vpop.f32.mrf.mxu0
    %v3181 = vadd.f32 %v3167, %v3180
    %3182 = vdwg.mxu0
    %v3183 = vadd.f32 %v3028, %v3179
    %v3184 = vadd.f32 %v3029, %v3181
    %s3185 = scalar_lea.vmem %s5, 672
    %v3186 = vld [vmem:[%s3185] sm:$0xf]
    %v3187 = vld [vmem:[%s3185 + $0x4] sm:$0xf]
    %v3188 = vld [vmem:[%s3185 + $0x8] sm:$0xf]
    %v3189 = vld [vmem:[%s3185 + $0xc] sm:$0xf]
    %v3190 = vld [vmem:[%s3185 + $0x10] sm:$0xf]
    %v3191 = vld [vmem:[%s3185 + $0x14] sm:$0xf]
    %v3192 = vld [vmem:[%s3185 + $0x18] sm:$0xf]
    %v3193 = vld [vmem:[%s3185 + $0x1c] sm:$0xf]
    %v3194 = vld [vmem:[%s3185 + $0x20] sm:$0xf]
    %v3195 = vld [vmem:[%s3185 + $0x24] sm:$0xf]
    %v3196 = vld [vmem:[%s3185 + $0x28] sm:$0xf]
    %v3197 = vld [vmem:[%s3185 + $0x2c] sm:$0xf]
    %v3198 = vld [vmem:[%s3185 + $0x30] sm:$0xf]
    %v3199 = vld [vmem:[%s3185 + $0x34] sm:$0xf]
    %v3200 = vld [vmem:[%s3185 + $0x38] sm:$0xf]
    %v3201 = vld [vmem:[%s3185 + $0x3c] sm:$0xf]
    %v3202 = vld [vmem:[%s3185 + $0x40] sm:$0xf]
    %v3203 = vld [vmem:[%s3185 + $0x44] sm:$0xf]
    %v3204 = vld [vmem:[%s3185 + $0x48] sm:$0xf]
    %v3205 = vld [vmem:[%s3185 + $0x4c] sm:$0xf]
    %v3206 = vld [vmem:[%s3185 + $0x50] sm:$0xf]
    %v3207 = vld [vmem:[%s3185 + $0x54] sm:$0xf]
    %v3208 = vld [vmem:[%s3185 + $0x58] sm:$0xf]
    %v3209 = vld [vmem:[%s3185 + $0x5c] sm:$0xf]
    %v3210 = vld [vmem:[%s3185 + $0x60] sm:$0xf]
    %v3211 = vld [vmem:[%s3185 + $0x64] sm:$0xf]
    %v3212 = vld [vmem:[%s3185 + $0x68] sm:$0xf]
    %v3213 = vld [vmem:[%s3185 + $0x6c] sm:$0xf]
    %v3216 = vunpack.c.l.b16 %v2258
    %v3217 = vunpack.c.h.b16 %v2258
    %v3218 = vunpack.c.l.b16 %v2259
    %v3219 = vunpack.c.h.b16 %v2259
    %v3220 = vpack.c.b16 %v3218, %v3216
    %v3221 = vpack.c.b16 %v3219, %v3217
    %v3251 = vunpack.c.l.b16 %v3186
    %v3252 = vunpack.c.l.b16 %v3187
    %v3253 = vunpack.c.l.b16 %v3188
    %v3254 = vunpack.c.l.b16 %v3189
    %v3255 = vunpack.c.l.b16 %v3190
    %v3256 = vunpack.c.l.b16 %v3191
    %v3257 = vunpack.c.l.b16 %v3192
    %v3258 = vunpack.c.l.b16 %v3193
    %v3259 = vunpack.c.l.b16 %v3194
    %v3260 = vunpack.c.l.b16 %v3195
    %v3261 = vunpack.c.l.b16 %v3196
    %v3262 = vunpack.c.l.b16 %v3197
    %v3263 = vunpack.c.l.b16 %v3198
    %v3264 = vunpack.c.l.b16 %v3199
    %v3265 = vunpack.c.l.b16 %v3200
    %v3266 = vunpack.c.l.b16 %v3201
    %v3267 = vunpack.c.l.b16 %v3202
    %v3268 = vunpack.c.l.b16 %v3203
    %v3269 = vunpack.c.l.b16 %v3204
    %v3270 = vunpack.c.l.b16 %v3205
    %v3271 = vunpack.c.l.b16 %v3206
    %v3272 = vunpack.c.l.b16 %v3207
    %v3273 = vunpack.c.l.b16 %v3208
    %v3274 = vunpack.c.l.b16 %v3209
    %v3275 = vunpack.c.l.b16 %v3210
    %v3276 = vunpack.c.l.b16 %v3211
    %v3277 = vunpack.c.l.b16 %v3212
    %v3278 = vunpack.c.l.b16 %v3213
    %v3279 = vpack.c.b16 %v3252, %v3251
    %v3280 = vpack.c.b16 %v3254, %v3253
    %v3281 = vpack.c.b16 %v3256, %v3255
    %v3282 = vpack.c.b16 %v3258, %v3257
    %v3283 = vpack.c.b16 %v3260, %v3259
    %v3284 = vpack.c.b16 %v3262, %v3261
    %v3285 = vpack.c.b16 %v3264, %v3263
    %v3286 = vpack.c.b16 %v3266, %v3265
    %v3287 = vpack.c.b16 %v3268, %v3267
    %v3288 = vpack.c.b16 %v3270, %v3269
    %v3289 = vpack.c.b16 %v3272, %v3271
    %v3290 = vpack.c.b16 %v3274, %v3273
    %v3291 = vpack.c.b16 %v3276, %v3275
    %v3292 = vpack.c.b16 %v3278, %v3277
    %v3308 = vsel %vm1278, %v3221, 0
    %3310 = vmatpush.bf16.msra.mxu0 %v3286
    %3311 = vmatpush.bf16.msra.mxu0 %v3285
    %3312 = vmatpush.bf16.msra.mxu0 %v3284
    %3313 = vmatpush.bf16.msra.mxu0 %v3283
    %3314 = vmatpush.bf16.msra.mxu0 %v3282
    %3315 = vmatpush.bf16.msra.mxu0 %v3281
    %3316 = vmatpush.bf16.msra.mxu0 %v3280
    %3317 = vmatpush.bf16.msra.mxu0 %v3279
    %3318 = vmatmul.bf16.gmra.mxu0 %v3220
    %v3319 = vpop.f32.mrf.mxu0
    %v3320 = vadd.f32 0.0, %v3319
    %v3321 = vpop.f32.mrf.mxu0
    %v3322 = vadd.f32 0.0, %v3321
    %3323 = vdwg.mxu0
    %3324 = vmatpush.bf16.msra.mxu0 0
    %3325 = vmatpush.bf16.msra.mxu0 0
    %3326 = vmatpush.bf16.msra.mxu0 %v3292
    %3327 = vmatpush.bf16.msra.mxu0 %v3291
    %3328 = vmatpush.bf16.msra.mxu0 %v3290
    %3329 = vmatpush.bf16.msra.mxu0 %v3289
    %3330 = vmatpush.bf16.msra.mxu0 %v3288
    %3331 = vmatpush.bf16.msra.mxu0 %v3287
    %3332 = vmatmul.bf16.gmra.mxu0 %v3308
    %v3333 = vpop.f32.mrf.mxu0
    %v3334 = vadd.f32 %v3320, %v3333
    %v3335 = vpop.f32.mrf.mxu0
    %v3336 = vadd.f32 %v3322, %v3335
    %3337 = vdwg.mxu0
    %v3338 = vadd.f32 %v3183, %v3334
    %v3339 = vadd.f32 %v3184, %v3336
    %v3340 = vld [vmem:[%s11 + $0x6] sm:$0x1]
    %v3342 = vperm.slane %v3340, 0
    %v3344 = vadd.f32 %v3338, %v3342
    %v3345 = vadd.f32 %v3339, %v3342
    %v3346 = vpack.c.bf16 %v3345, %v3344
    %v3347 = vld [vmem:[%s6] sm:$0xff]
    %v3348 = vld [vmem:[%s6 + $0x8] sm:$0xff]
    %v3349 = vld [vmem:[%s6 + $0x10] sm:$0xff]
    %v3350 = vld [vmem:[%s6 + $0x18] sm:$0xff]
    %v3351 = vld [vmem:[%s6 + $0x20] sm:$0xff]
    %v3352 = vld [vmem:[%s6 + $0x28] sm:$0xff]
    %v3353 = vld [vmem:[%s6 + $0x30] sm:$0xff]
    %v3354 = vld [vmem:[%s6 + $0x38] sm:$0xff]
    %v3363 = vunpack.c.l.b16 %v3347
    %v3364 = vunpack.c.h.b16 %v3347
    %v3365 = vunpack.c.l.b16 %v3348
    %v3366 = vunpack.c.h.b16 %v3348
    %v3367 = vunpack.c.l.b16 %v3349
    %v3368 = vunpack.c.h.b16 %v3349
    %v3369 = vunpack.c.l.b16 %v3350
    %v3370 = vunpack.c.h.b16 %v3350
    %v3371 = vunpack.c.l.b16 %v3351
    %v3372 = vunpack.c.h.b16 %v3351
    %v3373 = vunpack.c.l.b16 %v3352
    %v3374 = vunpack.c.h.b16 %v3352
    %v3375 = vunpack.c.l.b16 %v3353
    %v3376 = vunpack.c.h.b16 %v3353
    %v3377 = vunpack.c.l.b16 %v3354
    %v3378 = vunpack.c.h.b16 %v3354
    %v3379 = vpack.c.b16 %v3365, %v3363
    %v3380 = vpack.c.b16 %v3366, %v3364
    %v3381 = vpack.c.b16 %v3369, %v3367
    %v3382 = vpack.c.b16 %v3370, %v3368
    %v3383 = vpack.c.b16 %v3373, %v3371
    %v3384 = vpack.c.b16 %v3374, %v3372
    %v3385 = vpack.c.b16 %v3377, %v3375
    %v3386 = vpack.c.b16 %v3378, %v3376
    %v3396 = vsel %vm1810, %v3346, 0
    %3398 = vmatpush.bf16.msra.mxu0 0
    %3399 = vmatpush.bf16.msra.mxu0 0
    %3400 = vmatpush.bf16.msra.mxu0 0
    %3401 = vmatpush.bf16.msra.mxu0 0
    %3402 = vmatpush.bf16.msra.mxu0 %v3385
    %3403 = vmatpush.bf16.msra.mxu0 %v3383
    %3404 = vmatpush.bf16.msra.mxu0 %v3381
    %3405 = vmatpush.bf16.msra.mxu0 %v3379
    %3406 = vmatmul.bf16.gmra.mxu0 %v3396
    %v3407 = vpop.f32.mrf.mxu0
    %v3408 = vadd.f32 0.0, %v3407
    %v3409 = vpop.f32.mrf.mxu0
    %v3410 = vadd.f32 0.0, %v3409
    %3411 = vdwg.mxu0
    %3412 = vmatpush.bf16.msra.mxu0 0
    %3413 = vmatpush.bf16.msra.mxu0 0
    %3414 = vmatpush.bf16.msra.mxu0 0
    %3415 = vmatpush.bf16.msra.mxu0 0
    %3416 = vmatpush.bf16.msra.mxu0 %v3386
    %3417 = vmatpush.bf16.msra.mxu0 %v3384
    %3418 = vmatpush.bf16.msra.mxu0 %v3382
    %3419 = vmatpush.bf16.msra.mxu0 %v3380
    %3420 = vmatmul.bf16.gmra.mxu0 %v3396
    %v3421 = vpop.f32.mrf.mxu0
    %v3422 = vadd.f32 0.0, %v3421
    %v3423 = vpop.f32.mrf.mxu0
    %v3424 = vadd.f32 0.0, %v3423
    %3425 = vdwg.mxu0
    %s3426 = scalar_lea.vmem %s6, 64
    %v3427 = vld [vmem:[%s3426] sm:$0xff]
    %v3428 = vld [vmem:[%s3426 + $0x8] sm:$0xff]
    %v3429 = vld [vmem:[%s3426 + $0x10] sm:$0xff]
    %v3430 = vld [vmem:[%s3426 + $0x18] sm:$0xff]
    %v3431 = vld [vmem:[%s3426 + $0x20] sm:$0xff]
    %v3432 = vld [vmem:[%s3426 + $0x28] sm:$0xff]
    %v3433 = vld [vmem:[%s3426 + $0x30] sm:$0xff]
    %v3434 = vld [vmem:[%s3426 + $0x38] sm:$0xff]
    %v3443 = vunpack.c.l.b16 %v3427
    %v3444 = vunpack.c.h.b16 %v3427
    %v3445 = vunpack.c.l.b16 %v3428
    %v3446 = vunpack.c.h.b16 %v3428
    %v3447 = vunpack.c.l.b16 %v3429
    %v3448 = vunpack.c.h.b16 %v3429
    %v3449 = vunpack.c.l.b16 %v3430
    %v3450 = vunpack.c.h.b16 %v3430
    %v3451 = vunpack.c.l.b16 %v3431
    %v3452 = vunpack.c.h.b16 %v3431
    %v3453 = vunpack.c.l.b16 %v3432
    %v3454 = vunpack.c.h.b16 %v3432
    %v3455 = vunpack.c.l.b16 %v3433
    %v3456 = vunpack.c.h.b16 %v3433
    %v3457 = vunpack.c.l.b16 %v3434
    %v3458 = vunpack.c.h.b16 %v3434
    %v3459 = vpack.c.b16 %v3445, %v3443
    %v3460 = vpack.c.b16 %v3446, %v3444
    %v3461 = vpack.c.b16 %v3449, %v3447
    %v3462 = vpack.c.b16 %v3450, %v3448
    %v3463 = vpack.c.b16 %v3453, %v3451
    %v3464 = vpack.c.b16 %v3454, %v3452
    %v3465 = vpack.c.b16 %v3457, %v3455
    %v3466 = vpack.c.b16 %v3458, %v3456
    %3475 = vmatpush.bf16.msra.mxu0 0
    %3476 = vmatpush.bf16.msra.mxu0 0
    %3477 = vmatpush.bf16.msra.mxu0 0
    %3478 = vmatpush.bf16.msra.mxu0 0
    %3479 = vmatpush.bf16.msra.mxu0 %v3465
    %3480 = vmatpush.bf16.msra.mxu0 %v3463
    %3481 = vmatpush.bf16.msra.mxu0 %v3461
    %3482 = vmatpush.bf16.msra.mxu0 %v3459
    %3483 = vmatmul.bf16.gmra.mxu0 %v3396
    %v3484 = vpop.f32.mrf.mxu0
    %v3485 = vadd.f32 0.0, %v3484
    %v3486 = vpop.f32.mrf.mxu0
    %v3487 = vadd.f32 0.0, %v3486
    %3488 = vdwg.mxu0
    %3489 = vmatpush.bf16.msra.mxu0 0
    %3490 = vmatpush.bf16.msra.mxu0 0
    %3491 = vmatpush.bf16.msra.mxu0 0
    %3492 = vmatpush.bf16.msra.mxu0 0
    %3493 = vmatpush.bf16.msra.mxu0 %v3466
    %3494 = vmatpush.bf16.msra.mxu0 %v3464
    %3495 = vmatpush.bf16.msra.mxu0 %v3462
    %3496 = vmatpush.bf16.msra.mxu0 %v3460
    %3497 = vmatmul.bf16.gmra.mxu0 %v3396
    %v3498 = vpop.f32.mrf.mxu0
    %v3499 = vadd.f32 0.0, %v3498
    %v3500 = vpop.f32.mrf.mxu0
    %v3501 = vadd.f32 0.0, %v3500
    %3502 = vdwg.mxu0
    %s3503 = scalar_lea.vmem %s6, 128
    %v3504 = vld [vmem:[%s3503] sm:$0xff]
    %v3505 = vld [vmem:[%s3503 + $0x8] sm:$0xff]
    %v3506 = vld [vmem:[%s3503 + $0x10] sm:$0xff]
    %v3507 = vld [vmem:[%s3503 + $0x18] sm:$0xff]
    %v3508 = vld [vmem:[%s3503 + $0x20] sm:$0xff]
    %v3509 = vld [vmem:[%s3503 + $0x28] sm:$0xff]
    %v3510 = vld [vmem:[%s3503 + $0x30] sm:$0xff]
    %v3511 = vld [vmem:[%s3503 + $0x38] sm:$0xff]
    %v3520 = vunpack.c.l.b16 %v3504
    %v3521 = vunpack.c.h.b16 %v3504
    %v3522 = vunpack.c.l.b16 %v3505
    %v3523 = vunpack.c.h.b16 %v3505
    %v3524 = vunpack.c.l.b16 %v3506
    %v3525 = vunpack.c.h.b16 %v3506
    %v3526 = vunpack.c.l.b16 %v3507
    %v3527 = vunpack.c.h.b16 %v3507
    %v3528 = vunpack.c.l.b16 %v3508
    %v3529 = vunpack.c.h.b16 %v3508
    %v3530 = vunpack.c.l.b16 %v3509
    %v3531 = vunpack.c.h.b16 %v3509
    %v3532 = vunpack.c.l.b16 %v3510
    %v3533 = vunpack.c.h.b16 %v3510
    %v3534 = vunpack.c.l.b16 %v3511
    %v3535 = vunpack.c.h.b16 %v3511
    %v3536 = vpack.c.b16 %v3522, %v3520
    %v3537 = vpack.c.b16 %v3523, %v3521
    %v3538 = vpack.c.b16 %v3526, %v3524
    %v3539 = vpack.c.b16 %v3527, %v3525
    %v3540 = vpack.c.b16 %v3530, %v3528
    %v3541 = vpack.c.b16 %v3531, %v3529
    %v3542 = vpack.c.b16 %v3534, %v3532
    %v3543 = vpack.c.b16 %v3535, %v3533
    %3552 = vmatpush.bf16.msra.mxu0 0
    %3553 = vmatpush.bf16.msra.mxu0 0
    %3554 = vmatpush.bf16.msra.mxu0 0
    %3555 = vmatpush.bf16.msra.mxu0 0
    %3556 = vmatpush.bf16.msra.mxu0 %v3542
    %3557 = vmatpush.bf16.msra.mxu0 %v3540
    %3558 = vmatpush.bf16.msra.mxu0 %v3538
    %3559 = vmatpush.bf16.msra.mxu0 %v3536
    %3560 = vmatmul.bf16.gmra.mxu0 %v3396
    %v3561 = vpop.f32.mrf.mxu0
    %v3562 = vadd.f32 0.0, %v3561
    %v3563 = vpop.f32.mrf.mxu0
    %v3564 = vadd.f32 0.0, %v3563
    %3565 = vdwg.mxu0
    %3566 = vmatpush.bf16.msra.mxu0 0
    %3567 = vmatpush.bf16.msra.mxu0 0
    %3568 = vmatpush.bf16.msra.mxu0 0
    %3569 = vmatpush.bf16.msra.mxu0 0
    %3570 = vmatpush.bf16.msra.mxu0 %v3543
    %3571 = vmatpush.bf16.msra.mxu0 %v3541
    %3572 = vmatpush.bf16.msra.mxu0 %v3539
    %3573 = vmatpush.bf16.msra.mxu0 %v3537
    %3574 = vmatmul.bf16.gmra.mxu0 %v3396
    %v3575 = vpop.f32.mrf.mxu0
    %v3576 = vadd.f32 0.0, %v3575
    %v3577 = vpop.f32.mrf.mxu0
    %v3578 = vadd.f32 0.0, %v3577
    %3579 = vdwg.mxu0
    %s3580 = scalar_lea.vmem %s6, 192
    %v3581 = vld [vmem:[%s3580] sm:$0xff]
    %v3582 = vld [vmem:[%s3580 + $0x8] sm:$0xff]
    %v3583 = vld [vmem:[%s3580 + $0x10] sm:$0xff]
    %v3584 = vld [vmem:[%s3580 + $0x18] sm:$0xff]
    %v3585 = vld [vmem:[%s3580 + $0x20] sm:$0xff]
    %v3586 = vld [vmem:[%s3580 + $0x28] sm:$0xff]
    %v3587 = vld [vmem:[%s3580 + $0x30] sm:$0xff]
    %v3588 = vld [vmem:[%s3580 + $0x38] sm:$0xff]
    %v3597 = vunpack.c.l.b16 %v3581
    %v3598 = vunpack.c.h.b16 %v3581
    %v3599 = vunpack.c.l.b16 %v3582
    %v3600 = vunpack.c.h.b16 %v3582
    %v3601 = vunpack.c.l.b16 %v3583
    %v3602 = vunpack.c.h.b16 %v3583
    %v3603 = vunpack.c.l.b16 %v3584
    %v3604 = vunpack.c.h.b16 %v3584
    %v3605 = vunpack.c.l.b16 %v3585
    %v3606 = vunpack.c.h.b16 %v3585
    %v3607 = vunpack.c.l.b16 %v3586
    %v3608 = vunpack.c.h.b16 %v3586
    %v3609 = vunpack.c.l.b16 %v3587
    %v3610 = vunpack.c.h.b16 %v3587
    %v3611 = vunpack.c.l.b16 %v3588
    %v3612 = vunpack.c.h.b16 %v3588
    %v3613 = vpack.c.b16 %v3599, %v3597
    %v3614 = vpack.c.b16 %v3600, %v3598
    %v3615 = vpack.c.b16 %v3603, %v3601
    %v3616 = vpack.c.b16 %v3604, %v3602
    %v3617 = vpack.c.b16 %v3607, %v3605
    %v3618 = vpack.c.b16 %v3608, %v3606
    %v3619 = vpack.c.b16 %v3611, %v3609
    %v3620 = vpack.c.b16 %v3612, %v3610
    %3629 = vmatpush.bf16.msra.mxu0 0
    %3630 = vmatpush.bf16.msra.mxu0 0
    %3631 = vmatpush.bf16.msra.mxu0 0
    %3632 = vmatpush.bf16.msra.mxu0 0
    %3633 = vmatpush.bf16.msra.mxu0 %v3619
    %3634 = vmatpush.bf16.msra.mxu0 %v3617
    %3635 = vmatpush.bf16.msra.mxu0 %v3615
    %3636 = vmatpush.bf16.msra.mxu0 %v3613
    %3637 = vmatmul.bf16.gmra.mxu0 %v3396
    %v3638 = vpop.f32.mrf.mxu0
    %v3639 = vadd.f32 0.0, %v3638
    %v3640 = vpop.f32.mrf.mxu0
    %v3641 = vadd.f32 0.0, %v3640
    %3642 = vdwg.mxu0
    %3643 = vmatpush.bf16.msra.mxu0 0
    %3644 = vmatpush.bf16.msra.mxu0 0
    %3645 = vmatpush.bf16.msra.mxu0 0
    %3646 = vmatpush.bf16.msra.mxu0 0
    %3647 = vmatpush.bf16.msra.mxu0 %v3620
    %3648 = vmatpush.bf16.msra.mxu0 %v3618
    %3649 = vmatpush.bf16.msra.mxu0 %v3616
    %3650 = vmatpush.bf16.msra.mxu0 %v3614
    %3651 = vmatmul.bf16.gmra.mxu0 %v3396
    %v3652 = vpop.f32.mrf.mxu0
    %v3653 = vadd.f32 0.0, %v3652
    %v3654 = vpop.f32.mrf.mxu0
    %v3655 = vadd.f32 0.0, %v3654
    %3656 = vdwg.mxu0
    %s3657 = scalar_lea.vmem %s6, 256
    %v3658 = vld [vmem:[%s3657] sm:$0xff]
    %v3659 = vld [vmem:[%s3657 + $0x8] sm:$0xff]
    %v3660 = vld [vmem:[%s3657 + $0x10] sm:$0xff]
    %v3661 = vld [vmem:[%s3657 + $0x18] sm:$0xff]
    %v3662 = vld [vmem:[%s3657 + $0x20] sm:$0xff]
    %v3663 = vld [vmem:[%s3657 + $0x28] sm:$0xff]
    %v3664 = vld [vmem:[%s3657 + $0x30] sm:$0xff]
    %v3665 = vld [vmem:[%s3657 + $0x38] sm:$0xff]
    %v3674 = vunpack.c.l.b16 %v3658
    %v3675 = vunpack.c.h.b16 %v3658
    %v3676 = vunpack.c.l.b16 %v3659
    %v3677 = vunpack.c.h.b16 %v3659
    %v3678 = vunpack.c.l.b16 %v3660
    %v3679 = vunpack.c.h.b16 %v3660
    %v3680 = vunpack.c.l.b16 %v3661
    %v3681 = vunpack.c.h.b16 %v3661
    %v3682 = vunpack.c.l.b16 %v3662
    %v3683 = vunpack.c.h.b16 %v3662
    %v3684 = vunpack.c.l.b16 %v3663
    %v3685 = vunpack.c.h.b16 %v3663
    %v3686 = vunpack.c.l.b16 %v3664
    %v3687 = vunpack.c.h.b16 %v3664
    %v3688 = vunpack.c.l.b16 %v3665
    %v3689 = vunpack.c.h.b16 %v3665
    %v3690 = vpack.c.b16 %v3676, %v3674
    %v3691 = vpack.c.b16 %v3677, %v3675
    %v3692 = vpack.c.b16 %v3680, %v3678
    %v3693 = vpack.c.b16 %v3681, %v3679
    %v3694 = vpack.c.b16 %v3684, %v3682
    %v3695 = vpack.c.b16 %v3685, %v3683
    %v3696 = vpack.c.b16 %v3688, %v3686
    %v3697 = vpack.c.b16 %v3689, %v3687
    %3706 = vmatpush.bf16.msra.mxu0 0
    %3707 = vmatpush.bf16.msra.mxu0 0
    %3708 = vmatpush.bf16.msra.mxu0 0
    %3709 = vmatpush.bf16.msra.mxu0 0
    %3710 = vmatpush.bf16.msra.mxu0 %v3696
    %3711 = vmatpush.bf16.msra.mxu0 %v3694
    %3712 = vmatpush.bf16.msra.mxu0 %v3692
    %3713 = vmatpush.bf16.msra.mxu0 %v3690
    %3714 = vmatmul.bf16.gmra.mxu0 %v3396
    %v3715 = vpop.f32.mrf.mxu0
    %v3716 = vadd.f32 0.0, %v3715
    %v3717 = vpop.f32.mrf.mxu0
    %v3718 = vadd.f32 0.0, %v3717
    %3719 = vdwg.mxu0
    %3720 = vmatpush.bf16.msra.mxu0 0
    %3721 = vmatpush.bf16.msra.mxu0 0
    %3722 = vmatpush.bf16.msra.mxu0 0
    %3723 = vmatpush.bf16.msra.mxu0 0
    %3724 = vmatpush.bf16.msra.mxu0 %v3697
    %3725 = vmatpush.bf16.msra.mxu0 %v3695
    %3726 = vmatpush.bf16.msra.mxu0 %v3693
    %3727 = vmatpush.bf16.msra.mxu0 %v3691
    %3728 = vmatmul.bf16.gmra.mxu0 %v3396
    %v3729 = vpop.f32.mrf.mxu0
    %v3730 = vadd.f32 0.0, %v3729
    %v3731 = vpop.f32.mrf.mxu0
    %v3732 = vadd.f32 0.0, %v3731
    %3733 = vdwg.mxu0
    %s3734 = scalar_lea.vmem %s6, 320
    %v3735 = vld [vmem:[%s3734] sm:$0xff]
    %v3736 = vld [vmem:[%s3734 + $0x8] sm:$0xff]
    %v3737 = vld [vmem:[%s3734 + $0x10] sm:$0xff]
    %v3738 = vld [vmem:[%s3734 + $0x18] sm:$0xff]
    %v3739 = vld [vmem:[%s3734 + $0x20] sm:$0xff]
    %v3740 = vld [vmem:[%s3734 + $0x28] sm:$0xff]
    %v3741 = vld [vmem:[%s3734 + $0x30] sm:$0xff]
    %v3742 = vld [vmem:[%s3734 + $0x38] sm:$0xff]
    %v3751 = vunpack.c.l.b16 %v3735
    %v3752 = vunpack.c.h.b16 %v3735
    %v3753 = vunpack.c.l.b16 %v3736
    %v3754 = vunpack.c.h.b16 %v3736
    %v3755 = vunpack.c.l.b16 %v3737
    %v3756 = vunpack.c.h.b16 %v3737
    %v3757 = vunpack.c.l.b16 %v3738
    %v3758 = vunpack.c.h.b16 %v3738
    %v3759 = vunpack.c.l.b16 %v3739
    %v3760 = vunpack.c.h.b16 %v3739
    %v3761 = vunpack.c.l.b16 %v3740
    %v3762 = vunpack.c.h.b16 %v3740
    %v3763 = vunpack.c.l.b16 %v3741
    %v3764 = vunpack.c.h.b16 %v3741
    %v3765 = vunpack.c.l.b16 %v3742
    %v3766 = vunpack.c.h.b16 %v3742
    %v3767 = vpack.c.b16 %v3753, %v3751
    %v3768 = vpack.c.b16 %v3754, %v3752
    %v3769 = vpack.c.b16 %v3757, %v3755
    %v3770 = vpack.c.b16 %v3758, %v3756
    %v3771 = vpack.c.b16 %v3761, %v3759
    %v3772 = vpack.c.b16 %v3762, %v3760
    %v3773 = vpack.c.b16 %v3765, %v3763
    %v3774 = vpack.c.b16 %v3766, %v3764
    %3783 = vmatpush.bf16.msra.mxu0 0
    %3784 = vmatpush.bf16.msra.mxu0 0
    %3785 = vmatpush.bf16.msra.mxu0 0
    %3786 = vmatpush.bf16.msra.mxu0 0
    %3787 = vmatpush.bf16.msra.mxu0 %v3773
    %3788 = vmatpush.bf16.msra.mxu0 %v3771
    %3789 = vmatpush.bf16.msra.mxu0 %v3769
    %3790 = vmatpush.bf16.msra.mxu0 %v3767
    %3791 = vmatmul.bf16.gmra.mxu0 %v3396
    %v3792 = vpop.f32.mrf.mxu0
    %v3793 = vadd.f32 0.0, %v3792
    %v3794 = vpop.f32.mrf.mxu0
    %v3795 = vadd.f32 0.0, %v3794
    %3796 = vdwg.mxu0
    %3797 = vmatpush.bf16.msra.mxu0 0
    %3798 = vmatpush.bf16.msra.mxu0 0
    %3799 = vmatpush.bf16.msra.mxu0 0
    %3800 = vmatpush.bf16.msra.mxu0 0
    %3801 = vmatpush.bf16.msra.mxu0 %v3774
    %3802 = vmatpush.bf16.msra.mxu0 %v3772
    %3803 = vmatpush.bf16.msra.mxu0 %v3770
    %3804 = vmatpush.bf16.msra.mxu0 %v3768
    %3805 = vmatmul.bf16.gmra.mxu0 %v3396
    %v3806 = vpop.f32.mrf.mxu0
    %v3807 = vadd.f32 0.0, %v3806
    %v3808 = vpop.f32.mrf.mxu0
    %v3809 = vadd.f32 0.0, %v3808
    %3810 = vdwg.mxu0
    %s3811 = scalar_lea.vmem %s6, 384
    %v3812 = vld [vmem:[%s3811] sm:$0xff]
    %v3813 = vld [vmem:[%s3811 + $0x8] sm:$0xff]
    %v3814 = vld [vmem:[%s3811 + $0x10] sm:$0xff]
    %v3815 = vld [vmem:[%s3811 + $0x18] sm:$0xff]
    %v3816 = vld [vmem:[%s3811 + $0x20] sm:$0xff]
    %v3817 = vld [vmem:[%s3811 + $0x28] sm:$0xff]
    %v3818 = vld [vmem:[%s3811 + $0x30] sm:$0xff]
    %v3819 = vld [vmem:[%s3811 + $0x38] sm:$0xff]
    %v3828 = vunpack.c.l.b16 %v3812
    %v3829 = vunpack.c.h.b16 %v3812
    %v3830 = vunpack.c.l.b16 %v3813
    %v3831 = vunpack.c.h.b16 %v3813
    %v3832 = vunpack.c.l.b16 %v3814
    %v3833 = vunpack.c.h.b16 %v3814
    %v3834 = vunpack.c.l.b16 %v3815
    %v3835 = vunpack.c.h.b16 %v3815
    %v3836 = vunpack.c.l.b16 %v3816
    %v3837 = vunpack.c.h.b16 %v3816
    %v3838 = vunpack.c.l.b16 %v3817
    %v3839 = vunpack.c.h.b16 %v3817
    %v3840 = vunpack.c.l.b16 %v3818
    %v3841 = vunpack.c.h.b16 %v3818
    %v3842 = vunpack.c.l.b16 %v3819
    %v3843 = vunpack.c.h.b16 %v3819
    %v3844 = vpack.c.b16 %v3830, %v3828
    %v3845 = vpack.c.b16 %v3831, %v3829
    %v3846 = vpack.c.b16 %v3834, %v3832
    %v3847 = vpack.c.b16 %v3835, %v3833
    %v3848 = vpack.c.b16 %v3838, %v3836
    %v3849 = vpack.c.b16 %v3839, %v3837
    %v3850 = vpack.c.b16 %v3842, %v3840
    %v3851 = vpack.c.b16 %v3843, %v3841
    %3860 = vmatpush.bf16.msra.mxu0 0
    %3861 = vmatpush.bf16.msra.mxu0 0
    %3862 = vmatpush.bf16.msra.mxu0 0
    %3863 = vmatpush.bf16.msra.mxu0 0
    %3864 = vmatpush.bf16.msra.mxu0 %v3850
    %3865 = vmatpush.bf16.msra.mxu0 %v3848
    %3866 = vmatpush.bf16.msra.mxu0 %v3846
    %3867 = vmatpush.bf16.msra.mxu0 %v3844
    %3868 = vmatmul.bf16.gmra.mxu0 %v3396
    %v3869 = vpop.f32.mrf.mxu0
    %v3870 = vadd.f32 0.0, %v3869
    %v3871 = vpop.f32.mrf.mxu0
    %v3872 = vadd.f32 0.0, %v3871
    %3873 = vdwg.mxu0
    %3874 = vmatpush.bf16.msra.mxu0 0
    %3875 = vmatpush.bf16.msra.mxu0 0
    %3876 = vmatpush.bf16.msra.mxu0 0
    %3877 = vmatpush.bf16.msra.mxu0 0
    %3878 = vmatpush.bf16.msra.mxu0 %v3851
    %3879 = vmatpush.bf16.msra.mxu0 %v3849
    %3880 = vmatpush.bf16.msra.mxu0 %v3847
    %3881 = vmatpush.bf16.msra.mxu0 %v3845
    %3882 = vmatmul.bf16.gmra.mxu0 %v3396
    %v3883 = vpop.f32.mrf.mxu0
    %v3884 = vadd.f32 0.0, %v3883
    %v3885 = vpop.f32.mrf.mxu0
    %v3886 = vadd.f32 0.0, %v3885
    %3887 = vdwg.mxu0
    %v3888 = vld [vmem:[%s11 + $0x7] sm:$0x3]
    %v3890 = vperm.slane %v3888, 0
    %v3891 = vperm.slane %v3888, 1
    %v3894 = vadd.f32 %v3408, %v3890
    %v3895 = vadd.f32 %v3422, %v3891
    %v3896 = vadd.f32 %v3410, %v3890
    %v3897 = vadd.f32 %v3424, %v3891
    %v3898 = vadd.f32 %v3485, %v3890
    %v3899 = vadd.f32 %v3499, %v3891
    %v3900 = vadd.f32 %v3487, %v3890
    %v3901 = vadd.f32 %v3501, %v3891
    %v3902 = vadd.f32 %v3562, %v3890
    %v3903 = vadd.f32 %v3576, %v3891
    %v3904 = vadd.f32 %v3564, %v3890
    %v3905 = vadd.f32 %v3578, %v3891
    %v3906 = vadd.f32 %v3639, %v3890
    %v3907 = vadd.f32 %v3653, %v3891
    %v3908 = vadd.f32 %v3641, %v3890
    %v3909 = vadd.f32 %v3655, %v3891
    %v3910 = vadd.f32 %v3716, %v3890
    %v3911 = vadd.f32 %v3730, %v3891
    %v3912 = vadd.f32 %v3718, %v3890
    %v3913 = vadd.f32 %v3732, %v3891
    %v3914 = vadd.f32 %v3793, %v3890
    %v3915 = vadd.f32 %v3807, %v3891
    %v3916 = vadd.f32 %v3795, %v3890
    %v3917 = vadd.f32 %v3809, %v3891
    %v3918 = vadd.f32 %v3870, %v3890
    %v3919 = vadd.f32 %v3884, %v3891
    %v3920 = vadd.f32 %v3872, %v3890
    %v3921 = vadd.f32 %v3886, %v3891
    %v3922 = vmax.f32 %v3894, 0.0
    %v3923 = vmax.f32 %v3895, 0.0
    %v3924 = vmax.f32 %v3896, 0.0
    %v3925 = vmax.f32 %v3897, 0.0
    %v3926 = vmax.f32 %v3898, 0.0
    %v3927 = vmax.f32 %v3899, 0.0
    %v3928 = vmax.f32 %v3900, 0.0
    %v3929 = vmax.f32 %v3901, 0.0
    %v3930 = vmax.f32 %v3902, 0.0
    %v3931 = vmax.f32 %v3903, 0.0
    %v3932 = vmax.f32 %v3904, 0.0
    %v3933 = vmax.f32 %v3905, 0.0
    %v3934 = vmax.f32 %v3906, 0.0
    %v3935 = vmax.f32 %v3907, 0.0
    %v3936 = vmax.f32 %v3908, 0.0
    %v3937 = vmax.f32 %v3909, 0.0
    %v3938 = vmax.f32 %v3910, 0.0
    %v3939 = vmax.f32 %v3911, 0.0
    %v3940 = vmax.f32 %v3912, 0.0
    %v3941 = vmax.f32 %v3913, 0.0
    %v3942 = vmax.f32 %v3914, 0.0
    %v3943 = vmax.f32 %v3915, 0.0
    %v3944 = vmax.f32 %v3916, 0.0
    %v3945 = vmax.f32 %v3917, 0.0
    %v3946 = vmax.f32 %v3918, 0.0
    %v3947 = vmax.f32 %v3919, 0.0
    %v3948 = vmax.f32 %v3920, 0.0
    %v3949 = vmax.f32 %v3921, 0.0
    %v3950 = vpack.c.bf16 %v3923, %v3922
    %v3951 = vpack.c.bf16 %v3925, %v3924
    %v3952 = vpack.c.bf16 %v3927, %v3926
    %v3953 = vpack.c.bf16 %v3929, %v3928
    %v3954 = vpack.c.bf16 %v3931, %v3930
    %v3955 = vpack.c.bf16 %v3933, %v3932
    %v3956 = vpack.c.bf16 %v3935, %v3934
    %v3957 = vpack.c.bf16 %v3937, %v3936
    %v3958 = vpack.c.bf16 %v3939, %v3938
    %v3959 = vpack.c.bf16 %v3941, %v3940
    %v3960 = vpack.c.bf16 %v3943, %v3942
    %v3961 = vpack.c.bf16 %v3945, %v3944
    %v3962 = vpack.c.bf16 %v3947, %v3946
    %v3963 = vpack.c.bf16 %v3949, %v3948
    %v3964 = vld [vmem:[%s7] sm:$0xff]
    %v3965 = vld [vmem:[%s7 + $0x8] sm:$0xff]
    %v3966 = vld [vmem:[%s7 + $0x10] sm:$0xff]
    %v3967 = vld [vmem:[%s7 + $0x18] sm:$0xff]
    %v3968 = vld [vmem:[%s7 + $0x20] sm:$0xff]
    %v3969 = vld [vmem:[%s7 + $0x28] sm:$0xff]
    %v3970 = vld [vmem:[%s7 + $0x30] sm:$0xff]
    %v3971 = vld [vmem:[%s7 + $0x38] sm:$0xff]
    %v3972 = vld [vmem:[%s7 + $0x40] sm:$0xff]
    %v3973 = vld [vmem:[%s7 + $0x48] sm:$0xff]
    %v3974 = vld [vmem:[%s7 + $0x50] sm:$0xff]
    %v3975 = vld [vmem:[%s7 + $0x58] sm:$0xff]
    %v3976 = vld [vmem:[%s7 + $0x60] sm:$0xff]
    %v3977 = vld [vmem:[%s7 + $0x68] sm:$0xff]
    %v3978 = vld [vmem:[%s7 + $0x70] sm:$0xff]
    %v3979 = vld [vmem:[%s7 + $0x78] sm:$0xff]
    %v3980 = vld [vmem:[%s7 + $0x80] sm:$0xff]
    %v3981 = vld [vmem:[%s7 + $0x88] sm:$0xff]
    %v3982 = vld [vmem:[%s7 + $0x90] sm:$0xff]
    %v3983 = vld [vmem:[%s7 + $0x98] sm:$0xff]
    %v3984 = vld [vmem:[%s7 + $0xa0] sm:$0xff]
    %v3985 = vld [vmem:[%s7 + $0xa8] sm:$0xff]
    %v3986 = vld [vmem:[%s7 + $0xb0] sm:$0xff]
    %v3987 = vld [vmem:[%s7 + $0xb8] sm:$0xff]
    %v3988 = vld [vmem:[%s7 + $0xc0] sm:$0xff]
    %v3989 = vld [vmem:[%s7 + $0xc8] sm:$0xff]
    %v3990 = vld [vmem:[%s7 + $0xd0] sm:$0xff]
    %v3991 = vld [vmem:[%s7 + $0xd8] sm:$0xff]
    %v3992 = vld [vmem:[%s7 + $0xe0] sm:$0xff]
    %v3993 = vld [vmem:[%s7 + $0xe8] sm:$0xff]
    %v3994 = vld [vmem:[%s7 + $0xf0] sm:$0xff]
    %v3995 = vld [vmem:[%s7 + $0xf8] sm:$0xff]
    %v3996 = vld [vmem:[%s7 + $0x100] sm:$0xff]
    %v3997 = vld [vmem:[%s7 + $0x108] sm:$0xff]
    %v3998 = vld [vmem:[%s7 + $0x110] sm:$0xff]
    %v3999 = vld [vmem:[%s7 + $0x118] sm:$0xff]
    %v4000 = vld [vmem:[%s7 + $0x120] sm:$0xff]
    %v4001 = vld [vmem:[%s7 + $0x128] sm:$0xff]
    %v4002 = vld [vmem:[%s7 + $0x130] sm:$0xff]
    %v4003 = vld [vmem:[%s7 + $0x138] sm:$0xff]
    %v4004 = vld [vmem:[%s7 + $0x140] sm:$0xff]
    %v4005 = vld [vmem:[%s7 + $0x148] sm:$0xff]
    %v4006 = vld [vmem:[%s7 + $0x150] sm:$0xff]
    %v4007 = vld [vmem:[%s7 + $0x158] sm:$0xff]
    %v4008 = vld [vmem:[%s7 + $0x160] sm:$0xff]
    %v4009 = vld [vmem:[%s7 + $0x168] sm:$0xff]
    %v4010 = vld [vmem:[%s7 + $0x170] sm:$0xff]
    %v4011 = vld [vmem:[%s7 + $0x178] sm:$0xff]
    %v4012 = vld [vmem:[%s7 + $0x180] sm:$0xff]
    %v4013 = vld [vmem:[%s7 + $0x188] sm:$0xff]
    %v4014 = vld [vmem:[%s7 + $0x190] sm:$0xff]
    %v4015 = vld [vmem:[%s7 + $0x198] sm:$0xff]
    %v4016 = vld [vmem:[%s7 + $0x1a0] sm:$0xff]
    %v4017 = vld [vmem:[%s7 + $0x1a8] sm:$0xff]
    %v4018 = vld [vmem:[%s7 + $0x1b0] sm:$0xff]
    %v4019 = vld [vmem:[%s7 + $0x1b8] sm:$0xff]
    %v4032 = vunpack.c.l.b16 %v3952
    %v4033 = vunpack.c.h.b16 %v3952
    %v4034 = vunpack.c.l.b16 %v3953
    %v4035 = vunpack.c.h.b16 %v3953
    %v4036 = vunpack.c.l.b16 %v3954
    %v4037 = vunpack.c.h.b16 %v3954
    %v4038 = vunpack.c.l.b16 %v3955
    %v4039 = vunpack.c.h.b16 %v3955
    %v4040 = vunpack.c.l.b16 %v3956
    %v4041 = vunpack.c.h.b16 %v3956
    %v4042 = vunpack.c.l.b16 %v3957
    %v4043 = vunpack.c.h.b16 %v3957
    %v4044 = vunpack.c.l.b16 %v3958
    %v4045 = vunpack.c.h.b16 %v3958
    %v4046 = vunpack.c.l.b16 %v3959
    %v4047 = vunpack.c.h.b16 %v3959
    %v4048 = vunpack.c.l.b16 %v3960
    %v4049 = vunpack.c.h.b16 %v3960
    %v4050 = vunpack.c.l.b16 %v3961
    %v4051 = vunpack.c.h.b16 %v3961
    %v4052 = vunpack.c.l.b16 %v3962
    %v4053 = vunpack.c.h.b16 %v3962
    %v4054 = vunpack.c.l.b16 %v3963
    %v4055 = vunpack.c.h.b16 %v3963
    %v4056 = vpack.c.b16 %v4034, %v4032
    %v4057 = vpack.c.b16 %v4035, %v4033
    %v4058 = vpack.c.b16 %v4038, %v4036
    %v4059 = vpack.c.b16 %v4039, %v4037
    %v4060 = vpack.c.b16 %v4042, %v4040
    %v4061 = vpack.c.b16 %v4043, %v4041
    %v4062 = vpack.c.b16 %v4046, %v4044
    %v4063 = vpack.c.b16 %v4047, %v4045
    %v4064 = vpack.c.b16 %v4050, %v4048
    %v4065 = vpack.c.b16 %v4051, %v4049
    %v4066 = vpack.c.b16 %v4054, %v4052
    %v4067 = vpack.c.b16 %v4055, %v4053
    %v4074 = vld [vmem:[%s8] sm:$0xff]
    %v4075 = vld [vmem:[%s8 + $0x8] sm:$0xff]
    %v4076 = vld [vmem:[%s8 + $0x10] sm:$0xff]
    %v4077 = vld [vmem:[%s8 + $0x18] sm:$0xff]
    %v4078 = vld [vmem:[%s8 + $0x20] sm:$0xff]
    %v4079 = vld [vmem:[%s8 + $0x28] sm:$0xff]
    %v4080 = vld [vmem:[%s8 + $0x30] sm:$0xff]
    %v4081 = vld [vmem:[%s8 + $0x38] sm:$0xff]
    %v4082 = vld [vmem:[%s8 + $0x40] sm:$0xff]
    %v4083 = vld [vmem:[%s8 + $0x48] sm:$0xff]
    %v4084 = vld [vmem:[%s8 + $0x50] sm:$0xff]
    %v4085 = vld [vmem:[%s8 + $0x58] sm:$0xff]
    %v4086 = vld [vmem:[%s8 + $0x60] sm:$0xff]
    %v4087 = vld [vmem:[%s8 + $0x68] sm:$0xff]
    %v4088 = vld [vmem:[%s8 + $0x70] sm:$0xff]
    %v4089 = vld [vmem:[%s8 + $0x78] sm:$0xff]
    %v4090 = vld [vmem:[%s8 + $0x80] sm:$0xff]
    %v4091 = vld [vmem:[%s8 + $0x88] sm:$0xff]
    %v4092 = vld [vmem:[%s8 + $0x90] sm:$0xff]
    %v4093 = vld [vmem:[%s8 + $0x98] sm:$0xff]
    %v4094 = vld [vmem:[%s8 + $0xa0] sm:$0xff]
    %v4095 = vld [vmem:[%s8 + $0xa8] sm:$0xff]
    %v4096 = vld [vmem:[%s8 + $0xb0] sm:$0xff]
    %v4097 = vld [vmem:[%s8 + $0xb8] sm:$0xff]
    %v4098 = vld [vmem:[%s8 + $0xc0] sm:$0xff]
    %v4099 = vld [vmem:[%s8 + $0xc8] sm:$0xff]
    %v4100 = vld [vmem:[%s8 + $0xd0] sm:$0xff]
    %v4101 = vld [vmem:[%s8 + $0xd8] sm:$0xff]
    %v4102 = vld [vmem:[%s8 + $0xe0] sm:$0xff]
    %v4103 = vld [vmem:[%s8 + $0xe8] sm:$0xff]
    %v4104 = vld [vmem:[%s8 + $0xf0] sm:$0xff]
    %v4105 = vld [vmem:[%s8 + $0xf8] sm:$0xff]
    %v4106 = vld [vmem:[%s8 + $0x100] sm:$0xff]
    %v4107 = vld [vmem:[%s8 + $0x108] sm:$0xff]
    %v4108 = vld [vmem:[%s8 + $0x110] sm:$0xff]
    %v4109 = vld [vmem:[%s8 + $0x118] sm:$0xff]
    %v4110 = vld [vmem:[%s8 + $0x120] sm:$0xff]
    %v4111 = vld [vmem:[%s8 + $0x128] sm:$0xff]
    %v4112 = vld [vmem:[%s8 + $0x130] sm:$0xff]
    %v4113 = vld [vmem:[%s8 + $0x138] sm:$0xff]
    %v4114 = vld [vmem:[%s8 + $0x140] sm:$0xff]
    %v4115 = vld [vmem:[%s8 + $0x148] sm:$0xff]
    %v4116 = vld [vmem:[%s8 + $0x150] sm:$0xff]
    %v4117 = vld [vmem:[%s8 + $0x158] sm:$0xff]
    %v4118 = vld [vmem:[%s8 + $0x160] sm:$0xff]
    %v4119 = vld [vmem:[%s8 + $0x168] sm:$0xff]
    %v4120 = vld [vmem:[%s8 + $0x170] sm:$0xff]
    %v4121 = vld [vmem:[%s8 + $0x178] sm:$0xff]
    %v4122 = vld [vmem:[%s8 + $0x180] sm:$0xff]
    %v4123 = vld [vmem:[%s8 + $0x188] sm:$0xff]
    %v4124 = vld [vmem:[%s8 + $0x190] sm:$0xff]
    %v4125 = vld [vmem:[%s8 + $0x198] sm:$0xff]
    %v4126 = vld [vmem:[%s8 + $0x1a0] sm:$0xff]
    %v4127 = vld [vmem:[%s8 + $0x1a8] sm:$0xff]
    %v4128 = vld [vmem:[%s8 + $0x1b0] sm:$0xff]
    %v4129 = vld [vmem:[%s8 + $0x1b8] sm:$0xff]
    %v4186 = vunpack.c.l.b16 %v4074
    %v4187 = vunpack.c.h.b16 %v4074
    %v4188 = vunpack.c.l.b16 %v4075
    %v4189 = vunpack.c.h.b16 %v4075
    %v4190 = vunpack.c.l.b16 %v4076
    %v4191 = vunpack.c.h.b16 %v4076
    %v4192 = vunpack.c.l.b16 %v4077
    %v4193 = vunpack.c.h.b16 %v4077
    %v4194 = vunpack.c.l.b16 %v4078
    %v4195 = vunpack.c.h.b16 %v4078
    %v4196 = vunpack.c.l.b16 %v4079
    %v4197 = vunpack.c.h.b16 %v4079
    %v4198 = vunpack.c.l.b16 %v4080
    %v4199 = vunpack.c.h.b16 %v4080
    %v4200 = vunpack.c.l.b16 %v4081
    %v4201 = vunpack.c.h.b16 %v4081
    %v4202 = vunpack.c.l.b16 %v4082
    %v4203 = vunpack.c.h.b16 %v4082
    %v4204 = vunpack.c.l.b16 %v4083
    %v4205 = vunpack.c.h.b16 %v4083
    %v4206 = vunpack.c.l.b16 %v4084
    %v4207 = vunpack.c.h.b16 %v4084
    %v4208 = vunpack.c.l.b16 %v4085
    %v4209 = vunpack.c.h.b16 %v4085
    %v4210 = vunpack.c.l.b16 %v4086
    %v4211 = vunpack.c.h.b16 %v4086
    %v4212 = vunpack.c.l.b16 %v4087
    %v4213 = vunpack.c.h.b16 %v4087
    %v4214 = vunpack.c.l.b16 %v4088
    %v4215 = vunpack.c.h.b16 %v4088
    %v4216 = vunpack.c.l.b16 %v4089
    %v4217 = vunpack.c.h.b16 %v4089
    %v4218 = vunpack.c.l.b16 %v4090
    %v4219 = vunpack.c.h.b16 %v4090
    %v4220 = vunpack.c.l.b16 %v4091
    %v4221 = vunpack.c.h.b16 %v4091
    %v4222 = vunpack.c.l.b16 %v4092
    %v4223 = vunpack.c.h.b16 %v4092
    %v4224 = vunpack.c.l.b16 %v4093
    %v4225 = vunpack.c.h.b16 %v4093
    %v4226 = vunpack.c.l.b16 %v4094
    %v4227 = vunpack.c.h.b16 %v4094
    %v4228 = vunpack.c.l.b16 %v4095
    %v4229 = vunpack.c.h.b16 %v4095
    %v4230 = vunpack.c.l.b16 %v4096
    %v4231 = vunpack.c.h.b16 %v4096
    %v4232 = vunpack.c.l.b16 %v4097
    %v4233 = vunpack.c.h.b16 %v4097
    %v4234 = vunpack.c.l.b16 %v4098
    %v4235 = vunpack.c.h.b16 %v4098
    %v4236 = vunpack.c.l.b16 %v4099
    %v4237 = vunpack.c.h.b16 %v4099
    %v4238 = vunpack.c.l.b16 %v4100
    %v4239 = vunpack.c.h.b16 %v4100
    %v4240 = vunpack.c.l.b16 %v4101
    %v4241 = vunpack.c.h.b16 %v4101
    %v4242 = vunpack.c.l.b16 %v4102
    %v4243 = vunpack.c.h.b16 %v4102
    %v4244 = vunpack.c.l.b16 %v4103
    %v4245 = vunpack.c.h.b16 %v4103
    %v4246 = vunpack.c.l.b16 %v4104
    %v4247 = vunpack.c.h.b16 %v4104
    %v4248 = vunpack.c.l.b16 %v4105
    %v4249 = vunpack.c.h.b16 %v4105
    %v4250 = vunpack.c.l.b16 %v4106
    %v4251 = vunpack.c.h.b16 %v4106
    %v4252 = vunpack.c.l.b16 %v4107
    %v4253 = vunpack.c.h.b16 %v4107
    %v4254 = vunpack.c.l.b16 %v4108
    %v4255 = vunpack.c.h.b16 %v4108
    %v4256 = vunpack.c.l.b16 %v4109
    %v4257 = vunpack.c.h.b16 %v4109
    %v4258 = vunpack.c.l.b16 %v4110
    %v4259 = vunpack.c.h.b16 %v4110
    %v4260 = vunpack.c.l.b16 %v4111
    %v4261 = vunpack.c.h.b16 %v4111
    %v4262 = vunpack.c.l.b16 %v4112
    %v4263 = vunpack.c.h.b16 %v4112
    %v4264 = vunpack.c.l.b16 %v4113
    %v4265 = vunpack.c.h.b16 %v4113
    %v4266 = vunpack.c.l.b16 %v4114
    %v4267 = vunpack.c.h.b16 %v4114
    %v4268 = vunpack.c.l.b16 %v4115
    %v4269 = vunpack.c.h.b16 %v4115
    %v4270 = vunpack.c.l.b16 %v4116
    %v4271 = vunpack.c.h.b16 %v4116
    %v4272 = vunpack.c.l.b16 %v4117
    %v4273 = vunpack.c.h.b16 %v4117
    %v4274 = vunpack.c.l.b16 %v4118
    %v4275 = vunpack.c.h.b16 %v4118
    %v4276 = vunpack.c.l.b16 %v4119
    %v4277 = vunpack.c.h.b16 %v4119
    %v4278 = vunpack.c.l.b16 %v4120
    %v4279 = vunpack.c.h.b16 %v4120
    %v4280 = vunpack.c.l.b16 %v4121
    %v4281 = vunpack.c.h.b16 %v4121
    %v4282 = vunpack.c.l.b16 %v4122
    %v4283 = vunpack.c.h.b16 %v4122
    %v4284 = vunpack.c.l.b16 %v4123
    %v4285 = vunpack.c.h.b16 %v4123
    %v4286 = vunpack.c.l.b16 %v4124
    %v4287 = vunpack.c.h.b16 %v4124
    %v4288 = vunpack.c.l.b16 %v4125
    %v4289 = vunpack.c.h.b16 %v4125
    %v4290 = vunpack.c.l.b16 %v4126
    %v4291 = vunpack.c.h.b16 %v4126
    %v4292 = vunpack.c.l.b16 %v4127
    %v4293 = vunpack.c.h.b16 %v4127
    %v4294 = vunpack.c.l.b16 %v4128
    %v4295 = vunpack.c.h.b16 %v4128
    %v4296 = vunpack.c.l.b16 %v4129
    %v4297 = vunpack.c.h.b16 %v4129
    %v4298 = vpack.c.b16 %v4190, %v4186
    %v4299 = vpack.c.b16 %v4191, %v4187
    %v4300 = vpack.c.b16 %v4192, %v4188
    %v4301 = vpack.c.b16 %v4193, %v4189
    %v4302 = vpack.c.b16 %v4198, %v4194
    %v4303 = vpack.c.b16 %v4199, %v4195
    %v4304 = vpack.c.b16 %v4200, %v4196
    %v4305 = vpack.c.b16 %v4201, %v4197
    %v4306 = vpack.c.b16 %v4206, %v4202
    %v4307 = vpack.c.b16 %v4207, %v4203
    %v4308 = vpack.c.b16 %v4208, %v4204
    %v4309 = vpack.c.b16 %v4209, %v4205
    %v4310 = vpack.c.b16 %v4214, %v4210
    %v4311 = vpack.c.b16 %v4215, %v4211
    %v4312 = vpack.c.b16 %v4216, %v4212
    %v4313 = vpack.c.b16 %v4217, %v4213
    %v4314 = vpack.c.b16 %v4222, %v4218
    %v4315 = vpack.c.b16 %v4223, %v4219
    %v4316 = vpack.c.b16 %v4224, %v4220
    %v4317 = vpack.c.b16 %v4225, %v4221
    %v4318 = vpack.c.b16 %v4230, %v4226
    %v4319 = vpack.c.b16 %v4231, %v4227
    %v4320 = vpack.c.b16 %v4232, %v4228
    %v4321 = vpack.c.b16 %v4233, %v4229
    %v4322 = vpack.c.b16 %v4238, %v4234
    %v4323 = vpack.c.b16 %v4239, %v4235
    %v4324 = vpack.c.b16 %v4240, %v4236
    %v4325 = vpack.c.b16 %v4241, %v4237
    %v4326 = vpack.c.b16 %v4246, %v4242
    %v4327 = vpack.c.b16 %v4247, %v4243
    %v4328 = vpack.c.b16 %v4248, %v4244
    %v4329 = vpack.c.b16 %v4249, %v4245
    %v4330 = vpack.c.b16 %v4254, %v4250
    %v4331 = vpack.c.b16 %v4255, %v4251
    %v4332 = vpack.c.b16 %v4256, %v4252
    %v4333 = vpack.c.b16 %v4257, %v4253
    %v4334 = vpack.c.b16 %v4262, %v4258
    %v4335 = vpack.c.b16 %v4263, %v4259
    %v4336 = vpack.c.b16 %v4264, %v4260
    %v4337 = vpack.c.b16 %v4265, %v4261
    %v4338 = vpack.c.b16 %v4270, %v4266
    %v4339 = vpack.c.b16 %v4271, %v4267
    %v4340 = vpack.c.b16 %v4272, %v4268
    %v4341 = vpack.c.b16 %v4273, %v4269
    %v4342 = vpack.c.b16 %v4278, %v4274
    %v4343 = vpack.c.b16 %v4279, %v4275
    %v4344 = vpack.c.b16 %v4280, %v4276
    %v4345 = vpack.c.b16 %v4281, %v4277
    %v4346 = vpack.c.b16 %v4286, %v4282
    %v4347 = vpack.c.b16 %v4287, %v4283
    %v4348 = vpack.c.b16 %v4288, %v4284
    %v4349 = vpack.c.b16 %v4289, %v4285
    %v4350 = vpack.c.b16 %v4294, %v4290
    %v4351 = vpack.c.b16 %v4295, %v4291
    %v4352 = vpack.c.b16 %v4296, %v4292
    %v4353 = vpack.c.b16 %v4297, %v4293
    %v4411 = vsel %vm1278, %v4057, 0
    %v4414 = vsel %vm1278, %v4059, 0
    %v4417 = vsel %vm1278, %v4061, 0
    %v4420 = vsel %vm1278, %v4063, 0
    %v4423 = vsel %vm1278, %v4065, 0
    %v4426 = vsel %vm1278, %v4067, 0
    %4428 = vmatpush.bf16.msra.mxu0 %v4326
    %4429 = vmatpush.bf16.msra.mxu0 %v4322
    %4430 = vmatpush.bf16.msra.mxu0 %v4318
    %4431 = vmatpush.bf16.msra.mxu0 %v4314
    %4432 = vmatpush.bf16.msra.mxu0 %v4310
    %4433 = vmatpush.bf16.msra.mxu0 %v4306
    %4434 = vmatpush.bf16.msra.mxu0 %v4302
    %4435 = vmatpush.bf16.msra.mxu0 %v4298
    %4436 = vmatmul.bf16.gmra.mxu0 %v4056
    %v4437 = vpop.f32.mrf.mxu0
    %v4438 = vadd.f32 0.0, %v4437
    %v4439 = vpop.f32.mrf.mxu0
    %v4440 = vadd.f32 0.0, %v4439
    %4441 = vmatmul.bf16.gmra.mxu0 %v4058
    %v4442 = vpop.f32.mrf.mxu0
    %v4443 = vadd.f32 0.0, %v4442
    %v4444 = vpop.f32.mrf.mxu0
    %v4445 = vadd.f32 0.0, %v4444
    %4446 = vmatmul.bf16.gmra.mxu0 %v4060
    %v4447 = vpop.f32.mrf.mxu0
    %v4448 = vadd.f32 0.0, %v4447
    %v4449 = vpop.f32.mrf.mxu0
    %v4450 = vadd.f32 0.0, %v4449
    %4451 = vmatmul.bf16.gmra.mxu0 %v4062
    %v4452 = vpop.f32.mrf.mxu0
    %v4453 = vadd.f32 0.0, %v4452
    %v4454 = vpop.f32.mrf.mxu0
    %v4455 = vadd.f32 0.0, %v4454
    %4456 = vmatmul.bf16.gmra.mxu0 %v4064
    %v4457 = vpop.f32.mrf.mxu0
    %v4458 = vadd.f32 0.0, %v4457
    %v4459 = vpop.f32.mrf.mxu0
    %v4460 = vadd.f32 0.0, %v4459
    %4461 = vmatmul.bf16.gmra.mxu0 %v4066
    %v4462 = vpop.f32.mrf.mxu0
    %v4463 = vadd.f32 0.0, %v4462
    %v4464 = vpop.f32.mrf.mxu0
    %v4465 = vadd.f32 0.0, %v4464
    %4466 = vmatmul.bf16.gmra.mxu0 0
    %v4467 = vpop.f32.mrf.mxu0
    %v4468 = vadd.f32 0.0, %v4467
    %v4469 = vpop.f32.mrf.mxu0
    %v4470 = vadd.f32 0.0, %v4469
    %4471 = vdwg.mxu0
    %4472 = vmatpush.bf16.msra.mxu0 0
    %4473 = vmatpush.bf16.msra.mxu0 0
    %4474 = vmatpush.bf16.msra.mxu0 %v4350
    %4475 = vmatpush.bf16.msra.mxu0 %v4346
    %4476 = vmatpush.bf16.msra.mxu0 %v4342
    %4477 = vmatpush.bf16.msra.mxu0 %v4338
    %4478 = vmatpush.bf16.msra.mxu0 %v4334
    %4479 = vmatpush.bf16.msra.mxu0 %v4330
    %4480 = vmatmul.bf16.gmra.mxu0 %v4411
    %v4481 = vpop.f32.mrf.mxu0
    %v4482 = vadd.f32 %v4438, %v4481
    %v4483 = vpop.f32.mrf.mxu0
    %v4484 = vadd.f32 %v4440, %v4483
    %4485 = vmatmul.bf16.gmra.mxu0 %v4414
    %v4486 = vpop.f32.mrf.mxu0
    %v4487 = vadd.f32 %v4443, %v4486
    %v4488 = vpop.f32.mrf.mxu0
    %v4489 = vadd.f32 %v4445, %v4488
    %4490 = vmatmul.bf16.gmra.mxu0 %v4417
    %v4491 = vpop.f32.mrf.mxu0
    %v4492 = vadd.f32 %v4448, %v4491
    %v4493 = vpop.f32.mrf.mxu0
    %v4494 = vadd.f32 %v4450, %v4493
    %4495 = vmatmul.bf16.gmra.mxu0 %v4420
    %v4496 = vpop.f32.mrf.mxu0
    %v4497 = vadd.f32 %v4453, %v4496
    %v4498 = vpop.f32.mrf.mxu0
    %v4499 = vadd.f32 %v4455, %v4498
    %4500 = vmatmul.bf16.gmra.mxu0 %v4423
    %v4501 = vpop.f32.mrf.mxu0
    %v4502 = vadd.f32 %v4458, %v4501
    %v4503 = vpop.f32.mrf.mxu0
    %v4504 = vadd.f32 %v4460, %v4503
    %4505 = vmatmul.bf16.gmra.mxu0 %v4426
    %v4506 = vpop.f32.mrf.mxu0
    %v4507 = vadd.f32 %v4463, %v4506
    %v4508 = vpop.f32.mrf.mxu0
    %v4509 = vadd.f32 %v4465, %v4508
    %4510 = vmatmul.bf16.gmra.mxu0 %v1279
    %v4511 = vpop.f32.mrf.mxu0
    %v4512 = vadd.f32 %v4468, %v4511
    %v4513 = vpop.f32.mrf.mxu0
    %v4514 = vadd.f32 %v4470, %v4513
    %4515 = vdwg.mxu0
    %4516 = vmatpush.bf16.msra.mxu0 %v4327
    %4517 = vmatpush.bf16.msra.mxu0 %v4323
    %4518 = vmatpush.bf16.msra.mxu0 %v4319
    %4519 = vmatpush.bf16.msra.mxu0 %v4315
    %4520 = vmatpush.bf16.msra.mxu0 %v4311
    %4521 = vmatpush.bf16.msra.mxu0 %v4307
    %4522 = vmatpush.bf16.msra.mxu0 %v4303
    %4523 = vmatpush.bf16.msra.mxu0 %v4299
    %4524 = vmatmul.bf16.gmra.mxu0 %v4056
    %v4525 = vpop.f32.mrf.mxu0
    %v4526 = vadd.f32 0.0, %v4525
    %v4527 = vpop.f32.mrf.mxu0
    %v4528 = vadd.f32 0.0, %v4527
    %4529 = vmatmul.bf16.gmra.mxu0 %v4058
    %v4530 = vpop.f32.mrf.mxu0
    %v4531 = vadd.f32 0.0, %v4530
    %v4532 = vpop.f32.mrf.mxu0
    %v4533 = vadd.f32 0.0, %v4532
    %4534 = vmatmul.bf16.gmra.mxu0 %v4060
    %v4535 = vpop.f32.mrf.mxu0
    %v4536 = vadd.f32 0.0, %v4535
    %v4537 = vpop.f32.mrf.mxu0
    %v4538 = vadd.f32 0.0, %v4537
    %4539 = vmatmul.bf16.gmra.mxu0 %v4062
    %v4540 = vpop.f32.mrf.mxu0
    %v4541 = vadd.f32 0.0, %v4540
    %v4542 = vpop.f32.mrf.mxu0
    %v4543 = vadd.f32 0.0, %v4542
    %4544 = vmatmul.bf16.gmra.mxu0 %v4064
    %v4545 = vpop.f32.mrf.mxu0
    %v4546 = vadd.f32 0.0, %v4545
    %v4547 = vpop.f32.mrf.mxu0
    %v4548 = vadd.f32 0.0, %v4547
    %4549 = vmatmul.bf16.gmra.mxu0 %v4066
    %v4550 = vpop.f32.mrf.mxu0
    %v4551 = vadd.f32 0.0, %v4550
    %v4552 = vpop.f32.mrf.mxu0
    %v4553 = vadd.f32 0.0, %v4552
    %4554 = vmatmul.bf16.gmra.mxu0 0
    %v4555 = vpop.f32.mrf.mxu0
    %v4556 = vadd.f32 0.0, %v4555
    %v4557 = vpop.f32.mrf.mxu0
    %v4558 = vadd.f32 0.0, %v4557
    %4559 = vdwg.mxu0
    %4560 = vmatpush.bf16.msra.mxu0 0
    %4561 = vmatpush.bf16.msra.mxu0 0
    %4562 = vmatpush.bf16.msra.mxu0 %v4351
    %4563 = vmatpush.bf16.msra.mxu0 %v4347
    %4564 = vmatpush.bf16.msra.mxu0 %v4343
    %4565 = vmatpush.bf16.msra.mxu0 %v4339
    %4566 = vmatpush.bf16.msra.mxu0 %v4335
    %4567 = vmatpush.bf16.msra.mxu0 %v4331
    %4568 = vmatmul.bf16.gmra.mxu0 %v4411
    %v4569 = vpop.f32.mrf.mxu0
    %v4570 = vadd.f32 %v4526, %v4569
    %v4571 = vpop.f32.mrf.mxu0
    %v4572 = vadd.f32 %v4528, %v4571
    %4573 = vmatmul.bf16.gmra.mxu0 %v4414
    %v4574 = vpop.f32.mrf.mxu0
    %v4575 = vadd.f32 %v4531, %v4574
    %v4576 = vpop.f32.mrf.mxu0
    %v4577 = vadd.f32 %v4533, %v4576
    %4578 = vmatmul.bf16.gmra.mxu0 %v4417
    %v4579 = vpop.f32.mrf.mxu0
    %v4580 = vadd.f32 %v4536, %v4579
    %v4581 = vpop.f32.mrf.mxu0
    %v4582 = vadd.f32 %v4538, %v4581
    %4583 = vmatmul.bf16.gmra.mxu0 %v4420
    %v4584 = vpop.f32.mrf.mxu0
    %v4585 = vadd.f32 %v4541, %v4584
    %v4586 = vpop.f32.mrf.mxu0
    %v4587 = vadd.f32 %v4543, %v4586
    %4588 = vmatmul.bf16.gmra.mxu0 %v4423
    %v4589 = vpop.f32.mrf.mxu0
    %v4590 = vadd.f32 %v4546, %v4589
    %v4591 = vpop.f32.mrf.mxu0
    %v4592 = vadd.f32 %v4548, %v4591
    %4593 = vmatmul.bf16.gmra.mxu0 %v4426
    %v4594 = vpop.f32.mrf.mxu0
    %v4595 = vadd.f32 %v4551, %v4594
    %v4596 = vpop.f32.mrf.mxu0
    %v4597 = vadd.f32 %v4553, %v4596
    %4598 = vmatmul.bf16.gmra.mxu0 %v1279
    %v4599 = vpop.f32.mrf.mxu0
    %v4600 = vadd.f32 %v4556, %v4599
    %v4601 = vpop.f32.mrf.mxu0
    %v4602 = vadd.f32 %v4558, %v4601
    %4603 = vdwg.mxu0
    %4604 = vmatpush.bf16.msra.mxu0 %v4328
    %4605 = vmatpush.bf16.msra.mxu0 %v4324
    %4606 = vmatpush.bf16.msra.mxu0 %v4320
    %4607 = vmatpush.bf16.msra.mxu0 %v4316
    %4608 = vmatpush.bf16.msra.mxu0 %v4312
    %4609 = vmatpush.bf16.msra.mxu0 %v4308
    %4610 = vmatpush.bf16.msra.mxu0 %v4304
    %4611 = vmatpush.bf16.msra.mxu0 %v4300
    %4612 = vmatmul.bf16.gmra.mxu0 %v4056
    %v4613 = vpop.f32.mrf.mxu0
    %v4614 = vadd.f32 0.0, %v4613
    %v4615 = vpop.f32.mrf.mxu0
    %v4616 = vadd.f32 0.0, %v4615
    %4617 = vmatmul.bf16.gmra.mxu0 %v4058
    %v4618 = vpop.f32.mrf.mxu0
    %v4619 = vadd.f32 0.0, %v4618
    %v4620 = vpop.f32.mrf.mxu0
    %v4621 = vadd.f32 0.0, %v4620
    %4622 = vmatmul.bf16.gmra.mxu0 %v4060
    %v4623 = vpop.f32.mrf.mxu0
    %v4624 = vadd.f32 0.0, %v4623
    %v4625 = vpop.f32.mrf.mxu0
    %v4626 = vadd.f32 0.0, %v4625
    %4627 = vmatmul.bf16.gmra.mxu0 %v4062
    %v4628 = vpop.f32.mrf.mxu0
    %v4629 = vadd.f32 0.0, %v4628
    %v4630 = vpop.f32.mrf.mxu0
    %v4631 = vadd.f32 0.0, %v4630
    %4632 = vmatmul.bf16.gmra.mxu0 %v4064
    %v4633 = vpop.f32.mrf.mxu0
    %v4634 = vadd.f32 0.0, %v4633
    %v4635 = vpop.f32.mrf.mxu0
    %v4636 = vadd.f32 0.0, %v4635
    %4637 = vmatmul.bf16.gmra.mxu0 %v4066
    %v4638 = vpop.f32.mrf.mxu0
    %v4639 = vadd.f32 0.0, %v4638
    %v4640 = vpop.f32.mrf.mxu0
    %v4641 = vadd.f32 0.0, %v4640
    %4642 = vmatmul.bf16.gmra.mxu0 0
    %v4643 = vpop.f32.mrf.mxu0
    %v4644 = vadd.f32 0.0, %v4643
    %v4645 = vpop.f32.mrf.mxu0
    %v4646 = vadd.f32 0.0, %v4645
    %4647 = vdwg.mxu0
    %4648 = vmatpush.bf16.msra.mxu0 0
    %4649 = vmatpush.bf16.msra.mxu0 0
    %4650 = vmatpush.bf16.msra.mxu0 %v4352
    %4651 = vmatpush.bf16.msra.mxu0 %v4348
    %4652 = vmatpush.bf16.msra.mxu0 %v4344
    %4653 = vmatpush.bf16.msra.mxu0 %v4340
    %4654 = vmatpush.bf16.msra.mxu0 %v4336
    %4655 = vmatpush.bf16.msra.mxu0 %v4332
    %4656 = vmatmul.bf16.gmra.mxu0 %v4411
    %v4657 = vpop.f32.mrf.mxu0
    %v4658 = vadd.f32 %v4614, %v4657
    %v4659 = vpop.f32.mrf.mxu0
    %v4660 = vadd.f32 %v4616, %v4659
    %4661 = vmatmul.bf16.gmra.mxu0 %v4414
    %v4662 = vpop.f32.mrf.mxu0
    %v4663 = vadd.f32 %v4619, %v4662
    %v4664 = vpop.f32.mrf.mxu0
    %v4665 = vadd.f32 %v4621, %v4664
    %4666 = vmatmul.bf16.gmra.mxu0 %v4417
    %v4667 = vpop.f32.mrf.mxu0
    %v4668 = vadd.f32 %v4624, %v4667
    %v4669 = vpop.f32.mrf.mxu0
    %v4670 = vadd.f32 %v4626, %v4669
    %4671 = vmatmul.bf16.gmra.mxu0 %v4420
    %v4672 = vpop.f32.mrf.mxu0
    %v4673 = vadd.f32 %v4629, %v4672
    %v4674 = vpop.f32.mrf.mxu0
    %v4675 = vadd.f32 %v4631, %v4674
    %4676 = vmatmul.bf16.gmra.mxu0 %v4423
    %v4677 = vpop.f32.mrf.mxu0
    %v4678 = vadd.f32 %v4634, %v4677
    %v4679 = vpop.f32.mrf.mxu0
    %v4680 = vadd.f32 %v4636, %v4679
    %4681 = vmatmul.bf16.gmra.mxu0 %v4426
    %v4682 = vpop.f32.mrf.mxu0
    %v4683 = vadd.f32 %v4639, %v4682
    %v4684 = vpop.f32.mrf.mxu0
    %v4685 = vadd.f32 %v4641, %v4684
    %4686 = vmatmul.bf16.gmra.mxu0 %v1279
    %v4687 = vpop.f32.mrf.mxu0
    %v4688 = vadd.f32 %v4644, %v4687
    %v4689 = vpop.f32.mrf.mxu0
    %v4690 = vadd.f32 %v4646, %v4689
    %4691 = vdwg.mxu0
    %4692 = vmatpush.bf16.msra.mxu0 %v4329
    %4693 = vmatpush.bf16.msra.mxu0 %v4325
    %4694 = vmatpush.bf16.msra.mxu0 %v4321
    %4695 = vmatpush.bf16.msra.mxu0 %v4317
    %4696 = vmatpush.bf16.msra.mxu0 %v4313
    %4697 = vmatpush.bf16.msra.mxu0 %v4309
    %4698 = vmatpush.bf16.msra.mxu0 %v4305
    %4699 = vmatpush.bf16.msra.mxu0 %v4301
    %4700 = vmatmul.bf16.gmra.mxu0 %v4056
    %v4701 = vpop.f32.mrf.mxu0
    %v4702 = vadd.f32 0.0, %v4701
    %v4703 = vpop.f32.mrf.mxu0
    %v4704 = vadd.f32 0.0, %v4703
    %4705 = vmatmul.bf16.gmra.mxu0 %v4058
    %v4706 = vpop.f32.mrf.mxu0
    %v4707 = vadd.f32 0.0, %v4706
    %v4708 = vpop.f32.mrf.mxu0
    %v4709 = vadd.f32 0.0, %v4708
    %4710 = vmatmul.bf16.gmra.mxu0 %v4060
    %v4711 = vpop.f32.mrf.mxu0
    %v4712 = vadd.f32 0.0, %v4711
    %v4713 = vpop.f32.mrf.mxu0
    %v4714 = vadd.f32 0.0, %v4713
    %4715 = vmatmul.bf16.gmra.mxu0 %v4062
    %v4716 = vpop.f32.mrf.mxu0
    %v4717 = vadd.f32 0.0, %v4716
    %v4718 = vpop.f32.mrf.mxu0
    %v4719 = vadd.f32 0.0, %v4718
    %4720 = vmatmul.bf16.gmra.mxu0 %v4064
    %v4721 = vpop.f32.mrf.mxu0
    %v4722 = vadd.f32 0.0, %v4721
    %v4723 = vpop.f32.mrf.mxu0
    %v4724 = vadd.f32 0.0, %v4723
    %4725 = vmatmul.bf16.gmra.mxu0 %v4066
    %v4726 = vpop.f32.mrf.mxu0
    %v4727 = vadd.f32 0.0, %v4726
    %v4728 = vpop.f32.mrf.mxu0
    %v4729 = vadd.f32 0.0, %v4728
    %4730 = vmatmul.bf16.gmra.mxu0 0
    %v4731 = vpop.f32.mrf.mxu0
    %v4732 = vadd.f32 0.0, %v4731
    %v4733 = vpop.f32.mrf.mxu0
    %v4734 = vadd.f32 0.0, %v4733
    %4735 = vdwg.mxu0
    %4736 = vmatpush.bf16.msra.mxu0 0
    %4737 = vmatpush.bf16.msra.mxu0 0
    %4738 = vmatpush.bf16.msra.mxu0 %v4353
    %4739 = vmatpush.bf16.msra.mxu0 %v4349
    %4740 = vmatpush.bf16.msra.mxu0 %v4345
    %4741 = vmatpush.bf16.msra.mxu0 %v4341
    %4742 = vmatpush.bf16.msra.mxu0 %v4337
    %4743 = vmatpush.bf16.msra.mxu0 %v4333
    %4744 = vmatmul.bf16.gmra.mxu0 %v4411
    %v4745 = vpop.f32.mrf.mxu0
    %v4746 = vadd.f32 %v4702, %v4745
    %v4747 = vpop.f32.mrf.mxu0
    %v4748 = vadd.f32 %v4704, %v4747
    %4749 = vmatmul.bf16.gmra.mxu0 %v4414
    %v4750 = vpop.f32.mrf.mxu0
    %v4751 = vadd.f32 %v4707, %v4750
    %v4752 = vpop.f32.mrf.mxu0
    %v4753 = vadd.f32 %v4709, %v4752
    %4754 = vmatmul.bf16.gmra.mxu0 %v4417
    %v4755 = vpop.f32.mrf.mxu0
    %v4756 = vadd.f32 %v4712, %v4755
    %v4757 = vpop.f32.mrf.mxu0
    %v4758 = vadd.f32 %v4714, %v4757
    %4759 = vmatmul.bf16.gmra.mxu0 %v4420
    %v4760 = vpop.f32.mrf.mxu0
    %v4761 = vadd.f32 %v4717, %v4760
    %v4762 = vpop.f32.mrf.mxu0
    %v4763 = vadd.f32 %v4719, %v4762
    %4764 = vmatmul.bf16.gmra.mxu0 %v4423
    %v4765 = vpop.f32.mrf.mxu0
    %v4766 = vadd.f32 %v4722, %v4765
    %v4767 = vpop.f32.mrf.mxu0
    %v4768 = vadd.f32 %v4724, %v4767
    %4769 = vmatmul.bf16.gmra.mxu0 %v4426
    %v4770 = vpop.f32.mrf.mxu0
    %v4771 = vadd.f32 %v4727, %v4770
    %v4772 = vpop.f32.mrf.mxu0
    %v4773 = vadd.f32 %v4729, %v4772
    %4774 = vmatmul.bf16.gmra.mxu0 %v1279
    %v4775 = vpop.f32.mrf.mxu0
    %v4776 = vadd.f32 %v4732, %v4775
    %v4777 = vpop.f32.mrf.mxu0
    %v4778 = vadd.f32 %v4734, %v4777
    %4779 = vdwg.mxu0
    %v4782 = vunpack.c.l.b16 %v3950
    %v4783 = vunpack.c.h.b16 %v3950
    %v4784 = vunpack.c.l.b16 %v3951
    %v4785 = vunpack.c.h.b16 %v3951
    %v4786 = vpack.c.b16 %v4784, %v4782
    %v4787 = vpack.c.b16 %v4785, %v4783
    %v4845 = vunpack.c.l.b16 %v3964
    %v4846 = vunpack.c.h.b16 %v3964
    %v4847 = vunpack.c.l.b16 %v3965
    %v4848 = vunpack.c.h.b16 %v3965
    %v4849 = vunpack.c.l.b16 %v3966
    %v4850 = vunpack.c.h.b16 %v3966
    %v4851 = vunpack.c.l.b16 %v3967
    %v4852 = vunpack.c.h.b16 %v3967
    %v4853 = vunpack.c.l.b16 %v3968
    %v4854 = vunpack.c.h.b16 %v3968
    %v4855 = vunpack.c.l.b16 %v3969
    %v4856 = vunpack.c.h.b16 %v3969
    %v4857 = vunpack.c.l.b16 %v3970
    %v4858 = vunpack.c.h.b16 %v3970
    %v4859 = vunpack.c.l.b16 %v3971
    %v4860 = vunpack.c.h.b16 %v3971
    %v4861 = vunpack.c.l.b16 %v3972
    %v4862 = vunpack.c.h.b16 %v3972
    %v4863 = vunpack.c.l.b16 %v3973
    %v4864 = vunpack.c.h.b16 %v3973
    %v4865 = vunpack.c.l.b16 %v3974
    %v4866 = vunpack.c.h.b16 %v3974
    %v4867 = vunpack.c.l.b16 %v3975
    %v4868 = vunpack.c.h.b16 %v3975
    %v4869 = vunpack.c.l.b16 %v3976
    %v4870 = vunpack.c.h.b16 %v3976
    %v4871 = vunpack.c.l.b16 %v3977
    %v4872 = vunpack.c.h.b16 %v3977
    %v4873 = vunpack.c.l.b16 %v3978
    %v4874 = vunpack.c.h.b16 %v3978
    %v4875 = vunpack.c.l.b16 %v3979
    %v4876 = vunpack.c.h.b16 %v3979
    %v4877 = vunpack.c.l.b16 %v3980
    %v4878 = vunpack.c.h.b16 %v3980
    %v4879 = vunpack.c.l.b16 %v3981
    %v4880 = vunpack.c.h.b16 %v3981
    %v4881 = vunpack.c.l.b16 %v3982
    %v4882 = vunpack.c.h.b16 %v3982
    %v4883 = vunpack.c.l.b16 %v3983
    %v4884 = vunpack.c.h.b16 %v3983
    %v4885 = vunpack.c.l.b16 %v3984
    %v4886 = vunpack.c.h.b16 %v3984
    %v4887 = vunpack.c.l.b16 %v3985
    %v4888 = vunpack.c.h.b16 %v3985
    %v4889 = vunpack.c.l.b16 %v3986
    %v4890 = vunpack.c.h.b16 %v3986
    %v4891 = vunpack.c.l.b16 %v3987
    %v4892 = vunpack.c.h.b16 %v3987
    %v4893 = vunpack.c.l.b16 %v3988
    %v4894 = vunpack.c.h.b16 %v3988
    %v4895 = vunpack.c.l.b16 %v3989
    %v4896 = vunpack.c.h.b16 %v3989
    %v4897 = vunpack.c.l.b16 %v3990
    %v4898 = vunpack.c.h.b16 %v3990
    %v4899 = vunpack.c.l.b16 %v3991
    %v4900 = vunpack.c.h.b16 %v3991
    %v4901 = vunpack.c.l.b16 %v3992
    %v4902 = vunpack.c.h.b16 %v3992
    %v4903 = vunpack.c.l.b16 %v3993
    %v4904 = vunpack.c.h.b16 %v3993
    %v4905 = vunpack.c.l.b16 %v3994
    %v4906 = vunpack.c.h.b16 %v3994
    %v4907 = vunpack.c.l.b16 %v3995
    %v4908 = vunpack.c.h.b16 %v3995
    %v4909 = vunpack.c.l.b16 %v3996
    %v4910 = vunpack.c.h.b16 %v3996
    %v4911 = vunpack.c.l.b16 %v3997
    %v4912 = vunpack.c.h.b16 %v3997
    %v4913 = vunpack.c.l.b16 %v3998
    %v4914 = vunpack.c.h.b16 %v3998
    %v4915 = vunpack.c.l.b16 %v3999
    %v4916 = vunpack.c.h.b16 %v3999
    %v4917 = vunpack.c.l.b16 %v4000
    %v4918 = vunpack.c.h.b16 %v4000
    %v4919 = vunpack.c.l.b16 %v4001
    %v4920 = vunpack.c.h.b16 %v4001
    %v4921 = vunpack.c.l.b16 %v4002
    %v4922 = vunpack.c.h.b16 %v4002
    %v4923 = vunpack.c.l.b16 %v4003
    %v4924 = vunpack.c.h.b16 %v4003
    %v4925 = vunpack.c.l.b16 %v4004
    %v4926 = vunpack.c.h.b16 %v4004
    %v4927 = vunpack.c.l.b16 %v4005
    %v4928 = vunpack.c.h.b16 %v4005
    %v4929 = vunpack.c.l.b16 %v4006
    %v4930 = vunpack.c.h.b16 %v4006
    %v4931 = vunpack.c.l.b16 %v4007
    %v4932 = vunpack.c.h.b16 %v4007
    %v4933 = vunpack.c.l.b16 %v4008
    %v4934 = vunpack.c.h.b16 %v4008
    %v4935 = vunpack.c.l.b16 %v4009
    %v4936 = vunpack.c.h.b16 %v4009
    %v4937 = vunpack.c.l.b16 %v4010
    %v4938 = vunpack.c.h.b16 %v4010
    %v4939 = vunpack.c.l.b16 %v4011
    %v4940 = vunpack.c.h.b16 %v4011
    %v4941 = vunpack.c.l.b16 %v4012
    %v4942 = vunpack.c.h.b16 %v4012
    %v4943 = vunpack.c.l.b16 %v4013
    %v4944 = vunpack.c.h.b16 %v4013
    %v4945 = vunpack.c.l.b16 %v4014
    %v4946 = vunpack.c.h.b16 %v4014
    %v4947 = vunpack.c.l.b16 %v4015
    %v4948 = vunpack.c.h.b16 %v4015
    %v4949 = vunpack.c.l.b16 %v4016
    %v4950 = vunpack.c.h.b16 %v4016
    %v4951 = vunpack.c.l.b16 %v4017
    %v4952 = vunpack.c.h.b16 %v4017
    %v4953 = vunpack.c.l.b16 %v4018
    %v4954 = vunpack.c.h.b16 %v4018
    %v4955 = vunpack.c.l.b16 %v4019
    %v4956 = vunpack.c.h.b16 %v4019
    %v4957 = vpack.c.b16 %v4849, %v4845
    %v4958 = vpack.c.b16 %v4850, %v4846
    %v4959 = vpack.c.b16 %v4851, %v4847
    %v4960 = vpack.c.b16 %v4852, %v4848
    %v4961 = vpack.c.b16 %v4857, %v4853
    %v4962 = vpack.c.b16 %v4858, %v4854
    %v4963 = vpack.c.b16 %v4859, %v4855
    %v4964 = vpack.c.b16 %v4860, %v4856
    %v4965 = vpack.c.b16 %v4865, %v4861
    %v4966 = vpack.c.b16 %v4866, %v4862
    %v4967 = vpack.c.b16 %v4867, %v4863
    %v4968 = vpack.c.b16 %v4868, %v4864
    %v4969 = vpack.c.b16 %v4873, %v4869
    %v4970 = vpack.c.b16 %v4874, %v4870
    %v4971 = vpack.c.b16 %v4875, %v4871
    %v4972 = vpack.c.b16 %v4876, %v4872
    %v4973 = vpack.c.b16 %v4881, %v4877
    %v4974 = vpack.c.b16 %v4882, %v4878
    %v4975 = vpack.c.b16 %v4883, %v4879
    %v4976 = vpack.c.b16 %v4884, %v4880
    %v4977 = vpack.c.b16 %v4889, %v4885
    %v4978 = vpack.c.b16 %v4890, %v4886
    %v4979 = vpack.c.b16 %v4891, %v4887
    %v4980 = vpack.c.b16 %v4892, %v4888
    %v4981 = vpack.c.b16 %v4897, %v4893
    %v4982 = vpack.c.b16 %v4898, %v4894
    %v4983 = vpack.c.b16 %v4899, %v4895
    %v4984 = vpack.c.b16 %v4900, %v4896
    %v4985 = vpack.c.b16 %v4905, %v4901
    %v4986 = vpack.c.b16 %v4906, %v4902
    %v4987 = vpack.c.b16 %v4907, %v4903
    %v4988 = vpack.c.b16 %v4908, %v4904
    %v4989 = vpack.c.b16 %v4913, %v4909
    %v4990 = vpack.c.b16 %v4914, %v4910
    %v4991 = vpack.c.b16 %v4915, %v4911
    %v4992 = vpack.c.b16 %v4916, %v4912
    %v4993 = vpack.c.b16 %v4921, %v4917
    %v4994 = vpack.c.b16 %v4922, %v4918
    %v4995 = vpack.c.b16 %v4923, %v4919
    %v4996 = vpack.c.b16 %v4924, %v4920
    %v4997 = vpack.c.b16 %v4929, %v4925
    %v4998 = vpack.c.b16 %v4930, %v4926
    %v4999 = vpack.c.b16 %v4931, %v4927
    %v5000 = vpack.c.b16 %v4932, %v4928
    %v5001 = vpack.c.b16 %v4937, %v4933
    %v5002 = vpack.c.b16 %v4938, %v4934
    %v5003 = vpack.c.b16 %v4939, %v4935
    %v5004 = vpack.c.b16 %v4940, %v4936
    %v5005 = vpack.c.b16 %v4945, %v4941
    %v5006 = vpack.c.b16 %v4946, %v4942
    %v5007 = vpack.c.b16 %v4947, %v4943
    %v5008 = vpack.c.b16 %v4948, %v4944
    %v5009 = vpack.c.b16 %v4953, %v4949
    %v5010 = vpack.c.b16 %v4954, %v4950
    %v5011 = vpack.c.b16 %v4955, %v4951
    %v5012 = vpack.c.b16 %v4956, %v4952
    %v5070 = vsel %vm1278, %v4787, 0
    %5072 = vmatpush.bf16.msra.mxu0 %v4985
    %5073 = vmatpush.bf16.msra.mxu0 %v4981
    %5074 = vmatpush.bf16.msra.mxu0 %v4977
    %5075 = vmatpush.bf16.msra.mxu0 %v4973
    %5076 = vmatpush.bf16.msra.mxu0 %v4969
    %5077 = vmatpush.bf16.msra.mxu0 %v4965
    %5078 = vmatpush.bf16.msra.mxu0 %v4961
    %5079 = vmatpush.bf16.msra.mxu0 %v4957
    %5080 = vmatmul.bf16.gmra.mxu0 %v4786
    %v5081 = vpop.f32.mrf.mxu0
    %v5082 = vadd.f32 %v4482, %v5081
    %v5083 = vpop.f32.mrf.mxu0
    %v5084 = vadd.f32 %v4484, %v5083
    %5085 = vmatmul.bf16.gmra.mxu0 %v4056
    %v5086 = vpop.f32.mrf.mxu0
    %v5087 = vadd.f32 %v4487, %v5086
    %v5088 = vpop.f32.mrf.mxu0
    %v5089 = vadd.f32 %v4489, %v5088
    %5090 = vmatmul.bf16.gmra.mxu0 %v4058
    %v5091 = vpop.f32.mrf.mxu0
    %v5092 = vadd.f32 %v4492, %v5091
    %v5093 = vpop.f32.mrf.mxu0
    %v5094 = vadd.f32 %v4494, %v5093
    %5095 = vmatmul.bf16.gmra.mxu0 %v4060
    %v5096 = vpop.f32.mrf.mxu0
    %v5097 = vadd.f32 %v4497, %v5096
    %v5098 = vpop.f32.mrf.mxu0
    %v5099 = vadd.f32 %v4499, %v5098
    %5100 = vmatmul.bf16.gmra.mxu0 %v4062
    %v5101 = vpop.f32.mrf.mxu0
    %v5102 = vadd.f32 %v4502, %v5101
    %v5103 = vpop.f32.mrf.mxu0
    %v5104 = vadd.f32 %v4504, %v5103
    %5105 = vmatmul.bf16.gmra.mxu0 %v4064
    %v5106 = vpop.f32.mrf.mxu0
    %v5107 = vadd.f32 %v4507, %v5106
    %v5108 = vpop.f32.mrf.mxu0
    %v5109 = vadd.f32 %v4509, %v5108
    %5110 = vmatmul.bf16.gmra.mxu0 %v4066
    %v5111 = vpop.f32.mrf.mxu0
    %v5112 = vadd.f32 %v4512, %v5111
    %v5113 = vpop.f32.mrf.mxu0
    %v5114 = vadd.f32 %v4514, %v5113
    %5115 = vdwg.mxu0
    %5116 = vmatpush.bf16.msra.mxu0 0
    %5117 = vmatpush.bf16.msra.mxu0 0
    %5118 = vmatpush.bf16.msra.mxu0 %v5009
    %5119 = vmatpush.bf16.msra.mxu0 %v5005
    %5120 = vmatpush.bf16.msra.mxu0 %v5001
    %5121 = vmatpush.bf16.msra.mxu0 %v4997
    %5122 = vmatpush.bf16.msra.mxu0 %v4993
    %5123 = vmatpush.bf16.msra.mxu0 %v4989
    %5124 = vmatmul.bf16.gmra.mxu0 %v5070
    %v5125 = vpop.f32.mrf.mxu0
    %v5126 = vadd.f32 %v5082, %v5125
    %v5127 = vpop.f32.mrf.mxu0
    %v5128 = vadd.f32 %v5084, %v5127
    %5129 = vmatmul.bf16.gmra.mxu0 %v4411
    %v5130 = vpop.f32.mrf.mxu0
    %v5131 = vadd.f32 %v5087, %v5130
    %v5132 = vpop.f32.mrf.mxu0
    %v5133 = vadd.f32 %v5089, %v5132
    %5134 = vmatmul.bf16.gmra.mxu0 %v4414
    %v5135 = vpop.f32.mrf.mxu0
    %v5136 = vadd.f32 %v5092, %v5135
    %v5137 = vpop.f32.mrf.mxu0
    %v5138 = vadd.f32 %v5094, %v5137
    %5139 = vmatmul.bf16.gmra.mxu0 %v4417
    %v5140 = vpop.f32.mrf.mxu0
    %v5141 = vadd.f32 %v5097, %v5140
    %v5142 = vpop.f32.mrf.mxu0
    %v5143 = vadd.f32 %v5099, %v5142
    %5144 = vmatmul.bf16.gmra.mxu0 %v4420
    %v5145 = vpop.f32.mrf.mxu0
    %v5146 = vadd.f32 %v5102, %v5145
    %v5147 = vpop.f32.mrf.mxu0
    %v5148 = vadd.f32 %v5104, %v5147
    %5149 = vmatmul.bf16.gmra.mxu0 %v4423
    %v5150 = vpop.f32.mrf.mxu0
    %v5151 = vadd.f32 %v5107, %v5150
    %v5152 = vpop.f32.mrf.mxu0
    %v5153 = vadd.f32 %v5109, %v5152
    %5154 = vmatmul.bf16.gmra.mxu0 %v4426
    %v5155 = vpop.f32.mrf.mxu0
    %v5156 = vadd.f32 %v5112, %v5155
    %v5157 = vpop.f32.mrf.mxu0
    %v5158 = vadd.f32 %v5114, %v5157
    %5159 = vdwg.mxu0
    %5160 = vmatpush.bf16.msra.mxu0 %v4986
    %5161 = vmatpush.bf16.msra.mxu0 %v4982
    %5162 = vmatpush.bf16.msra.mxu0 %v4978
    %5163 = vmatpush.bf16.msra.mxu0 %v4974
    %5164 = vmatpush.bf16.msra.mxu0 %v4970
    %5165 = vmatpush.bf16.msra.mxu0 %v4966
    %5166 = vmatpush.bf16.msra.mxu0 %v4962
    %5167 = vmatpush.bf16.msra.mxu0 %v4958
    %5168 = vmatmul.bf16.gmra.mxu0 %v4786
    %v5169 = vpop.f32.mrf.mxu0
    %v5170 = vadd.f32 %v4570, %v5169
    %v5171 = vpop.f32.mrf.mxu0
    %v5172 = vadd.f32 %v4572, %v5171
    %5173 = vmatmul.bf16.gmra.mxu0 %v4056
    %v5174 = vpop.f32.mrf.mxu0
    %v5175 = vadd.f32 %v4575, %v5174
    %v5176 = vpop.f32.mrf.mxu0
    %v5177 = vadd.f32 %v4577, %v5176
    %5178 = vmatmul.bf16.gmra.mxu0 %v4058
    %v5179 = vpop.f32.mrf.mxu0
    %v5180 = vadd.f32 %v4580, %v5179
    %v5181 = vpop.f32.mrf.mxu0
    %v5182 = vadd.f32 %v4582, %v5181
    %5183 = vmatmul.bf16.gmra.mxu0 %v4060
    %v5184 = vpop.f32.mrf.mxu0
    %v5185 = vadd.f32 %v4585, %v5184
    %v5186 = vpop.f32.mrf.mxu0
    %v5187 = vadd.f32 %v4587, %v5186
    %5188 = vmatmul.bf16.gmra.mxu0 %v4062
    %v5189 = vpop.f32.mrf.mxu0
    %v5190 = vadd.f32 %v4590, %v5189
    %v5191 = vpop.f32.mrf.mxu0
    %v5192 = vadd.f32 %v4592, %v5191
    %5193 = vmatmul.bf16.gmra.mxu0 %v4064
    %v5194 = vpop.f32.mrf.mxu0
    %v5195 = vadd.f32 %v4595, %v5194
    %v5196 = vpop.f32.mrf.mxu0
    %v5197 = vadd.f32 %v4597, %v5196
    %5198 = vmatmul.bf16.gmra.mxu0 %v4066
    %v5199 = vpop.f32.mrf.mxu0
    %v5200 = vadd.f32 %v4600, %v5199
    %v5201 = vpop.f32.mrf.mxu0
    %v5202 = vadd.f32 %v4602, %v5201
    %5203 = vdwg.mxu0
    %5204 = vmatpush.bf16.msra.mxu0 0
    %5205 = vmatpush.bf16.msra.mxu0 0
    %5206 = vmatpush.bf16.msra.mxu0 %v5010
    %5207 = vmatpush.bf16.msra.mxu0 %v5006
    %5208 = vmatpush.bf16.msra.mxu0 %v5002
    %5209 = vmatpush.bf16.msra.mxu0 %v4998
    %5210 = vmatpush.bf16.msra.mxu0 %v4994
    %5211 = vmatpush.bf16.msra.mxu0 %v4990
    %5212 = vmatmul.bf16.gmra.mxu0 %v5070
    %v5213 = vpop.f32.mrf.mxu0
    %v5214 = vadd.f32 %v5170, %v5213
    %v5215 = vpop.f32.mrf.mxu0
    %v5216 = vadd.f32 %v5172, %v5215
    %5217 = vmatmul.bf16.gmra.mxu0 %v4411
    %v5218 = vpop.f32.mrf.mxu0
    %v5219 = vadd.f32 %v5175, %v5218
    %v5220 = vpop.f32.mrf.mxu0
    %v5221 = vadd.f32 %v5177, %v5220
    %5222 = vmatmul.bf16.gmra.mxu0 %v4414
    %v5223 = vpop.f32.mrf.mxu0
    %v5224 = vadd.f32 %v5180, %v5223
    %v5225 = vpop.f32.mrf.mxu0
    %v5226 = vadd.f32 %v5182, %v5225
    %5227 = vmatmul.bf16.gmra.mxu0 %v4417
    %v5228 = vpop.f32.mrf.mxu0
    %v5229 = vadd.f32 %v5185, %v5228
    %v5230 = vpop.f32.mrf.mxu0
    %v5231 = vadd.f32 %v5187, %v5230
    %5232 = vmatmul.bf16.gmra.mxu0 %v4420
    %v5233 = vpop.f32.mrf.mxu0
    %v5234 = vadd.f32 %v5190, %v5233
    %v5235 = vpop.f32.mrf.mxu0
    %v5236 = vadd.f32 %v5192, %v5235
    %5237 = vmatmul.bf16.gmra.mxu0 %v4423
    %v5238 = vpop.f32.mrf.mxu0
    %v5239 = vadd.f32 %v5195, %v5238
    %v5240 = vpop.f32.mrf.mxu0
    %v5241 = vadd.f32 %v5197, %v5240
    %5242 = vmatmul.bf16.gmra.mxu0 %v4426
    %v5243 = vpop.f32.mrf.mxu0
    %v5244 = vadd.f32 %v5200, %v5243
    %v5245 = vpop.f32.mrf.mxu0
    %v5246 = vadd.f32 %v5202, %v5245
    %5247 = vdwg.mxu0
    %5248 = vmatpush.bf16.msra.mxu0 %v4987
    %5249 = vmatpush.bf16.msra.mxu0 %v4983
    %5250 = vmatpush.bf16.msra.mxu0 %v4979
    %5251 = vmatpush.bf16.msra.mxu0 %v4975
    %5252 = vmatpush.bf16.msra.mxu0 %v4971
    %5253 = vmatpush.bf16.msra.mxu0 %v4967
    %5254 = vmatpush.bf16.msra.mxu0 %v4963
    %5255 = vmatpush.bf16.msra.mxu0 %v4959
    %5256 = vmatmul.bf16.gmra.mxu0 %v4786
    %v5257 = vpop.f32.mrf.mxu0
    %v5258 = vadd.f32 %v4658, %v5257
    %v5259 = vpop.f32.mrf.mxu0
    %v5260 = vadd.f32 %v4660, %v5259
    %5261 = vmatmul.bf16.gmra.mxu0 %v4056
    %v5262 = vpop.f32.mrf.mxu0
    %v5263 = vadd.f32 %v4663, %v5262
    %v5264 = vpop.f32.mrf.mxu0
    %v5265 = vadd.f32 %v4665, %v5264
    %5266 = vmatmul.bf16.gmra.mxu0 %v4058
    %v5267 = vpop.f32.mrf.mxu0
    %v5268 = vadd.f32 %v4668, %v5267
    %v5269 = vpop.f32.mrf.mxu0
    %v5270 = vadd.f32 %v4670, %v5269
    %5271 = vmatmul.bf16.gmra.mxu0 %v4060
    %v5272 = vpop.f32.mrf.mxu0
    %v5273 = vadd.f32 %v4673, %v5272
    %v5274 = vpop.f32.mrf.mxu0
    %v5275 = vadd.f32 %v4675, %v5274
    %5276 = vmatmul.bf16.gmra.mxu0 %v4062
    %v5277 = vpop.f32.mrf.mxu0
    %v5278 = vadd.f32 %v4678, %v5277
    %v5279 = vpop.f32.mrf.mxu0
    %v5280 = vadd.f32 %v4680, %v5279
    %5281 = vmatmul.bf16.gmra.mxu0 %v4064
    %v5282 = vpop.f32.mrf.mxu0
    %v5283 = vadd.f32 %v4683, %v5282
    %v5284 = vpop.f32.mrf.mxu0
    %v5285 = vadd.f32 %v4685, %v5284
    %5286 = vmatmul.bf16.gmra.mxu0 %v4066
    %v5287 = vpop.f32.mrf.mxu0
    %v5288 = vadd.f32 %v4688, %v5287
    %v5289 = vpop.f32.mrf.mxu0
    %v5290 = vadd.f32 %v4690, %v5289
    %5291 = vdwg.mxu0
    %5292 = vmatpush.bf16.msra.mxu0 0
    %5293 = vmatpush.bf16.msra.mxu0 0
    %5294 = vmatpush.bf16.msra.mxu0 %v5011
    %5295 = vmatpush.bf16.msra.mxu0 %v5007
    %5296 = vmatpush.bf16.msra.mxu0 %v5003
    %5297 = vmatpush.bf16.msra.mxu0 %v4999
    %5298 = vmatpush.bf16.msra.mxu0 %v4995
    %5299 = vmatpush.bf16.msra.mxu0 %v4991
    %5300 = vmatmul.bf16.gmra.mxu0 %v5070
    %v5301 = vpop.f32.mrf.mxu0
    %v5302 = vadd.f32 %v5258, %v5301
    %v5303 = vpop.f32.mrf.mxu0
    %v5304 = vadd.f32 %v5260, %v5303
    %5305 = vmatmul.bf16.gmra.mxu0 %v4411
    %v5306 = vpop.f32.mrf.mxu0
    %v5307 = vadd.f32 %v5263, %v5306
    %v5308 = vpop.f32.mrf.mxu0
    %v5309 = vadd.f32 %v5265, %v5308
    %5310 = vmatmul.bf16.gmra.mxu0 %v4414
    %v5311 = vpop.f32.mrf.mxu0
    %v5312 = vadd.f32 %v5268, %v5311
    %v5313 = vpop.f32.mrf.mxu0
    %v5314 = vadd.f32 %v5270, %v5313
    %5315 = vmatmul.bf16.gmra.mxu0 %v4417
    %v5316 = vpop.f32.mrf.mxu0
    %v5317 = vadd.f32 %v5273, %v5316
    %v5318 = vpop.f32.mrf.mxu0
    %v5319 = vadd.f32 %v5275, %v5318
    %5320 = vmatmul.bf16.gmra.mxu0 %v4420
    %v5321 = vpop.f32.mrf.mxu0
    %v5322 = vadd.f32 %v5278, %v5321
    %v5323 = vpop.f32.mrf.mxu0
    %v5324 = vadd.f32 %v5280, %v5323
    %5325 = vmatmul.bf16.gmra.mxu0 %v4423
    %v5326 = vpop.f32.mrf.mxu0
    %v5327 = vadd.f32 %v5283, %v5326
    %v5328 = vpop.f32.mrf.mxu0
    %v5329 = vadd.f32 %v5285, %v5328
    %5330 = vmatmul.bf16.gmra.mxu0 %v4426
    %v5331 = vpop.f32.mrf.mxu0
    %v5332 = vadd.f32 %v5288, %v5331
    %v5333 = vpop.f32.mrf.mxu0
    %v5334 = vadd.f32 %v5290, %v5333
    %5335 = vdwg.mxu0
    %5336 = vmatpush.bf16.msra.mxu0 %v4988
    %5337 = vmatpush.bf16.msra.mxu0 %v4984
    %5338 = vmatpush.bf16.msra.mxu0 %v4980
    %5339 = vmatpush.bf16.msra.mxu0 %v4976
    %5340 = vmatpush.bf16.msra.mxu0 %v4972
    %5341 = vmatpush.bf16.msra.mxu0 %v4968
    %5342 = vmatpush.bf16.msra.mxu0 %v4964
    %5343 = vmatpush.bf16.msra.mxu0 %v4960
    %5344 = vmatmul.bf16.gmra.mxu0 %v4786
    %v5345 = vpop.f32.mrf.mxu0
    %v5346 = vadd.f32 %v4746, %v5345
    %v5347 = vpop.f32.mrf.mxu0
    %v5348 = vadd.f32 %v4748, %v5347
    %5349 = vmatmul.bf16.gmra.mxu0 %v4056
    %v5350 = vpop.f32.mrf.mxu0
    %v5351 = vadd.f32 %v4751, %v5350
    %v5352 = vpop.f32.mrf.mxu0
    %v5353 = vadd.f32 %v4753, %v5352
    %5354 = vmatmul.bf16.gmra.mxu0 %v4058
    %v5355 = vpop.f32.mrf.mxu0
    %v5356 = vadd.f32 %v4756, %v5355
    %v5357 = vpop.f32.mrf.mxu0
    %v5358 = vadd.f32 %v4758, %v5357
    %5359 = vmatmul.bf16.gmra.mxu0 %v4060
    %v5360 = vpop.f32.mrf.mxu0
    %v5361 = vadd.f32 %v4761, %v5360
    %v5362 = vpop.f32.mrf.mxu0
    %v5363 = vadd.f32 %v4763, %v5362
    %5364 = vmatmul.bf16.gmra.mxu0 %v4062
    %v5365 = vpop.f32.mrf.mxu0
    %v5366 = vadd.f32 %v4766, %v5365
    %v5367 = vpop.f32.mrf.mxu0
    %v5368 = vadd.f32 %v4768, %v5367
    %5369 = vmatmul.bf16.gmra.mxu0 %v4064
    %v5370 = vpop.f32.mrf.mxu0
    %v5371 = vadd.f32 %v4771, %v5370
    %v5372 = vpop.f32.mrf.mxu0
    %v5373 = vadd.f32 %v4773, %v5372
    %5374 = vmatmul.bf16.gmra.mxu0 %v4066
    %v5375 = vpop.f32.mrf.mxu0
    %v5376 = vadd.f32 %v4776, %v5375
    %v5377 = vpop.f32.mrf.mxu0
    %v5378 = vadd.f32 %v4778, %v5377
    %5379 = vdwg.mxu0
    %5380 = vmatpush.bf16.msra.mxu0 0
    %5381 = vmatpush.bf16.msra.mxu0 0
    %5382 = vmatpush.bf16.msra.mxu0 %v5012
    %5383 = vmatpush.bf16.msra.mxu0 %v5008
    %5384 = vmatpush.bf16.msra.mxu0 %v5004
    %5385 = vmatpush.bf16.msra.mxu0 %v5000
    %5386 = vmatpush.bf16.msra.mxu0 %v4996
    %5387 = vmatpush.bf16.msra.mxu0 %v4992
    %5388 = vmatmul.bf16.gmra.mxu0 %v5070
    %v5389 = vpop.f32.mrf.mxu0
    %v5390 = vadd.f32 %v5346, %v5389
    %v5391 = vpop.f32.mrf.mxu0
    %v5392 = vadd.f32 %v5348, %v5391
    %5393 = vmatmul.bf16.gmra.mxu0 %v4411
    %v5394 = vpop.f32.mrf.mxu0
    %v5395 = vadd.f32 %v5351, %v5394
    %v5396 = vpop.f32.mrf.mxu0
    %v5397 = vadd.f32 %v5353, %v5396
    %5398 = vmatmul.bf16.gmra.mxu0 %v4414
    %v5399 = vpop.f32.mrf.mxu0
    %v5400 = vadd.f32 %v5356, %v5399
    %v5401 = vpop.f32.mrf.mxu0
    %v5402 = vadd.f32 %v5358, %v5401
    %5403 = vmatmul.bf16.gmra.mxu0 %v4417
    %v5404 = vpop.f32.mrf.mxu0
    %v5405 = vadd.f32 %v5361, %v5404
    %v5406 = vpop.f32.mrf.mxu0
    %v5407 = vadd.f32 %v5363, %v5406
    %5408 = vmatmul.bf16.gmra.mxu0 %v4420
    %v5409 = vpop.f32.mrf.mxu0
    %v5410 = vadd.f32 %v5366, %v5409
    %v5411 = vpop.f32.mrf.mxu0
    %v5412 = vadd.f32 %v5368, %v5411
    %5413 = vmatmul.bf16.gmra.mxu0 %v4423
    %v5414 = vpop.f32.mrf.mxu0
    %v5415 = vadd.f32 %v5371, %v5414
    %v5416 = vpop.f32.mrf.mxu0
    %v5417 = vadd.f32 %v5373, %v5416
    %5418 = vmatmul.bf16.gmra.mxu0 %v4426
    %v5419 = vpop.f32.mrf.mxu0
    %v5420 = vadd.f32 %v5376, %v5419
    %v5421 = vpop.f32.mrf.mxu0
    %v5422 = vadd.f32 %v5378, %v5421
    %5423 = vdwg.mxu0
    %v5424 = vld [vmem:[%s11 + $0x9] sm:$0xf]
    %v5426 = vperm.slane %v5424, 0
    %v5427 = vperm.slane %v5424, 1
    %v5428 = vperm.slane %v5424, 2
    %v5429 = vperm.slane %v5424, 3
    %v5434 = vadd.f32 %v5126, %v5426
    %v5435 = vadd.f32 %v5214, %v5427
    %v5436 = vadd.f32 %v5302, %v5428
    %v5437 = vadd.f32 %v5390, %v5429
    %v5438 = vadd.f32 %v5128, %v5426
    %v5439 = vadd.f32 %v5216, %v5427
    %v5440 = vadd.f32 %v5304, %v5428
    %v5441 = vadd.f32 %v5392, %v5429
    %v5442 = vadd.f32 %v5131, %v5426
    %v5443 = vadd.f32 %v5219, %v5427
    %v5444 = vadd.f32 %v5307, %v5428
    %v5445 = vadd.f32 %v5395, %v5429
    %v5446 = vadd.f32 %v5133, %v5426
    %v5447 = vadd.f32 %v5221, %v5427
    %v5448 = vadd.f32 %v5309, %v5428
    %v5449 = vadd.f32 %v5397, %v5429
    %v5450 = vadd.f32 %v5136, %v5426
    %v5451 = vadd.f32 %v5224, %v5427
    %v5452 = vadd.f32 %v5312, %v5428
    %v5453 = vadd.f32 %v5400, %v5429
    %v5454 = vadd.f32 %v5138, %v5426
    %v5455 = vadd.f32 %v5226, %v5427
    %v5456 = vadd.f32 %v5314, %v5428
    %v5457 = vadd.f32 %v5402, %v5429
    %v5458 = vadd.f32 %v5141, %v5426
    %v5459 = vadd.f32 %v5229, %v5427
    %v5460 = vadd.f32 %v5317, %v5428
    %v5461 = vadd.f32 %v5405, %v5429
    %v5462 = vadd.f32 %v5143, %v5426
    %v5463 = vadd.f32 %v5231, %v5427
    %v5464 = vadd.f32 %v5319, %v5428
    %v5465 = vadd.f32 %v5407, %v5429
    %v5466 = vadd.f32 %v5146, %v5426
    %v5467 = vadd.f32 %v5234, %v5427
    %v5468 = vadd.f32 %v5322, %v5428
    %v5469 = vadd.f32 %v5410, %v5429
    %v5470 = vadd.f32 %v5148, %v5426
    %v5471 = vadd.f32 %v5236, %v5427
    %v5472 = vadd.f32 %v5324, %v5428
    %v5473 = vadd.f32 %v5412, %v5429
    %v5474 = vadd.f32 %v5151, %v5426
    %v5475 = vadd.f32 %v5239, %v5427
    %v5476 = vadd.f32 %v5327, %v5428
    %v5477 = vadd.f32 %v5415, %v5429
    %v5478 = vadd.f32 %v5153, %v5426
    %v5479 = vadd.f32 %v5241, %v5427
    %v5480 = vadd.f32 %v5329, %v5428
    %v5481 = vadd.f32 %v5417, %v5429
    %v5482 = vadd.f32 %v5156, %v5426
    %v5483 = vadd.f32 %v5244, %v5427
    %v5484 = vadd.f32 %v5332, %v5428
    %v5485 = vadd.f32 %v5420, %v5429
    %v5486 = vadd.f32 %v5158, %v5426
    %v5487 = vadd.f32 %v5246, %v5427
    %v5488 = vadd.f32 %v5334, %v5428
    %v5489 = vadd.f32 %v5422, %v5429
    %v5490 = vmax.f32 %v5434, 0.0
    %v5491 = vmax.f32 %v5435, 0.0
    %v5492 = vmax.f32 %v5436, 0.0
    %v5493 = vmax.f32 %v5437, 0.0
    %v5494 = vmax.f32 %v5438, 0.0
    %v5495 = vmax.f32 %v5439, 0.0
    %v5496 = vmax.f32 %v5440, 0.0
    %v5497 = vmax.f32 %v5441, 0.0
    %v5498 = vmax.f32 %v5442, 0.0
    %v5499 = vmax.f32 %v5443, 0.0
    %v5500 = vmax.f32 %v5444, 0.0
    %v5501 = vmax.f32 %v5445, 0.0
    %v5502 = vmax.f32 %v5446, 0.0
    %v5503 = vmax.f32 %v5447, 0.0
    %v5504 = vmax.f32 %v5448, 0.0
    %v5505 = vmax.f32 %v5449, 0.0
    %v5506 = vmax.f32 %v5450, 0.0
    %v5507 = vmax.f32 %v5451, 0.0
    %v5508 = vmax.f32 %v5452, 0.0
    %v5509 = vmax.f32 %v5453, 0.0
    %v5510 = vmax.f32 %v5454, 0.0
    %v5511 = vmax.f32 %v5455, 0.0
    %v5512 = vmax.f32 %v5456, 0.0
    %v5513 = vmax.f32 %v5457, 0.0
    %v5514 = vmax.f32 %v5458, 0.0
    %v5515 = vmax.f32 %v5459, 0.0
    %v5516 = vmax.f32 %v5460, 0.0
    %v5517 = vmax.f32 %v5461, 0.0
    %v5518 = vmax.f32 %v5462, 0.0
    %v5519 = vmax.f32 %v5463, 0.0
    %v5520 = vmax.f32 %v5464, 0.0
    %v5521 = vmax.f32 %v5465, 0.0
    %v5522 = vmax.f32 %v5466, 0.0
    %v5523 = vmax.f32 %v5467, 0.0
    %v5524 = vmax.f32 %v5468, 0.0
    %v5525 = vmax.f32 %v5469, 0.0
    %v5526 = vmax.f32 %v5470, 0.0
    %v5527 = vmax.f32 %v5471, 0.0
    %v5528 = vmax.f32 %v5472, 0.0
    %v5529 = vmax.f32 %v5473, 0.0
    %v5530 = vmax.f32 %v5474, 0.0
    %v5531 = vmax.f32 %v5475, 0.0
    %v5532 = vmax.f32 %v5476, 0.0
    %v5533 = vmax.f32 %v5477, 0.0
    %v5534 = vmax.f32 %v5478, 0.0
    %v5535 = vmax.f32 %v5479, 0.0
    %v5536 = vmax.f32 %v5480, 0.0
    %v5537 = vmax.f32 %v5481, 0.0
    %v5538 = vmax.f32 %v5482, 0.0
    %v5539 = vmax.f32 %v5483, 0.0
    %v5540 = vmax.f32 %v5484, 0.0
    %v5541 = vmax.f32 %v5485, 0.0
    %v5542 = vmax.f32 %v5486, 0.0
    %v5543 = vmax.f32 %v5487, 0.0
    %v5544 = vmax.f32 %v5488, 0.0
    %v5545 = vmax.f32 %v5489, 0.0
    %v5546 = vpack.c.bf16 %v5491, %v5490
    %v5547 = vpack.c.bf16 %v5493, %v5492
    %v5548 = vpack.c.bf16 %v5495, %v5494
    %v5549 = vpack.c.bf16 %v5497, %v5496
    %v5550 = vpack.c.bf16 %v5499, %v5498
    %v5551 = vpack.c.bf16 %v5501, %v5500
    %v5552 = vpack.c.bf16 %v5503, %v5502
    %v5553 = vpack.c.bf16 %v5505, %v5504
    %v5554 = vpack.c.bf16 %v5507, %v5506
    %v5555 = vpack.c.bf16 %v5509, %v5508
    %v5556 = vpack.c.bf16 %v5511, %v5510
    %v5557 = vpack.c.bf16 %v5513, %v5512
    %v5558 = vpack.c.bf16 %v5515, %v5514
    %v5559 = vpack.c.bf16 %v5517, %v5516
    %v5560 = vpack.c.bf16 %v5519, %v5518
    %v5561 = vpack.c.bf16 %v5521, %v5520
    %v5562 = vpack.c.bf16 %v5523, %v5522
    %v5563 = vpack.c.bf16 %v5525, %v5524
    %v5564 = vpack.c.bf16 %v5527, %v5526
    %v5565 = vpack.c.bf16 %v5529, %v5528
    %v5566 = vpack.c.bf16 %v5531, %v5530
    %v5567 = vpack.c.bf16 %v5533, %v5532
    %v5568 = vpack.c.bf16 %v5535, %v5534
    %v5569 = vpack.c.bf16 %v5537, %v5536
    %v5570 = vpack.c.bf16 %v5539, %v5538
    %v5571 = vpack.c.bf16 %v5541, %v5540
    %v5572 = vpack.c.bf16 %v5543, %v5542
    %v5573 = vpack.c.bf16 %v5545, %v5544
    %v5574 = vld [vmem:[#allocation6] sm:$0xf]
    %v5575 = vld [vmem:[#allocation6 + $0x4] sm:$0xf]
    %v5576 = vld [vmem:[#allocation6 + $0x8] sm:$0xf]
    %v5577 = vld [vmem:[#allocation6 + $0xc] sm:$0xf]
    %v5578 = vld [vmem:[#allocation6 + $0x10] sm:$0xf]
    %v5579 = vld [vmem:[#allocation6 + $0x14] sm:$0xf]
    %v5580 = vld [vmem:[#allocation6 + $0x18] sm:$0xf]
    %v5581 = vld [vmem:[#allocation6 + $0x1c] sm:$0xf]
    %v5582 = vld [vmem:[#allocation6 + $0x20] sm:$0xf]
    %v5583 = vld [vmem:[#allocation6 + $0x24] sm:$0xf]
    %v5584 = vld [vmem:[#allocation6 + $0x28] sm:$0xf]
    %v5585 = vld [vmem:[#allocation6 + $0x2c] sm:$0xf]
    %v5586 = vld [vmem:[#allocation6 + $0x30] sm:$0xf]
    %v5587 = vld [vmem:[#allocation6 + $0x34] sm:$0xf]
    %v5588 = vld [vmem:[#allocation6 + $0x38] sm:$0xf]
    %v5589 = vld [vmem:[#allocation6 + $0x3c] sm:$0xf]
    %v5590 = vld [vmem:[#allocation6 + $0x40] sm:$0xf]
    %v5591 = vld [vmem:[#allocation6 + $0x44] sm:$0xf]
    %v5592 = vld [vmem:[#allocation6 + $0x48] sm:$0xf]
    %v5593 = vld [vmem:[#allocation6 + $0x4c] sm:$0xf]
    %v5594 = vld [vmem:[#allocation6 + $0x50] sm:$0xf]
    %v5595 = vld [vmem:[#allocation6 + $0x54] sm:$0xf]
    %v5596 = vld [vmem:[#allocation6 + $0x58] sm:$0xf]
    %v5597 = vld [vmem:[#allocation6 + $0x5c] sm:$0xf]
    %v5598 = vld [vmem:[#allocation6 + $0x60] sm:$0xf]
    %v5599 = vld [vmem:[#allocation6 + $0x64] sm:$0xf]
    %v5600 = vld [vmem:[#allocation6 + $0x68] sm:$0xf]
    %v5601 = vld [vmem:[#allocation6 + $0x6c] sm:$0xf]
    %v5602 = vld [vmem:[#allocation6 + $0x70] sm:$0xf]
    %v5603 = vld [vmem:[#allocation6 + $0x74] sm:$0xf]
    %v5604 = vld [vmem:[#allocation6 + $0x78] sm:$0xf]
    %v5605 = vld [vmem:[#allocation6 + $0x7c] sm:$0xf]
    %v5606 = vld [vmem:[#allocation6 + $0x80] sm:$0xf]
    %v5607 = vld [vmem:[#allocation6 + $0x84] sm:$0xf]
    %v5608 = vld [vmem:[#allocation6 + $0x88] sm:$0xf]
    %v5609 = vld [vmem:[#allocation6 + $0x8c] sm:$0xf]
    %v5610 = vld [vmem:[#allocation6 + $0x90] sm:$0xf]
    %v5611 = vld [vmem:[#allocation6 + $0x94] sm:$0xf]
    %v5612 = vld [vmem:[#allocation6 + $0x98] sm:$0xf]
    %v5613 = vld [vmem:[#allocation6 + $0x9c] sm:$0xf]
    %v5614 = vld [vmem:[#allocation6 + $0xa0] sm:$0xf]
    %v5615 = vld [vmem:[#allocation6 + $0xa4] sm:$0xf]
    %v5616 = vld [vmem:[#allocation6 + $0xa8] sm:$0xf]
    %v5617 = vld [vmem:[#allocation6 + $0xac] sm:$0xf]
    %v5618 = vld [vmem:[#allocation6 + $0xb0] sm:$0xf]
    %v5619 = vld [vmem:[#allocation6 + $0xb4] sm:$0xf]
    %v5620 = vld [vmem:[#allocation6 + $0xb8] sm:$0xf]
    %v5621 = vld [vmem:[#allocation6 + $0xbc] sm:$0xf]
    %v5622 = vld [vmem:[#allocation6 + $0xc0] sm:$0xf]
    %v5623 = vld [vmem:[#allocation6 + $0xc4] sm:$0xf]
    %v5624 = vld [vmem:[#allocation6 + $0xc8] sm:$0xf]
    %v5625 = vld [vmem:[#allocation6 + $0xcc] sm:$0xf]
    %v5626 = vld [vmem:[#allocation6 + $0xd0] sm:$0xf]
    %v5627 = vld [vmem:[#allocation6 + $0xd4] sm:$0xf]
    %v5628 = vld [vmem:[#allocation6 + $0xd8] sm:$0xf]
    %v5629 = vld [vmem:[#allocation6 + $0xdc] sm:$0xf]
    %v5642 = vunpack.c.l.b16 %v5550
    %v5643 = vunpack.c.h.b16 %v5550
    %v5644 = vunpack.c.l.b16 %v5552
    %v5645 = vunpack.c.h.b16 %v5552
    %v5646 = vunpack.c.l.b16 %v5554
    %v5647 = vunpack.c.h.b16 %v5554
    %v5648 = vunpack.c.l.b16 %v5556
    %v5649 = vunpack.c.h.b16 %v5556
    %v5650 = vunpack.c.l.b16 %v5558
    %v5651 = vunpack.c.h.b16 %v5558
    %v5652 = vunpack.c.l.b16 %v5560
    %v5653 = vunpack.c.h.b16 %v5560
    %v5654 = vunpack.c.l.b16 %v5562
    %v5655 = vunpack.c.h.b16 %v5562
    %v5656 = vunpack.c.l.b16 %v5564
    %v5657 = vunpack.c.h.b16 %v5564
    %v5658 = vunpack.c.l.b16 %v5566
    %v5659 = vunpack.c.h.b16 %v5566
    %v5660 = vunpack.c.l.b16 %v5568
    %v5661 = vunpack.c.h.b16 %v5568
    %v5662 = vunpack.c.l.b16 %v5570
    %v5663 = vunpack.c.h.b16 %v5570
    %v5664 = vunpack.c.l.b16 %v5572
    %v5665 = vunpack.c.h.b16 %v5572
    %v5666 = vpack.c.b16 %v5644, %v5642
    %v5667 = vpack.c.b16 %v5645, %v5643
    %v5668 = vpack.c.b16 %v5648, %v5646
    %v5669 = vpack.c.b16 %v5649, %v5647
    %v5670 = vpack.c.b16 %v5652, %v5650
    %v5671 = vpack.c.b16 %v5653, %v5651
    %v5672 = vpack.c.b16 %v5656, %v5654
    %v5673 = vpack.c.b16 %v5657, %v5655
    %v5674 = vpack.c.b16 %v5660, %v5658
    %v5675 = vpack.c.b16 %v5661, %v5659
    %v5676 = vpack.c.b16 %v5664, %v5662
    %v5677 = vpack.c.b16 %v5665, %v5663
    %v5684 = vld [vmem:[%s10] sm:$0xf]
    %v5685 = vld [vmem:[%s10 + $0x4] sm:$0xf]
    %v5686 = vld [vmem:[%s10 + $0x8] sm:$0xf]
    %v5687 = vld [vmem:[%s10 + $0xc] sm:$0xf]
    %v5688 = vld [vmem:[%s10 + $0x10] sm:$0xf]
    %v5689 = vld [vmem:[%s10 + $0x14] sm:$0xf]
    %v5690 = vld [vmem:[%s10 + $0x18] sm:$0xf]
    %v5691 = vld [vmem:[%s10 + $0x1c] sm:$0xf]
    %v5692 = vld [vmem:[%s10 + $0x20] sm:$0xf]
    %v5693 = vld [vmem:[%s10 + $0x24] sm:$0xf]
    %v5694 = vld [vmem:[%s10 + $0x28] sm:$0xf]
    %v5695 = vld [vmem:[%s10 + $0x2c] sm:$0xf]
    %v5696 = vld [vmem:[%s10 + $0x30] sm:$0xf]
    %v5697 = vld [vmem:[%s10 + $0x34] sm:$0xf]
    %v5698 = vld [vmem:[%s10 + $0x38] sm:$0xf]
    %v5699 = vld [vmem:[%s10 + $0x3c] sm:$0xf]
    %v5700 = vld [vmem:[%s10 + $0x40] sm:$0xf]
    %v5701 = vld [vmem:[%s10 + $0x44] sm:$0xf]
    %v5702 = vld [vmem:[%s10 + $0x48] sm:$0xf]
    %v5703 = vld [vmem:[%s10 + $0x4c] sm:$0xf]
    %v5704 = vld [vmem:[%s10 + $0x50] sm:$0xf]
    %v5705 = vld [vmem:[%s10 + $0x54] sm:$0xf]
    %v5706 = vld [vmem:[%s10 + $0x58] sm:$0xf]
    %v5707 = vld [vmem:[%s10 + $0x5c] sm:$0xf]
    %v5708 = vld [vmem:[%s10 + $0x60] sm:$0xf]
    %v5709 = vld [vmem:[%s10 + $0x64] sm:$0xf]
    %v5710 = vld [vmem:[%s10 + $0x68] sm:$0xf]
    %v5711 = vld [vmem:[%s10 + $0x6c] sm:$0xf]
    %v5740 = vunpack.c.l.b16 %v5684
    %v5741 = vunpack.c.l.b16 %v5685
    %v5742 = vunpack.c.l.b16 %v5686
    %v5743 = vunpack.c.l.b16 %v5687
    %v5744 = vunpack.c.l.b16 %v5688
    %v5745 = vunpack.c.l.b16 %v5689
    %v5746 = vunpack.c.l.b16 %v5690
    %v5747 = vunpack.c.l.b16 %v5691
    %v5748 = vunpack.c.l.b16 %v5692
    %v5749 = vunpack.c.l.b16 %v5693
    %v5750 = vunpack.c.l.b16 %v5694
    %v5751 = vunpack.c.l.b16 %v5695
    %v5752 = vunpack.c.l.b16 %v5696
    %v5753 = vunpack.c.l.b16 %v5697
    %v5754 = vunpack.c.l.b16 %v5698
    %v5755 = vunpack.c.l.b16 %v5699
    %v5756 = vunpack.c.l.b16 %v5700
    %v5757 = vunpack.c.l.b16 %v5701
    %v5758 = vunpack.c.l.b16 %v5702
    %v5759 = vunpack.c.l.b16 %v5703
    %v5760 = vunpack.c.l.b16 %v5704
    %v5761 = vunpack.c.l.b16 %v5705
    %v5762 = vunpack.c.l.b16 %v5706
    %v5763 = vunpack.c.l.b16 %v5707
    %v5764 = vunpack.c.l.b16 %v5708
    %v5765 = vunpack.c.l.b16 %v5709
    %v5766 = vunpack.c.l.b16 %v5710
    %v5767 = vunpack.c.l.b16 %v5711
    %v5768 = vpack.c.b16 %v5741, %v5740
    %v5769 = vpack.c.b16 %v5743, %v5742
    %v5770 = vpack.c.b16 %v5745, %v5744
    %v5771 = vpack.c.b16 %v5747, %v5746
    %v5772 = vpack.c.b16 %v5749, %v5748
    %v5773 = vpack.c.b16 %v5751, %v5750
    %v5774 = vpack.c.b16 %v5753, %v5752
    %v5775 = vpack.c.b16 %v5755, %v5754
    %v5776 = vpack.c.b16 %v5757, %v5756
    %v5777 = vpack.c.b16 %v5759, %v5758
    %v5778 = vpack.c.b16 %v5761, %v5760
    %v5779 = vpack.c.b16 %v5763, %v5762
    %v5780 = vpack.c.b16 %v5765, %v5764
    %v5781 = vpack.c.b16 %v5767, %v5766
    %v5797 = vsel %vm1278, %v5667, 0
    %v5800 = vsel %vm1278, %v5669, 0
    %v5803 = vsel %vm1278, %v5671, 0
    %v5806 = vsel %vm1278, %v5673, 0
    %v5809 = vsel %vm1278, %v5675, 0
    %v5812 = vsel %vm1278, %v5677, 0
    %5814 = vmatpush.bf16.msra.mxu0 %v5775
    %5815 = vmatpush.bf16.msra.mxu0 %v5774
    %5816 = vmatpush.bf16.msra.mxu0 %v5773
    %5817 = vmatpush.bf16.msra.mxu0 %v5772
    %5818 = vmatpush.bf16.msra.mxu0 %v5771
    %5819 = vmatpush.bf16.msra.mxu0 %v5770
    %5820 = vmatpush.bf16.msra.mxu0 %v5769
    %5821 = vmatpush.bf16.msra.mxu0 %v5768
    %5822 = vmatmul.bf16.gmra.mxu0 %v5666
    %v5823 = vpop.f32.mrf.mxu0
    %v5824 = vadd.f32 0.0, %v5823
    %v5825 = vpop.f32.mrf.mxu0
    %v5826 = vadd.f32 0.0, %v5825
    %5827 = vmatmul.bf16.gmra.mxu0 %v5668
    %v5828 = vpop.f32.mrf.mxu0
    %v5829 = vadd.f32 0.0, %v5828
    %v5830 = vpop.f32.mrf.mxu0
    %v5831 = vadd.f32 0.0, %v5830
    %5832 = vmatmul.bf16.gmra.mxu0 %v5670
    %v5833 = vpop.f32.mrf.mxu0
    %v5834 = vadd.f32 0.0, %v5833
    %v5835 = vpop.f32.mrf.mxu0
    %v5836 = vadd.f32 0.0, %v5835
    %5837 = vmatmul.bf16.gmra.mxu0 %v5672
    %v5838 = vpop.f32.mrf.mxu0
    %v5839 = vadd.f32 0.0, %v5838
    %v5840 = vpop.f32.mrf.mxu0
    %v5841 = vadd.f32 0.0, %v5840
    %5842 = vmatmul.bf16.gmra.mxu0 %v5674
    %v5843 = vpop.f32.mrf.mxu0
    %v5844 = vadd.f32 0.0, %v5843
    %v5845 = vpop.f32.mrf.mxu0
    %v5846 = vadd.f32 0.0, %v5845
    %5847 = vmatmul.bf16.gmra.mxu0 %v5676
    %v5848 = vpop.f32.mrf.mxu0
    %v5849 = vadd.f32 0.0, %v5848
    %v5850 = vpop.f32.mrf.mxu0
    %v5851 = vadd.f32 0.0, %v5850
    %5852 = vmatmul.bf16.gmra.mxu0 0
    %v5853 = vpop.f32.mrf.mxu0
    %v5854 = vadd.f32 0.0, %v5853
    %v5855 = vpop.f32.mrf.mxu0
    %v5856 = vadd.f32 0.0, %v5855
    %5857 = vdwg.mxu0
    %5858 = vmatpush.bf16.msra.mxu0 0
    %5859 = vmatpush.bf16.msra.mxu0 0
    %5860 = vmatpush.bf16.msra.mxu0 %v5781
    %5861 = vmatpush.bf16.msra.mxu0 %v5780
    %5862 = vmatpush.bf16.msra.mxu0 %v5779
    %5863 = vmatpush.bf16.msra.mxu0 %v5778
    %5864 = vmatpush.bf16.msra.mxu0 %v5777
    %5865 = vmatpush.bf16.msra.mxu0 %v5776
    %5866 = vmatmul.bf16.gmra.mxu0 %v5797
    %v5867 = vpop.f32.mrf.mxu0
    %v5868 = vadd.f32 %v5824, %v5867
    %v5869 = vpop.f32.mrf.mxu0
    %v5870 = vadd.f32 %v5826, %v5869
    %5871 = vmatmul.bf16.gmra.mxu0 %v5800
    %v5872 = vpop.f32.mrf.mxu0
    %v5873 = vadd.f32 %v5829, %v5872
    %v5874 = vpop.f32.mrf.mxu0
    %v5875 = vadd.f32 %v5831, %v5874
    %5876 = vmatmul.bf16.gmra.mxu0 %v5803
    %v5877 = vpop.f32.mrf.mxu0
    %v5878 = vadd.f32 %v5834, %v5877
    %v5879 = vpop.f32.mrf.mxu0
    %v5880 = vadd.f32 %v5836, %v5879
    %5881 = vmatmul.bf16.gmra.mxu0 %v5806
    %v5882 = vpop.f32.mrf.mxu0
    %v5883 = vadd.f32 %v5839, %v5882
    %v5884 = vpop.f32.mrf.mxu0
    %v5885 = vadd.f32 %v5841, %v5884
    %5886 = vmatmul.bf16.gmra.mxu0 %v5809
    %v5887 = vpop.f32.mrf.mxu0
    %v5888 = vadd.f32 %v5844, %v5887
    %v5889 = vpop.f32.mrf.mxu0
    %v5890 = vadd.f32 %v5846, %v5889
    %5891 = vmatmul.bf16.gmra.mxu0 %v5812
    %v5892 = vpop.f32.mrf.mxu0
    %v5893 = vadd.f32 %v5849, %v5892
    %v5894 = vpop.f32.mrf.mxu0
    %v5895 = vadd.f32 %v5851, %v5894
    %5896 = vmatmul.bf16.gmra.mxu0 %v1279
    %v5897 = vpop.f32.mrf.mxu0
    %v5898 = vadd.f32 %v5854, %v5897
    %v5899 = vpop.f32.mrf.mxu0
    %v5900 = vadd.f32 %v5856, %v5899
    %5901 = vdwg.mxu0
    %v5918 = vunpack.c.l.b16 %v5546
    %v5919 = vunpack.c.h.b16 %v5546
    %v5920 = vunpack.c.l.b16 %v5547
    %v5921 = vunpack.c.h.b16 %v5547
    %v5922 = vunpack.c.l.b16 %v5548
    %v5923 = vunpack.c.h.b16 %v5548
    %v5924 = vunpack.c.l.b16 %v5549
    %v5925 = vunpack.c.h.b16 %v5549
    %v5926 = vunpack.c.l.b16 %v5551
    %v5927 = vunpack.c.h.b16 %v5551
    %v5928 = vunpack.c.l.b16 %v5553
    %v5929 = vunpack.c.h.b16 %v5553
    %v5930 = vunpack.c.l.b16 %v5555
    %v5931 = vunpack.c.h.b16 %v5555
    %v5932 = vunpack.c.l.b16 %v5557
    %v5933 = vunpack.c.h.b16 %v5557
    %v5934 = vunpack.c.l.b16 %v5559
    %v5935 = vunpack.c.h.b16 %v5559
    %v5936 = vunpack.c.l.b16 %v5561
    %v5937 = vunpack.c.h.b16 %v5561
    %v5938 = vunpack.c.l.b16 %v5563
    %v5939 = vunpack.c.h.b16 %v5563
    %v5940 = vunpack.c.l.b16 %v5565
    %v5941 = vunpack.c.h.b16 %v5565
    %v5942 = vunpack.c.l.b16 %v5567
    %v5943 = vunpack.c.h.b16 %v5567
    %v5944 = vunpack.c.l.b16 %v5569
    %v5945 = vunpack.c.h.b16 %v5569
    %v5946 = vunpack.c.l.b16 %v5571
    %v5947 = vunpack.c.h.b16 %v5571
    %v5948 = vunpack.c.l.b16 %v5573
    %v5949 = vunpack.c.h.b16 %v5573
    %v5950 = vpack.c.b16 %v5922, %v5918
    %v5951 = vpack.c.b16 %v5923, %v5919
    %v5952 = vpack.c.b16 %v5924, %v5920
    %v5953 = vpack.c.b16 %v5925, %v5921
    %v5954 = vpack.c.b16 %v5928, %v5926
    %v5955 = vpack.c.b16 %v5929, %v5927
    %v5956 = vpack.c.b16 %v5932, %v5930
    %v5957 = vpack.c.b16 %v5933, %v5931
    %v5958 = vpack.c.b16 %v5936, %v5934
    %v5959 = vpack.c.b16 %v5937, %v5935
    %v5960 = vpack.c.b16 %v5940, %v5938
    %v5961 = vpack.c.b16 %v5941, %v5939
    %v5962 = vpack.c.b16 %v5944, %v5942
    %v5963 = vpack.c.b16 %v5945, %v5943
    %v5964 = vpack.c.b16 %v5948, %v5946
    %v5965 = vpack.c.b16 %v5949, %v5947
    %v6037 = vunpack.c.l.b16 %v5574
    %v6038 = vunpack.c.l.b16 %v5575
    %v6039 = vunpack.c.l.b16 %v5576
    %v6040 = vunpack.c.l.b16 %v5577
    %v6041 = vunpack.c.l.b16 %v5578
    %v6042 = vunpack.c.l.b16 %v5579
    %v6043 = vunpack.c.l.b16 %v5580
    %v6044 = vunpack.c.l.b16 %v5581
    %v6045 = vunpack.c.l.b16 %v5582
    %v6046 = vunpack.c.l.b16 %v5583
    %v6047 = vunpack.c.l.b16 %v5584
    %v6048 = vunpack.c.l.b16 %v5585
    %v6049 = vunpack.c.l.b16 %v5586
    %v6050 = vunpack.c.l.b16 %v5587
    %v6051 = vunpack.c.l.b16 %v5588
    %v6052 = vunpack.c.l.b16 %v5589
    %v6053 = vunpack.c.l.b16 %v5590
    %v6054 = vunpack.c.l.b16 %v5591
    %v6055 = vunpack.c.l.b16 %v5592
    %v6056 = vunpack.c.l.b16 %v5593
    %v6057 = vunpack.c.l.b16 %v5594
    %v6058 = vunpack.c.l.b16 %v5595
    %v6059 = vunpack.c.l.b16 %v5596
    %v6060 = vunpack.c.l.b16 %v5597
    %v6061 = vunpack.c.l.b16 %v5598
    %v6062 = vunpack.c.l.b16 %v5599
    %v6063 = vunpack.c.l.b16 %v5600
    %v6064 = vunpack.c.l.b16 %v5601
    %v6065 = vunpack.c.l.b16 %v5602
    %v6066 = vunpack.c.l.b16 %v5603
    %v6067 = vunpack.c.l.b16 %v5604
    %v6068 = vunpack.c.l.b16 %v5605
    %v6069 = vunpack.c.l.b16 %v5606
    %v6070 = vunpack.c.l.b16 %v5607
    %v6071 = vunpack.c.l.b16 %v5608
    %v6072 = vunpack.c.l.b16 %v5609
    %v6073 = vunpack.c.l.b16 %v5610
    %v6074 = vunpack.c.l.b16 %v5611
    %v6075 = vunpack.c.l.b16 %v5612
    %v6076 = vunpack.c.l.b16 %v5613
    %v6077 = vunpack.c.l.b16 %v5614
    %v6078 = vunpack.c.l.b16 %v5615
    %v6079 = vunpack.c.l.b16 %v5616
    %v6080 = vunpack.c.l.b16 %v5617
    %v6081 = vunpack.c.l.b16 %v5618
    %v6082 = vunpack.c.l.b16 %v5619
    %v6083 = vunpack.c.l.b16 %v5620
    %v6084 = vunpack.c.l.b16 %v5621
    %v6085 = vunpack.c.l.b16 %v5622
    %v6086 = vunpack.c.l.b16 %v5623
    %v6087 = vunpack.c.l.b16 %v5624
    %v6088 = vunpack.c.l.b16 %v5625
    %v6089 = vunpack.c.l.b16 %v5626
    %v6090 = vunpack.c.l.b16 %v5627
    %v6091 = vunpack.c.l.b16 %v5628
    %v6092 = vunpack.c.l.b16 %v5629
    %v6093 = vpack.c.b16 %v6038, %v6037
    %v6094 = vpack.c.b16 %v6040, %v6039
    %v6095 = vpack.c.b16 %v6042, %v6041
    %v6096 = vpack.c.b16 %v6044, %v6043
    %v6097 = vpack.c.b16 %v6046, %v6045
    %v6098 = vpack.c.b16 %v6048, %v6047
    %v6099 = vpack.c.b16 %v6050, %v6049
    %v6100 = vpack.c.b16 %v6052, %v6051
    %v6101 = vpack.c.b16 %v6054, %v6053
    %v6102 = vpack.c.b16 %v6056, %v6055
    %v6103 = vpack.c.b16 %v6058, %v6057
    %v6104 = vpack.c.b16 %v6060, %v6059
    %v6105 = vpack.c.b16 %v6062, %v6061
    %v6106 = vpack.c.b16 %v6064, %v6063
    %v6107 = vpack.c.b16 %v6066, %v6065
    %v6108 = vpack.c.b16 %v6068, %v6067
    %v6109 = vpack.c.b16 %v6070, %v6069
    %v6110 = vpack.c.b16 %v6072, %v6071
    %v6111 = vpack.c.b16 %v6074, %v6073
    %v6112 = vpack.c.b16 %v6076, %v6075
    %v6113 = vpack.c.b16 %v6078, %v6077
    %v6114 = vpack.c.b16 %v6080, %v6079
    %v6115 = vpack.c.b16 %v6082, %v6081
    %v6116 = vpack.c.b16 %v6084, %v6083
    %v6117 = vpack.c.b16 %v6086, %v6085
    %v6118 = vpack.c.b16 %v6088, %v6087
    %v6119 = vpack.c.b16 %v6090, %v6089
    %v6120 = vpack.c.b16 %v6092, %v6091
    %v6150 = vsel %vm1810, %v5953, 0
    %v6153 = vsel %vm1810, %v5955, 0
    %v6156 = vsel %vm1810, %v5957, 0
    %v6159 = vsel %vm1810, %v5959, 0
    %v6162 = vsel %vm1810, %v5961, 0
    %v6165 = vsel %vm1810, %v5963, 0
    %v6168 = vsel %vm1810, %v5965, 0
    %6170 = vmatpush.bf16.msra.mxu0 %v6100
    %6171 = vmatpush.bf16.msra.mxu0 %v6099
    %6172 = vmatpush.bf16.msra.mxu0 %v6098
    %6173 = vmatpush.bf16.msra.mxu0 %v6097
    %6174 = vmatpush.bf16.msra.mxu0 %v6096
    %6175 = vmatpush.bf16.msra.mxu0 %v6095
    %6176 = vmatpush.bf16.msra.mxu0 %v6094
    %6177 = vmatpush.bf16.msra.mxu0 %v6093
    %6178 = vmatmul.bf16.gmra.mxu0 %v5950
    %v6179 = vpop.f32.mrf.mxu0
    %v6180 = vadd.f32 %v5868, %v6179
    %v6181 = vpop.f32.mrf.mxu0
    %v6182 = vadd.f32 %v5870, %v6181
    %6183 = vmatmul.bf16.gmra.mxu0 %v5666
    %v6184 = vpop.f32.mrf.mxu0
    %v6185 = vadd.f32 %v5873, %v6184
    %v6186 = vpop.f32.mrf.mxu0
    %v6187 = vadd.f32 %v5875, %v6186
    %6188 = vmatmul.bf16.gmra.mxu0 %v5668
    %v6189 = vpop.f32.mrf.mxu0
    %v6190 = vadd.f32 %v5878, %v6189
    %v6191 = vpop.f32.mrf.mxu0
    %v6192 = vadd.f32 %v5880, %v6191
    %6193 = vmatmul.bf16.gmra.mxu0 %v5670
    %v6194 = vpop.f32.mrf.mxu0
    %v6195 = vadd.f32 %v5883, %v6194
    %v6196 = vpop.f32.mrf.mxu0
    %v6197 = vadd.f32 %v5885, %v6196
    %6198 = vmatmul.bf16.gmra.mxu0 %v5672
    %v6199 = vpop.f32.mrf.mxu0
    %v6200 = vadd.f32 %v5888, %v6199
    %v6201 = vpop.f32.mrf.mxu0
    %v6202 = vadd.f32 %v5890, %v6201
    %6203 = vmatmul.bf16.gmra.mxu0 %v5674
    %v6204 = vpop.f32.mrf.mxu0
    %v6205 = vadd.f32 %v5893, %v6204
    %v6206 = vpop.f32.mrf.mxu0
    %v6207 = vadd.f32 %v5895, %v6206
    %6208 = vmatmul.bf16.gmra.mxu0 %v5676
    %v6209 = vpop.f32.mrf.mxu0
    %v6210 = vadd.f32 %v5898, %v6209
    %v6211 = vpop.f32.mrf.mxu0
    %v6212 = vadd.f32 %v5900, %v6211
    %6213 = vdwg.mxu0
    %6214 = vmatpush.bf16.msra.mxu0 %v6108
    %6215 = vmatpush.bf16.msra.mxu0 %v6107
    %6216 = vmatpush.bf16.msra.mxu0 %v6106
    %6217 = vmatpush.bf16.msra.mxu0 %v6105
    %6218 = vmatpush.bf16.msra.mxu0 %v6104
    %6219 = vmatpush.bf16.msra.mxu0 %v6103
    %6220 = vmatpush.bf16.msra.mxu0 %v6102
    %6221 = vmatpush.bf16.msra.mxu0 %v6101
    %6222 = vmatmul.bf16.gmra.mxu0 %v5951
    %v6223 = vpop.f32.mrf.mxu0
    %v6224 = vadd.f32 %v6180, %v6223
    %v6225 = vpop.f32.mrf.mxu0
    %v6226 = vadd.f32 %v6182, %v6225
    %6227 = vmatmul.bf16.gmra.mxu0 %v5667
    %v6228 = vpop.f32.mrf.mxu0
    %v6229 = vadd.f32 %v6185, %v6228
    %v6230 = vpop.f32.mrf.mxu0
    %v6231 = vadd.f32 %v6187, %v6230
    %6232 = vmatmul.bf16.gmra.mxu0 %v5669
    %v6233 = vpop.f32.mrf.mxu0
    %v6234 = vadd.f32 %v6190, %v6233
    %v6235 = vpop.f32.mrf.mxu0
    %v6236 = vadd.f32 %v6192, %v6235
    %6237 = vmatmul.bf16.gmra.mxu0 %v5671
    %v6238 = vpop.f32.mrf.mxu0
    %v6239 = vadd.f32 %v6195, %v6238
    %v6240 = vpop.f32.mrf.mxu0
    %v6241 = vadd.f32 %v6197, %v6240
    %6242 = vmatmul.bf16.gmra.mxu0 %v5673
    %v6243 = vpop.f32.mrf.mxu0
    %v6244 = vadd.f32 %v6200, %v6243
    %v6245 = vpop.f32.mrf.mxu0
    %v6246 = vadd.f32 %v6202, %v6245
    %6247 = vmatmul.bf16.gmra.mxu0 %v5675
    %v6248 = vpop.f32.mrf.mxu0
    %v6249 = vadd.f32 %v6205, %v6248
    %v6250 = vpop.f32.mrf.mxu0
    %v6251 = vadd.f32 %v6207, %v6250
    %6252 = vmatmul.bf16.gmra.mxu0 %v5677
    %v6253 = vpop.f32.mrf.mxu0
    %v6254 = vadd.f32 %v6210, %v6253
    %v6255 = vpop.f32.mrf.mxu0
    %v6256 = vadd.f32 %v6212, %v6255
    %6257 = vdwg.mxu0
    %6258 = vmatpush.bf16.msra.mxu0 %v6116
    %6259 = vmatpush.bf16.msra.mxu0 %v6115
    %6260 = vmatpush.bf16.msra.mxu0 %v6114
    %6261 = vmatpush.bf16.msra.mxu0 %v6113
    %6262 = vmatpush.bf16.msra.mxu0 %v6112
    %6263 = vmatpush.bf16.msra.mxu0 %v6111
    %6264 = vmatpush.bf16.msra.mxu0 %v6110
    %6265 = vmatpush.bf16.msra.mxu0 %v6109
    %6266 = vmatmul.bf16.gmra.mxu0 %v5952
    %v6267 = vpop.f32.mrf.mxu0
    %v6268 = vadd.f32 %v6224, %v6267
    %v6269 = vpop.f32.mrf.mxu0
    %v6270 = vadd.f32 %v6226, %v6269
    %6271 = vmatmul.bf16.gmra.mxu0 %v5954
    %v6272 = vpop.f32.mrf.mxu0
    %v6273 = vadd.f32 %v6229, %v6272
    %v6274 = vpop.f32.mrf.mxu0
    %v6275 = vadd.f32 %v6231, %v6274
    %6276 = vmatmul.bf16.gmra.mxu0 %v5956
    %v6277 = vpop.f32.mrf.mxu0
    %v6278 = vadd.f32 %v6234, %v6277
    %v6279 = vpop.f32.mrf.mxu0
    %v6280 = vadd.f32 %v6236, %v6279
    %6281 = vmatmul.bf16.gmra.mxu0 %v5958
    %v6282 = vpop.f32.mrf.mxu0
    %v6283 = vadd.f32 %v6239, %v6282
    %v6284 = vpop.f32.mrf.mxu0
    %v6285 = vadd.f32 %v6241, %v6284
    %6286 = vmatmul.bf16.gmra.mxu0 %v5960
    %v6287 = vpop.f32.mrf.mxu0
    %v6288 = vadd.f32 %v6244, %v6287
    %v6289 = vpop.f32.mrf.mxu0
    %v6290 = vadd.f32 %v6246, %v6289
    %6291 = vmatmul.bf16.gmra.mxu0 %v5962
    %v6292 = vpop.f32.mrf.mxu0
    %v6293 = vadd.f32 %v6249, %v6292
    %v6294 = vpop.f32.mrf.mxu0
    %v6295 = vadd.f32 %v6251, %v6294
    %6296 = vmatmul.bf16.gmra.mxu0 %v5964
    %v6297 = vpop.f32.mrf.mxu0
    %v6298 = vadd.f32 %v6254, %v6297
    %v6299 = vpop.f32.mrf.mxu0
    %v6300 = vadd.f32 %v6256, %v6299
    %6301 = vdwg.mxu0
    %6302 = vmatpush.bf16.msra.mxu0 0
    %6303 = vmatpush.bf16.msra.mxu0 0
    %6304 = vmatpush.bf16.msra.mxu0 0
    %6305 = vmatpush.bf16.msra.mxu0 0
    %6306 = vmatpush.bf16.msra.mxu0 %v6120
    %6307 = vmatpush.bf16.msra.mxu0 %v6119
    %6308 = vmatpush.bf16.msra.mxu0 %v6118
    %6309 = vmatpush.bf16.msra.mxu0 %v6117
    %6310 = vmatmul.bf16.gmra.mxu0 %v6150
    %v6311 = vpop.f32.mrf.mxu0
    %v6312 = vadd.f32 %v6268, %v6311
    %v6313 = vpop.f32.mrf.mxu0
    %v6314 = vadd.f32 %v6270, %v6313
    %6315 = vmatmul.bf16.gmra.mxu0 %v6153
    %v6316 = vpop.f32.mrf.mxu0
    %v6317 = vadd.f32 %v6273, %v6316
    %v6318 = vpop.f32.mrf.mxu0
    %v6319 = vadd.f32 %v6275, %v6318
    %6320 = vmatmul.bf16.gmra.mxu0 %v6156
    %v6321 = vpop.f32.mrf.mxu0
    %v6322 = vadd.f32 %v6278, %v6321
    %v6323 = vpop.f32.mrf.mxu0
    %v6324 = vadd.f32 %v6280, %v6323
    %6325 = vmatmul.bf16.gmra.mxu0 %v6159
    %v6326 = vpop.f32.mrf.mxu0
    %v6327 = vadd.f32 %v6283, %v6326
    %v6328 = vpop.f32.mrf.mxu0
    %v6329 = vadd.f32 %v6285, %v6328
    %6330 = vmatmul.bf16.gmra.mxu0 %v6162
    %v6331 = vpop.f32.mrf.mxu0
    %v6332 = vadd.f32 %v6288, %v6331
    %v6333 = vpop.f32.mrf.mxu0
    %v6334 = vadd.f32 %v6290, %v6333
    %6335 = vmatmul.bf16.gmra.mxu0 %v6165
    %v6336 = vpop.f32.mrf.mxu0
    %v6337 = vadd.f32 %v6293, %v6336
    %v6338 = vpop.f32.mrf.mxu0
    %v6339 = vadd.f32 %v6295, %v6338
    %6340 = vmatmul.bf16.gmra.mxu0 %v6168
    %v6341 = vpop.f32.mrf.mxu0
    %v6342 = vadd.f32 %v6298, %v6341
    %v6343 = vpop.f32.mrf.mxu0
    %v6344 = vadd.f32 %v6300, %v6343
    %6345 = vdwg.mxu0
    %v6346 = vld [vmem:[%s11 + $0xd] sm:$0x1]
    %v6348 = vperm.slane %v6346, 0
    %v6350 = vadd.f32 %v6312, %v6348
    %v6351 = vadd.f32 %v6314, %v6348
    %v6352 = vadd.f32 %v6317, %v6348
    %v6353 = vadd.f32 %v6319, %v6348
    %v6354 = vadd.f32 %v6322, %v6348
    %v6355 = vadd.f32 %v6324, %v6348
    %v6356 = vadd.f32 %v6327, %v6348
    %v6357 = vadd.f32 %v6329, %v6348
    %v6358 = vadd.f32 %v6332, %v6348
    %v6359 = vadd.f32 %v6334, %v6348
    %v6360 = vadd.f32 %v6337, %v6348
    %v6361 = vadd.f32 %v6339, %v6348
    %v6362 = vadd.f32 %v6342, %v6348
    %v6363 = vadd.f32 %v6344, %v6348
    %v6364 = vxor.u32 %v6350, 2147483648
    %v6365 = vxor.u32 %v6351, 2147483648
    %v6366 = vxor.u32 %v6352, 2147483648
    %v6367 = vxor.u32 %v6353, 2147483648
    %v6368 = vxor.u32 %v6354, 2147483648
    %v6369 = vxor.u32 %v6355, 2147483648
    %v6370 = vxor.u32 %v6356, 2147483648
    %v6371 = vxor.u32 %v6357, 2147483648
    %v6372 = vxor.u32 %v6358, 2147483648
    %v6373 = vxor.u32 %v6359, 2147483648
    %v6374 = vxor.u32 %v6360, 2147483648
    %v6375 = vxor.u32 %v6361, 2147483648
    %v6376 = vxor.u32 %v6362, 2147483648
    %v6377 = vxor.u32 %v6363, 2147483648
    %v6378 = vmul.f32 %v6364, 1.442695
    %v6379 = vpow.pop %v6378
    %v6380 = vmul.f32 %v6365, 1.442695
    %v6381 = vpow.pop %v6380
    %v6382 = vmul.f32 %v6366, 1.442695
    %v6383 = vpow.pop %v6382
    %v6384 = vmul.f32 %v6367, 1.442695
    %v6385 = vpow.pop %v6384
    %v6386 = vmul.f32 %v6368, 1.442695
    %v6387 = vpow.pop %v6386
    %v6388 = vmul.f32 %v6369, 1.442695
    %v6389 = vpow.pop %v6388
    %v6390 = vmul.f32 %v6370, 1.442695
    %v6391 = vpow.pop %v6390
    %v6392 = vmul.f32 %v6371, 1.442695
    %v6393 = vpow.pop %v6392
    %v6394 = vmul.f32 %v6372, 1.442695
    %v6395 = vpow.pop %v6394
    %v6396 = vmul.f32 %v6373, 1.442695
    %v6397 = vpow.pop %v6396
    %v6398 = vmul.f32 %v6374, 1.442695
    %v6399 = vpow.pop %v6398
    %v6400 = vmul.f32 %v6375, 1.442695
    %v6401 = vpow.pop %v6400
    %v6402 = vmul.f32 %v6376, 1.442695
    %v6403 = vpow.pop %v6402
    %v6404 = vmul.f32 %v6377, 1.442695
    %v6405 = vpow.pop %v6404
    %v6406 = vadd.f32 %v6379, 1.0
    %v6407 = vadd.f32 %v6381, 1.0
    %v6408 = vadd.f32 %v6383, 1.0
    %v6409 = vadd.f32 %v6385, 1.0
    %v6410 = vadd.f32 %v6387, 1.0
    %v6411 = vadd.f32 %v6389, 1.0
    %v6412 = vadd.f32 %v6391, 1.0
    %v6413 = vadd.f32 %v6393, 1.0
    %v6414 = vadd.f32 %v6395, 1.0
    %v6415 = vadd.f32 %v6397, 1.0
    %v6416 = vadd.f32 %v6399, 1.0
    %v6417 = vadd.f32 %v6401, 1.0
    %v6418 = vadd.f32 %v6403, 1.0
    %v6419 = vadd.f32 %v6405, 1.0
    %v6420 = vrcp.pop %v6406
    %v6421 = vmul.f32 %v6406, %v6420
    %v6422 = vsub.f32 1.0, %v6421
    %v6423 = vmul.f32 %v6420, %v6422
    %v6424 = vadd.f32 %v6420, %v6423
    %vm6425 = vweird.f32 %v6406
    %vm6426 = vweird.f32 %v6420
    %vm6427 = vmor %vm6425, %vm6426
    %v6428 = vsel %vm6427, %v6420, %v6424
    %v6429 = vand.u32 2147483647, %v6406
    %vm6430 = vcmp.eq.f32.partialorder %v6429, 8.507059e+37
    %v6431 = vand.u32 %v6406, 2147483648
    %v6432 = vor.u32 1.1754944e-38, %v6431
    %v6433 = vsel %vm6430, %v6432, %v6428
    %v6434 = vmul.f32 1.0, %v6433
    %v6435 = vrcp.pop %v6407
    %v6436 = vmul.f32 %v6407, %v6435
    %v6437 = vsub.f32 1.0, %v6436
    %v6438 = vmul.f32 %v6435, %v6437
    %v6439 = vadd.f32 %v6435, %v6438
    %vm6440 = vweird.f32 %v6407
    %vm6441 = vweird.f32 %v6435
    %vm6442 = vmor %vm6440, %vm6441
    %v6443 = vsel %vm6442, %v6435, %v6439
    %v6444 = vand.u32 2147483647, %v6407
    %vm6445 = vcmp.eq.f32.partialorder %v6444, 8.507059e+37
    %v6446 = vand.u32 %v6407, 2147483648
    %v6447 = vor.u32 1.1754944e-38, %v6446
    %v6448 = vsel %vm6445, %v6447, %v6443
    %v6449 = vmul.f32 1.0, %v6448
    %v6450 = vrcp.pop %v6408
    %v6451 = vmul.f32 %v6408, %v6450
    %v6452 = vsub.f32 1.0, %v6451
    %v6453 = vmul.f32 %v6450, %v6452
    %v6454 = vadd.f32 %v6450, %v6453
    %vm6455 = vweird.f32 %v6408
    %vm6456 = vweird.f32 %v6450
    %vm6457 = vmor %vm6455, %vm6456
    %v6458 = vsel %vm6457, %v6450, %v6454
    %v6459 = vand.u32 2147483647, %v6408
    %vm6460 = vcmp.eq.f32.partialorder %v6459, 8.507059e+37
    %v6461 = vand.u32 %v6408, 2147483648
    %v6462 = vor.u32 1.1754944e-38, %v6461
    %v6463 = vsel %vm6460, %v6462, %v6458
    %v6464 = vmul.f32 1.0, %v6463
    %v6465 = vrcp.pop %v6409
    %v6466 = vmul.f32 %v6409, %v6465
    %v6467 = vsub.f32 1.0, %v6466
    %v6468 = vmul.f32 %v6465, %v6467
    %v6469 = vadd.f32 %v6465, %v6468
    %vm6470 = vweird.f32 %v6409
    %vm6471 = vweird.f32 %v6465
    %vm6472 = vmor %vm6470, %vm6471
    %v6473 = vsel %vm6472, %v6465, %v6469
    %v6474 = vand.u32 2147483647, %v6409
    %vm6475 = vcmp.eq.f32.partialorder %v6474, 8.507059e+37
    %v6476 = vand.u32 %v6409, 2147483648
    %v6477 = vor.u32 1.1754944e-38, %v6476
    %v6478 = vsel %vm6475, %v6477, %v6473
    %v6479 = vmul.f32 1.0, %v6478
    %v6480 = vrcp.pop %v6410
    %v6481 = vmul.f32 %v6410, %v6480
    %v6482 = vsub.f32 1.0, %v6481
    %v6483 = vmul.f32 %v6480, %v6482
    %v6484 = vadd.f32 %v6480, %v6483
    %vm6485 = vweird.f32 %v6410
    %vm6486 = vweird.f32 %v6480
    %vm6487 = vmor %vm6485, %vm6486
    %v6488 = vsel %vm6487, %v6480, %v6484
    %v6489 = vand.u32 2147483647, %v6410
    %vm6490 = vcmp.eq.f32.partialorder %v6489, 8.507059e+37
    %v6491 = vand.u32 %v6410, 2147483648
    %v6492 = vor.u32 1.1754944e-38, %v6491
    %v6493 = vsel %vm6490, %v6492, %v6488
    %v6494 = vmul.f32 1.0, %v6493
    %v6495 = vrcp.pop %v6411
    %v6496 = vmul.f32 %v6411, %v6495
    %v6497 = vsub.f32 1.0, %v6496
    %v6498 = vmul.f32 %v6495, %v6497
    %v6499 = vadd.f32 %v6495, %v6498
    %vm6500 = vweird.f32 %v6411
    %vm6501 = vweird.f32 %v6495
    %vm6502 = vmor %vm6500, %vm6501
    %v6503 = vsel %vm6502, %v6495, %v6499
    %v6504 = vand.u32 2147483647, %v6411
    %vm6505 = vcmp.eq.f32.partialorder %v6504, 8.507059e+37
    %v6506 = vand.u32 %v6411, 2147483648
    %v6507 = vor.u32 1.1754944e-38, %v6506
    %v6508 = vsel %vm6505, %v6507, %v6503
    %v6509 = vmul.f32 1.0, %v6508
    %v6510 = vrcp.pop %v6412
    %v6511 = vmul.f32 %v6412, %v6510
    %v6512 = vsub.f32 1.0, %v6511
    %v6513 = vmul.f32 %v6510, %v6512
    %v6514 = vadd.f32 %v6510, %v6513
    %vm6515 = vweird.f32 %v6412
    %vm6516 = vweird.f32 %v6510
    %vm6517 = vmor %vm6515, %vm6516
    %v6518 = vsel %vm6517, %v6510, %v6514
    %v6519 = vand.u32 2147483647, %v6412
    %vm6520 = vcmp.eq.f32.partialorder %v6519, 8.507059e+37
    %v6521 = vand.u32 %v6412, 2147483648
    %v6522 = vor.u32 1.1754944e-38, %v6521
    %v6523 = vsel %vm6520, %v6522, %v6518
    %v6524 = vmul.f32 1.0, %v6523
    %v6525 = vrcp.pop %v6413
    %v6526 = vmul.f32 %v6413, %v6525
    %v6527 = vsub.f32 1.0, %v6526
    %v6528 = vmul.f32 %v6525, %v6527
    %v6529 = vadd.f32 %v6525, %v6528
    %vm6530 = vweird.f32 %v6413
    %vm6531 = vweird.f32 %v6525
    %vm6532 = vmor %vm6530, %vm6531
    %v6533 = vsel %vm6532, %v6525, %v6529
    %v6534 = vand.u32 2147483647, %v6413
    %vm6535 = vcmp.eq.f32.partialorder %v6534, 8.507059e+37
    %v6536 = vand.u32 %v6413, 2147483648
    %v6537 = vor.u32 1.1754944e-38, %v6536
    %v6538 = vsel %vm6535, %v6537, %v6533
    %v6539 = vmul.f32 1.0, %v6538
    %v6540 = vrcp.pop %v6414
    %v6541 = vmul.f32 %v6414, %v6540
    %v6542 = vsub.f32 1.0, %v6541
    %v6543 = vmul.f32 %v6540, %v6542
    %v6544 = vadd.f32 %v6540, %v6543
    %vm6545 = vweird.f32 %v6414
    %vm6546 = vweird.f32 %v6540
    %vm6547 = vmor %vm6545, %vm6546
    %v6548 = vsel %vm6547, %v6540, %v6544
    %v6549 = vand.u32 2147483647, %v6414
    %vm6550 = vcmp.eq.f32.partialorder %v6549, 8.507059e+37
    %v6551 = vand.u32 %v6414, 2147483648
    %v6552 = vor.u32 1.1754944e-38, %v6551
    %v6553 = vsel %vm6550, %v6552, %v6548
    %v6554 = vmul.f32 1.0, %v6553
    %v6555 = vrcp.pop %v6415
    %v6556 = vmul.f32 %v6415, %v6555
    %v6557 = vsub.f32 1.0, %v6556
    %v6558 = vmul.f32 %v6555, %v6557
    %v6559 = vadd.f32 %v6555, %v6558
    %vm6560 = vweird.f32 %v6415
    %vm6561 = vweird.f32 %v6555
    %vm6562 = vmor %vm6560, %vm6561
    %v6563 = vsel %vm6562, %v6555, %v6559
    %v6564 = vand.u32 2147483647, %v6415
    %vm6565 = vcmp.eq.f32.partialorder %v6564, 8.507059e+37
    %v6566 = vand.u32 %v6415, 2147483648
    %v6567 = vor.u32 1.1754944e-38, %v6566
    %v6568 = vsel %vm6565, %v6567, %v6563
    %v6569 = vmul.f32 1.0, %v6568
    %v6570 = vrcp.pop %v6416
    %v6571 = vmul.f32 %v6416, %v6570
    %v6572 = vsub.f32 1.0, %v6571
    %v6573 = vmul.f32 %v6570, %v6572
    %v6574 = vadd.f32 %v6570, %v6573
    %vm6575 = vweird.f32 %v6416
    %vm6576 = vweird.f32 %v6570
    %vm6577 = vmor %vm6575, %vm6576
    %v6578 = vsel %vm6577, %v6570, %v6574
    %v6579 = vand.u32 2147483647, %v6416
    %vm6580 = vcmp.eq.f32.partialorder %v6579, 8.507059e+37
    %v6581 = vand.u32 %v6416, 2147483648
    %v6582 = vor.u32 1.1754944e-38, %v6581
    %v6583 = vsel %vm6580, %v6582, %v6578
    %v6584 = vmul.f32 1.0, %v6583
    %v6585 = vrcp.pop %v6417
    %v6586 = vmul.f32 %v6417, %v6585
    %v6587 = vsub.f32 1.0, %v6586
    %v6588 = vmul.f32 %v6585, %v6587
    %v6589 = vadd.f32 %v6585, %v6588
    %vm6590 = vweird.f32 %v6417
    %vm6591 = vweird.f32 %v6585
    %vm6592 = vmor %vm6590, %vm6591
    %v6593 = vsel %vm6592, %v6585, %v6589
    %v6594 = vand.u32 2147483647, %v6417
    %vm6595 = vcmp.eq.f32.partialorder %v6594, 8.507059e+37
    %v6596 = vand.u32 %v6417, 2147483648
    %v6597 = vor.u32 1.1754944e-38, %v6596
    %v6598 = vsel %vm6595, %v6597, %v6593
    %v6599 = vmul.f32 1.0, %v6598
    %v6600 = vrcp.pop %v6418
    %v6601 = vmul.f32 %v6418, %v6600
    %v6602 = vsub.f32 1.0, %v6601
    %v6603 = vmul.f32 %v6600, %v6602
    %v6604 = vadd.f32 %v6600, %v6603
    %vm6605 = vweird.f32 %v6418
    %vm6606 = vweird.f32 %v6600
    %vm6607 = vmor %vm6605, %vm6606
    %v6608 = vsel %vm6607, %v6600, %v6604
    %v6609 = vand.u32 2147483647, %v6418
    %vm6610 = vcmp.eq.f32.partialorder %v6609, 8.507059e+37
    %v6611 = vand.u32 %v6418, 2147483648
    %v6612 = vor.u32 1.1754944e-38, %v6611
    %v6613 = vsel %vm6610, %v6612, %v6608
    %v6614 = vmul.f32 1.0, %v6613
    %v6615 = vrcp.pop %v6419
    %v6616 = vmul.f32 %v6419, %v6615
    %v6617 = vsub.f32 1.0, %v6616
    %v6618 = vmul.f32 %v6615, %v6617
    %v6619 = vadd.f32 %v6615, %v6618
    %vm6620 = vweird.f32 %v6419
    %vm6621 = vweird.f32 %v6615
    %vm6622 = vmor %vm6620, %vm6621
    %v6623 = vsel %vm6622, %v6615, %v6619
    %v6624 = vand.u32 2147483647, %v6419
    %vm6625 = vcmp.eq.f32.partialorder %v6624, 8.507059e+37
    %v6626 = vand.u32 %v6419, 2147483648
    %v6627 = vor.u32 1.1754944e-38, %v6626
    %v6628 = vsel %vm6625, %v6627, %v6623
    %v6629 = vmul.f32 1.0, %v6628
    %6630 = vst.msk [vmem:[%s12] sm:$0xff] %vm573, %v6434
    %6631 = vst.msk [vmem:[%s12 + $0x8] sm:$0xff] %vm573, %v6449
    %6632 = vst.msk [vmem:[%s12 + $0x10] sm:$0xff] %vm573, %v6464
    %6633 = vst.msk [vmem:[%s12 + $0x18] sm:$0xff] %vm573, %v6479
    %6634 = vst.msk [vmem:[%s12 + $0x20] sm:$0xff] %vm573, %v6494
    %6635 = vst.msk [vmem:[%s12 + $0x28] sm:$0xff] %vm573, %v6509
    %6636 = vst.msk [vmem:[%s12 + $0x30] sm:$0xff] %vm573, %v6524
    %6637 = vst.msk [vmem:[%s12 + $0x38] sm:$0xff] %vm573, %v6539
    %6638 = vst.msk [vmem:[%s12 + $0x40] sm:$0xff] %vm573, %v6554
    %6639 = vst.msk [vmem:[%s12 + $0x48] sm:$0xff] %vm573, %v6569
    %6640 = vst.msk [vmem:[%s12 + $0x50] sm:$0xff] %vm573, %v6584
    %6641 = vst.msk [vmem:[%s12 + $0x58] sm:$0xff] %vm573, %v6599
    %6642 = vst.msk [vmem:[%s12 + $0x60] sm:$0xff] %vm573, %v6614
    %6643 = vst.msk [vmem:[%s12 + $0x68] sm:$0xff] %vm573, %v6629
    // Predicated region
    $region62: #{autoencoder_apply.1} parent=1 // pred_check
      _
    $region63: #{autoencoder_apply.1} parent=1 // pred_check_branch
      %6645 = sbr.rel (0) target = $region65
    $region64: #{autoencoder_apply.1} parent=1 // pred_region
      _
    $region65: #{autoencoder_apply.1} parent=1 // pred_fallthru
      _
    // Predicated region
    $region66: #{autoencoder_apply.1} parent=1 // pred_check
      _
    $region67: #{autoencoder_apply.1} parent=1 // pred_check_branch
      %6647 = sbr.rel (0) target = $region69
    $region68: #{autoencoder_apply.1} parent=1 // pred_region
      _
    $region69: #{autoencoder_apply.1} parent=1 // pred_fallthru
      _
    %6648 = vsyncpa [#allocation3], 1
    %6649 = vsyncpa [#allocation5], 1

</llo_original>
